<compile_context>
chip_gen: v7x
topology: tpu7x:2x2x1
jax: 0.10.0
libtpu: 0.0.40
codegen_flags: <defaults>
</compile_context>

<pallas_src>
import functools

import jax
import jax.numpy as jnp
from jax import lax
from jax.experimental import pallas as pl
from jax.experimental.pallas import tpu as pltpu


# ------------------------------- helpers --------------------------------------

def _round_up(x, m):
    return ((x + m - 1) // m) * m


def _spatial_coords(m_idx, H, W):
    """(y, x) image coords for flattened row indices m = n*H*W + y*W + x."""
    if (W & (W - 1)) == 0 and (H & (H - 1)) == 0:           # power-of-two fast path
        x = m_idx & (W - 1)
        y = (m_idx >> (W.bit_length() - 1)) & (H - 1)
    else:
        x = m_idx % W
        y = (m_idx // W) % H
    return y, x


# ----------------------------- Pallas kernel ---------------------------------

def _make_kernel(H, W, pad_rows, Cp, F):
    """Fused: 3x3 conv (9 shifted matmuls) + ReLU + fused cls/box head matmul."""
    offsets = [(dy - 1, dx - 1) for dy in range(3) for dx in range(3)]

    def kernel(xpad_ref, w_conv_ref, b_conv_ref, w_head_ref, b_head_ref, out_ref):
        tm = out_ref.shape[0]
        i = pl.program_id(0)
        base = pl.multiple_of(i * tm, 8)

        # Halo'd row tile of the once-read image:
        # xpad rows [base, base + tm + 2*pad_rows) == flattened pixels
        # [i*tm - pad_rows, i*tm + tm + pad_rows) (zero halo at both ends).
        xt = xpad_ref[pl.ds(base, tm + 2 * pad_rows), :]          # [tm + 2*pad, Cp] f32

        # (y, x) coordinates of the tm output pixels -> border masks for the 3x3 taps.
        m_idx = lax.broadcasted_iota(jnp.int32, (tm, 1), 0) + i * tm
        ycoord, xcoord = _spatial_coords(m_idx, H, W)

        # 3x3 conv as 9 accumulated MXU matmuls over row-shifted views.
        acc = jnp.zeros((tm, F), jnp.float32)
        for k, (oy, ox) in enumerate(offsets):
            s = oy * W + ox                                       # flattened row shift
            slab = xt[pad_rows + s:pad_rows + s + tm, :]          # static slice of view
            valid = ((ycoord + oy >= 0) & (ycoord + oy < H)
                     & (xcoord + ox >= 0) & (xcoord + ox < W))
            slab = jnp.where(valid, slab, 0.0).astype(jnp.bfloat16)
            acc = acc + jnp.dot(slab, w_conv_ref[k],
                                preferred_element_type=jnp.float32)

        # Backbone bias (with folded normalization) + ReLU.
        feat = jnp.maximum(acc + b_conv_ref[...], 0.0).astype(jnp.bfloat16)

        # Fused classification + box heads: one lane-dense (128-wide) matmul output.
        out_ref[...] = (jnp.dot(feat, w_head_ref[...],
                                preferred_element_type=jnp.float32)
                        + b_head_ref[...])

    return kernel


def _run_detection(xpad, w_conv, b_conv, w_head, b_head, *, H, W, pad_rows, tm, m_pad):
    rows, Cp = xpad.shape
    _, F = b_conv.shape
    _, CH = b_head.shape
    grid = (m_pad // tm,)
    kernel = _make_kernel(H, W, pad_rows, Cp, F)

    return pl.pallas_call(
        kernel,
        out_shape=jax.ShapeDtypeStruct((m_pad, CH), jnp.float32),
        grid_spec=pltpu.PrefetchScalarGridSpec(
            num_scalar_prefetch=0,
            grid=grid,
            in_specs=[
                # Full padded image stays VMEM-resident across grid steps (index is
                # constant, so the pipeline fetches it only once).
                pl.BlockSpec((rows, Cp), lambda i: (0, 0)),
                pl.BlockSpec(w_conv.shape, lambda i: (0, 0, 0)),   # [9, Cp, F] folded conv
                pl.BlockSpec((1, F), lambda i: (0, 0)),            # folded conv bias
                pl.BlockSpec((F, CH), lambda i: (0, 0)),           # fused head weight
                pl.BlockSpec((1, CH), lambda i: (0, 0)),           # fused head bias
            ],
            out_specs=pl.BlockSpec((tm, CH), lambda i: (i, 0)),    # 128-lane dense store
        ),
        compiler_params=pltpu.CompilerParams(
            dimension_semantics=("parallel",)),
    )(xpad, w_conv, b_conv, w_head, b_head)


# ------------------------------- JAX glue -------------------------------------

class ObjectDetectionModelPallas:
    """Synthetic-weight SSD-style detection forward; entire hot path in one Pallas kernel."""

    _CP = 8      # channel dim padded to one sublane tile (aligned per-tap weight slices)
    _CH = 128    # fused head output padded to a full lane tile (unmasked stores)

    def __init__(self, in_channels=3, features=32, num_anchors=4, num_classes=8, seed=0):
        assert in_channels <= self._CP
        self.in_channels = in_channels
        self.features = features
        self.num_anchors = num_anchors
        self.num_classes = num_classes
        self.c_cls = num_anchors * num_classes
        self.c_box = num_anchors * 4
        assert self.c_cls + self.c_box <= self._CH

        key = jax.random.PRNGKey(seed)
        k1, k2, k3 = jax.random.split(key, 3)
        w_conv = jax.random.normal(k1, (3, 3, in_channels, features), jnp.float32) * 0.05
        b_conv = jnp.zeros((features,), jnp.float32)
        w_cls = jax.random.normal(k2, (features, self.c_cls), jnp.float32) * 0.05
        b_cls = jnp.zeros((self.c_cls,), jnp.float32)
        w_box = jax.random.normal(k3, (features, self.c_box), jnp.float32) * 0.05
        b_box = jnp.zeros((self.c_box,), jnp.float32)

        # ImageNet normalization folded into the conv stem.  Identical to: zero-pad the
        # raw image, normalize ((x - mean) * inv_std), then convolve:
        #   w'[ky,kx,c,f] = inv_std[c] * w[ky,kx,c,f]
        #   b'[f]         = b[f] - sum_{ky,kx,c} mean[c] * inv_std[c] * w[ky,kx,c,f]
        mean = jnp.array([0.485, 0.456, 0.406, 0., 0., 0., 0., 0.], jnp.float32)[:in_channels]
        std = jnp.array([0.229, 0.224, 0.225, 1., 1., 1., 1., 1.], jnp.float32)[:in_channels]
        inv_std = 1.0 / std
        w_fold = w_conv * inv_std[None, None, :, None]
        b_fold = b_conv - jnp.einsum('yxcf,c->f', w_conv, mean * inv_std)

        w_conv_k = jnp.zeros((9, self._CP, features), jnp.float32)
        w_conv_k = w_conv_k.at[:, :in_channels, :].set(
            w_fold.reshape(9, in_channels, features))
        self.w_conv = w_conv_k.astype(jnp.bfloat16)                 # [9, Cp, F] bf16
        self.b_conv = b_fold.reshape(1, features)                   # [1, F]  f32

        w_head = jnp.zeros((features, self._CH), jnp.float32)
        w_head = (w_head.at[:, :self.c_cls].set(w_cls)
                        .at[:, self.c_cls:self.c_cls + self.c_box].set(w_box))
        self.w_head = w_head.astype(jnp.bfloat16)                   # [F, 128] bf16
        b_head = jnp.zeros((1, self._CH), jnp.float32)
        b_head = (b_head.at[0, :self.c_cls].set(b_cls)
                        .at[0, self.c_cls:self.c_cls + self.c_box].set(b_box))
        self.b_head = b_head                                        # [1, 128] f32

    @staticmethod
    def _pick_tile(M):
        # Prefer >= 2 parallel row tiles (v7x has 2 TensorCores) when that still gives
        # >= 256 rows/tile; otherwise a single tile; cap at 1024 rows (tiny VMEM, hides DMA).
        if M >= 2048:
            return 1024
        half = _round_up(pl.cdiv(M, 2), 8)
        return half if half >= 256 else _round_up(max(M, 8), 8)

    @functools.partial(jax.jit, static_argnums=0)
    def __call__(self, images):
        """images: [N, C, H, W] float32 (NCHW, matching the PyTorch module)."""
        N, C, H, W = images.shape
        assert C == self.in_channels
        M = N * H * W

        tm = self._pick_tile(M)
        m_pad = _round_up(M, tm)                       # ragged M handled by padding
        pad_rows = _round_up(W + 1, 8)                 # zero halo >= max |row shift|
        rows = pad_rows + m_pad + pad_rows

        # Read the image once: NCHW -> flattened NHWC rows with a zero halo (no im2col).
        x_rows = jnp.transpose(images, (0, 2, 3, 1)).reshape(M, C)
        xpad = jnp.zeros((rows, self._CP), jnp.float32)
        xpad = xpad.at[pad_rows:pad_rows + M, :C].set(x_rows)

        out = _run_detection(xpad, self.w_conv, self.b_conv, self.w_head, self.b_head,
                             H=H, W=W, pad_rows=pad_rows, tm=tm, m_pad=m_pad)
        out = out[:M]                                  # drop tile-alignment padding rows

        A, NC = self.num_anchors, self.num_classes
        cls_logits = out[:, :self.c_cls].reshape(N, H * W * A, NC)
        box_deltas = out[:, self.c_cls:self.c_cls + self.c_box].reshape(N, H * W * A, 4)
        return {"cls_logits": cls_logits, "bbox_regression": box_deltas}


# -------------------------------- main ----------------------------------------

if __name__ == "__main__":
    key = jax.random.PRNGKey(0)
    N, C, H, W = 2, 3, 16, 16
    images = jax.random.uniform(key, (N, C, H, W), jnp.float32)   # pixels in [0, 1]

    model = ObjectDetectionModelPallas(in_channels=C, features=32,
                                       num_anchors=4, num_classes=8, seed=0)
    out = model(images)
    jax.block_until_ready(out)

    # Plain-JAX reference of the same math (im2col over the zero-padded raw image with the
    # same folded bf16 weights, f32 accumulation) to validate the Pallas kernel end-to-end.
    x_nhwc = jnp.transpose(images, (0, 2, 3, 1))
    xp = jnp.pad(x_nhwc, ((0, 0), (1, 1), (1, 1), (0, 0)))
    cols = [xp[:, dy:dy + H, dx:dx + W, :] for dy in range(3) for dx in range(3)]
    patches = jnp.stack(cols, axis=3).reshape(N * H * W, 9 * C)        # (ky, kx, c) order
    w_flat = model.w_conv[:, :C, :].reshape(9 * C, model.features)     # bf16
    acc = jnp.dot(patches.astype(jnp.bfloat16), w_flat, preferred_element_type=jnp.float32)
    feat = jnp.maximum(acc + model.b_conv, 0.0).astype(jnp.bfloat16)
    head = jnp.dot(feat, model.w_head, preferred_element_type=jnp.float32) + model.b_head
    ref_cls = head[:, :model.c_cls].reshape(N, H * W * 4, 8)
    ref_box = head[:, model.c_cls:model.c_cls + model.c_box].reshape(N, H * W * 4, 4)

    assert jnp.allclose(out["cls_logits"], ref_cls, atol=2e-3)
    assert jnp.allclose(out["bbox_regression"], ref_box, atol=2e-3)

    print("KERNEL_OK")
</pallas_src>

<mosaic_0001>
module attributes {stable_mosaic.version = 11 : i64} {
  func.func @kernel(%arg0: i32, %arg1: memref<560x8xf32, #tpu.memory_space<vmem>>, %arg2: memref<9x8x32xbf16, #tpu.memory_space<vmem>>, %arg3: memref<1x32xf32, #tpu.memory_space<vmem>>, %arg4: memref<32x128xbf16, #tpu.memory_space<vmem>>, %arg5: memref<1x128xf32, #tpu.memory_space<vmem>>, %arg6: memref<256x128xf32, #tpu.memory_space<vmem>>) attributes {dimension_semantics = [#tpu.dimension_semantics<parallel>], iteration_bounds = array<i64: 2>, scalar_prefetch = 0 : i64, scratch_operands = 0 : i64, tpu.core_type = #tpu.core_type<tc>, window_params = [{pipeline_mode = #tpu.pipeline_mode<synchronous>, transform_indices = @transform_0, window_bounds = array<i64: 560, 8>}, {pipeline_mode = #tpu.pipeline_mode<synchronous>, transform_indices = @transform_1, window_bounds = array<i64: 9, 8, 32>}, {pipeline_mode = #tpu.pipeline_mode<synchronous>, transform_indices = @transform_2, window_bounds = array<i64: 1, 32>}, {pipeline_mode = #tpu.pipeline_mode<synchronous>, transform_indices = @transform_3, window_bounds = array<i64: 32, 128>}, {pipeline_mode = #tpu.pipeline_mode<synchronous>, transform_indices = @transform_4, window_bounds = array<i64: 1, 128>}, {transform_indices = @transform_5, window_bounds = array<i64: 256, 128>}]} {
    %c256_i32 = arith.constant 256 : i32
    %0 = arith.muli %arg0, %c256_i32 : i32
    %1 = tpu.assume_multiple %0, 8 : i32
    %2 = arith.index_cast %1 : i32 to index
    %c0 = arith.constant 0 : index
    %3 = vector.load %arg1[%2, %c0] : memref<560x8xf32, #tpu.memory_space<vmem>>, vector<304x8xf32>
    %4 = tpu.iota {dimensions = array<i32: 0>} : vector<256x1xi32>
    %c256_i32_0 = arith.constant 256 : i32
    %5 = arith.muli %arg0, %c256_i32_0 : i32
    %6 = vector.broadcast %5 : i32 to vector<256x1xi32>
    %7 = arith.addi %4, %6 : vector<256x1xi32>
    %c15_i32 = arith.constant 15 : i32
    %8 = vector.broadcast %c15_i32 : i32 to vector<256x1xi32>
    %9 = arith.andi %7, %8 : vector<256x1xi32>
    %c4_i32 = arith.constant 4 : i32
    %10 = vector.broadcast %c4_i32 : i32 to vector<256x1xi32>
    %11 = arith.shrsi %7, %10 : vector<256x1xi32>
    %c15_i32_1 = arith.constant 15 : i32
    %12 = vector.broadcast %c15_i32_1 : i32 to vector<256x1xi32>
    %13 = arith.andi %11, %12 : vector<256x1xi32>
    %cst = arith.constant 0.000000e+00 : f32
    %14 = vector.broadcast %cst : f32 to vector<256x32xf32>
    %15 = vector.extract_strided_slice %3 {offsets = [7, 0], sizes = [256, 8], strides = [1, 1]} : vector<304x8xf32> to vector<256x8xf32>
    %c-1_i32 = arith.constant -1 : i32
    %16 = vector.broadcast %c-1_i32 : i32 to vector<256x1xi32>
    %17 = arith.addi %13, %16 : vector<256x1xi32>
    %c0_i32 = arith.constant 0 : i32
    %18 = vector.broadcast %c0_i32 : i32 to vector<256x1xi32>
    %19 = arith.cmpi sge, %17, %18 : vector<256x1xi32>
    %c-1_i32_2 = arith.constant -1 : i32
    %20 = vector.broadcast %c-1_i32_2 : i32 to vector<256x1xi32>
    %21 = arith.addi %13, %20 : vector<256x1xi32>
    %c16_i32 = arith.constant 16 : i32
    %22 = vector.broadcast %c16_i32 : i32 to vector<256x1xi32>
    %23 = arith.cmpi slt, %21, %22 : vector<256x1xi32>
    %24 = arith.andi %19, %23 : vector<256x1xi1>
    %c-1_i32_3 = arith.constant -1 : i32
    %25 = vector.broadcast %c-1_i32_3 : i32 to vector<256x1xi32>
    %26 = arith.addi %9, %25 : vector<256x1xi32>
    %c0_i32_4 = arith.constant 0 : i32
    %27 = vector.broadcast %c0_i32_4 : i32 to vector<256x1xi32>
    %28 = arith.cmpi sge, %26, %27 : vector<256x1xi32>
    %29 = arith.andi %24, %28 : vector<256x1xi1>
    %c-1_i32_5 = arith.constant -1 : i32
    %30 = vector.broadcast %c-1_i32_5 : i32 to vector<256x1xi32>
    %31 = arith.addi %9, %30 : vector<256x1xi32>
    %c16_i32_6 = arith.constant 16 : i32
    %32 = vector.broadcast %c16_i32_6 : i32 to vector<256x1xi32>
    %33 = arith.cmpi slt, %31, %32 : vector<256x1xi32>
    %34 = arith.andi %29, %33 : vector<256x1xi1>
    %cst_7 = arith.constant 0.000000e+00 : f32
    %35 = vector.shape_cast %34 : vector<256x1xi1> to vector<256x1xi1>
    %36 = vector.broadcast %35 : vector<256x1xi1> to vector<256x8xi1>
    %37 = vector.broadcast %cst_7 : f32 to vector<256x8xf32>
    %38 = arith.select %36, %15, %37 : vector<256x8xi1>, vector<256x8xf32>
    %39 = arith.truncf %38 : vector<256x8xf32> to vector<256x8xbf16>
    %c0_8 = arith.constant 0 : index
    %c0_9 = arith.constant 0 : index
    %c0_10 = arith.constant 0 : index
    %40 = vector.load %arg2[%c0_8, %c0_9, %c0_10] : memref<9x8x32xbf16, #tpu.memory_space<vmem>>, vector<1x8x32xbf16>
    %41 = vector.shape_cast %40 : vector<1x8x32xbf16> to vector<8x32xbf16>
    %cst_11 = arith.constant dense<0.000000e+00> : vector<256x32xf32>
    %42 = tpu.matmul %39, %41, %cst_11 {dimension_numbers = #tpu.dot_dimension_numbers<[1], [0], [0], [1], [0, 0, 1, 1], [], []>} : vector<256x8xbf16>, vector<8x32xbf16>, vector<256x32xf32> -> vector<256x32xf32>
    %43 = arith.addf %14, %42 : vector<256x32xf32>
    %44 = vector.extract_strided_slice %3 {offsets = [8, 0], sizes = [256, 8], strides = [1, 1]} : vector<304x8xf32> to vector<256x8xf32>
    %c-1_i32_12 = arith.constant -1 : i32
    %45 = vector.broadcast %c-1_i32_12 : i32 to vector<256x1xi32>
    %46 = arith.addi %13, %45 : vector<256x1xi32>
    %c0_i32_13 = arith.constant 0 : i32
    %47 = vector.broadcast %c0_i32_13 : i32 to vector<256x1xi32>
    %48 = arith.cmpi sge, %46, %47 : vector<256x1xi32>
    %c-1_i32_14 = arith.constant -1 : i32
    %49 = vector.broadcast %c-1_i32_14 : i32 to vector<256x1xi32>
    %50 = arith.addi %13, %49 : vector<256x1xi32>
    %c16_i32_15 = arith.constant 16 : i32
    %51 = vector.broadcast %c16_i32_15 : i32 to vector<256x1xi32>
    %52 = arith.cmpi slt, %50, %51 : vector<256x1xi32>
    %53 = arith.andi %48, %52 : vector<256x1xi1>
    %c0_i32_16 = arith.constant 0 : i32
    %54 = vector.broadcast %c0_i32_16 : i32 to vector<256x1xi32>
    %55 = arith.addi %9, %54 : vector<256x1xi32>
    %c0_i32_17 = arith.constant 0 : i32
    %56 = vector.broadcast %c0_i32_17 : i32 to vector<256x1xi32>
    %57 = arith.cmpi sge, %55, %56 : vector<256x1xi32>
    %58 = arith.andi %53, %57 : vector<256x1xi1>
    %c0_i32_18 = arith.constant 0 : i32
    %59 = vector.broadcast %c0_i32_18 : i32 to vector<256x1xi32>
    %60 = arith.addi %9, %59 : vector<256x1xi32>
    %c16_i32_19 = arith.constant 16 : i32
    %61 = vector.broadcast %c16_i32_19 : i32 to vector<256x1xi32>
    %62 = arith.cmpi slt, %60, %61 : vector<256x1xi32>
    %63 = arith.andi %58, %62 : vector<256x1xi1>
    %cst_20 = arith.constant 0.000000e+00 : f32
    %64 = vector.shape_cast %63 : vector<256x1xi1> to vector<256x1xi1>
    %65 = vector.broadcast %64 : vector<256x1xi1> to vector<256x8xi1>
    %66 = vector.broadcast %cst_20 : f32 to vector<256x8xf32>
    %67 = arith.select %65, %44, %66 : vector<256x8xi1>, vector<256x8xf32>
    %68 = arith.truncf %67 : vector<256x8xf32> to vector<256x8xbf16>
    %c1 = arith.constant 1 : index
    %c0_21 = arith.constant 0 : index
    %c0_22 = arith.constant 0 : index
    %69 = vector.load %arg2[%c1, %c0_21, %c0_22] : memref<9x8x32xbf16, #tpu.memory_space<vmem>>, vector<1x8x32xbf16>
    %70 = vector.shape_cast %69 : vector<1x8x32xbf16> to vector<8x32xbf16>
    %cst_23 = arith.constant dense<0.000000e+00> : vector<256x32xf32>
    %71 = tpu.matmul %68, %70, %cst_23 {dimension_numbers = #tpu.dot_dimension_numbers<[1], [0], [0], [1], [0, 0, 1, 1], [], []>} : vector<256x8xbf16>, vector<8x32xbf16>, vector<256x32xf32> -> vector<256x32xf32>
    %72 = arith.addf %43, %71 : vector<256x32xf32>
    %73 = vector.extract_strided_slice %3 {offsets = [9, 0], sizes = [256, 8], strides = [1, 1]} : vector<304x8xf32> to vector<256x8xf32>
    %c-1_i32_24 = arith.constant -1 : i32
    %74 = vector.broadcast %c-1_i32_24 : i32 to vector<256x1xi32>
    %75 = arith.addi %13, %74 : vector<256x1xi32>
    %c0_i32_25 = arith.constant 0 : i32
    %76 = vector.broadcast %c0_i32_25 : i32 to vector<256x1xi32>
    %77 = arith.cmpi sge, %75, %76 : vector<256x1xi32>
    %c-1_i32_26 = arith.constant -1 : i32
    %78 = vector.broadcast %c-1_i32_26 : i32 to vector<256x1xi32>
    %79 = arith.addi %13, %78 : vector<256x1xi32>
    %c16_i32_27 = arith.constant 16 : i32
    %80 = vector.broadcast %c16_i32_27 : i32 to vector<256x1xi32>
    %81 = arith.cmpi slt, %79, %80 : vector<256x1xi32>
    %82 = arith.andi %77, %81 : vector<256x1xi1>
    %c1_i32 = arith.constant 1 : i32
    %83 = vector.broadcast %c1_i32 : i32 to vector<256x1xi32>
    %84 = arith.addi %9, %83 : vector<256x1xi32>
    %c0_i32_28 = arith.constant 0 : i32
    %85 = vector.broadcast %c0_i32_28 : i32 to vector<256x1xi32>
    %86 = arith.cmpi sge, %84, %85 : vector<256x1xi32>
    %87 = arith.andi %82, %86 : vector<256x1xi1>
    %c1_i32_29 = arith.constant 1 : i32
    %88 = vector.broadcast %c1_i32_29 : i32 to vector<256x1xi32>
    %89 = arith.addi %9, %88 : vector<256x1xi32>
    %c16_i32_30 = arith.constant 16 : i32
    %90 = vector.broadcast %c16_i32_30 : i32 to vector<256x1xi32>
    %91 = arith.cmpi slt, %89, %90 : vector<256x1xi32>
    %92 = arith.andi %87, %91 : vector<256x1xi1>
    %cst_31 = arith.constant 0.000000e+00 : f32
    %93 = vector.shape_cast %92 : vector<256x1xi1> to vector<256x1xi1>
    %94 = vector.broadcast %93 : vector<256x1xi1> to vector<256x8xi1>
    %95 = vector.broadcast %cst_31 : f32 to vector<256x8xf32>
    %96 = arith.select %94, %73, %95 : vector<256x8xi1>, vector<256x8xf32>
    %97 = arith.truncf %96 : vector<256x8xf32> to vector<256x8xbf16>
    %c2 = arith.constant 2 : index
    %c0_32 = arith.constant 0 : index
    %c0_33 = arith.constant 0 : index
    %98 = vector.load %arg2[%c2, %c0_32, %c0_33] : memref<9x8x32xbf16, #tpu.memory_space<vmem>>, vector<1x8x32xbf16>
    %99 = vector.shape_cast %98 : vector<1x8x32xbf16> to vector<8x32xbf16>
    %cst_34 = arith.constant dense<0.000000e+00> : vector<256x32xf32>
    %100 = tpu.matmul %97, %99, %cst_34 {dimension_numbers = #tpu.dot_dimension_numbers<[1], [0], [0], [1], [0, 0, 1, 1], [], []>} : vector<256x8xbf16>, vector<8x32xbf16>, vector<256x32xf32> -> vector<256x32xf32>
    %101 = arith.addf %72, %100 : vector<256x32xf32>
    %102 = vector.extract_strided_slice %3 {offsets = [23, 0], sizes = [256, 8], strides = [1, 1]} : vector<304x8xf32> to vector<256x8xf32>
    %c0_i32_35 = arith.constant 0 : i32
    %103 = vector.broadcast %c0_i32_35 : i32 to vector<256x1xi32>
    %104 = arith.addi %13, %103 : vector<256x1xi32>
    %c0_i32_36 = arith.constant 0 : i32
    %105 = vector.broadcast %c0_i32_36 : i32 to vector<256x1xi32>
    %106 = arith.cmpi sge, %104, %105 : vector<256x1xi32>
    %c0_i32_37 = arith.constant 0 : i32
    %107 = vector.broadcast %c0_i32_37 : i32 to vector<256x1xi32>
    %108 = arith.addi %13, %107 : vector<256x1xi32>
    %c16_i32_38 = arith.constant 16 : i32
    %109 = vector.broadcast %c16_i32_38 : i32 to vector<256x1xi32>
    %110 = arith.cmpi slt, %108, %109 : vector<256x1xi32>
    %111 = arith.andi %106, %110 : vector<256x1xi1>
    %c-1_i32_39 = arith.constant -1 : i32
    %112 = vector.broadcast %c-1_i32_39 : i32 to vector<256x1xi32>
    %113 = arith.addi %9, %112 : vector<256x1xi32>
    %c0_i32_40 = arith.constant 0 : i32
    %114 = vector.broadcast %c0_i32_40 : i32 to vector<256x1xi32>
    %115 = arith.cmpi sge, %113, %114 : vector<256x1xi32>
    %116 = arith.andi %111, %115 : vector<256x1xi1>
    %c-1_i32_41 = arith.constant -1 : i32
    %117 = vector.broadcast %c-1_i32_41 : i32 to vector<256x1xi32>
    %118 = arith.addi %9, %117 : vector<256x1xi32>
    %c16_i32_42 = arith.constant 16 : i32
    %119 = vector.broadcast %c16_i32_42 : i32 to vector<256x1xi32>
    %120 = arith.cmpi slt, %118, %119 : vector<256x1xi32>
    %121 = arith.andi %116, %120 : vector<256x1xi1>
    %cst_43 = arith.constant 0.000000e+00 : f32
    %122 = vector.shape_cast %121 : vector<256x1xi1> to vector<256x1xi1>
    %123 = vector.broadcast %122 : vector<256x1xi1> to vector<256x8xi1>
    %124 = vector.broadcast %cst_43 : f32 to vector<256x8xf32>
    %125 = arith.select %123, %102, %124 : vector<256x8xi1>, vector<256x8xf32>
    %126 = arith.truncf %125 : vector<256x8xf32> to vector<256x8xbf16>
    %c3 = arith.constant 3 : index
    %c0_44 = arith.constant 0 : index
    %c0_45 = arith.constant 0 : index
    %127 = vector.load %arg2[%c3, %c0_44, %c0_45] : memref<9x8x32xbf16, #tpu.memory_space<vmem>>, vector<1x8x32xbf16>
    %128 = vector.shape_cast %127 : vector<1x8x32xbf16> to vector<8x32xbf16>
    %cst_46 = arith.constant dense<0.000000e+00> : vector<256x32xf32>
    %129 = tpu.matmul %126, %128, %cst_46 {dimension_numbers = #tpu.dot_dimension_numbers<[1], [0], [0], [1], [0, 0, 1, 1], [], []>} : vector<256x8xbf16>, vector<8x32xbf16>, vector<256x32xf32> -> vector<256x32xf32>
    %130 = arith.addf %101, %129 : vector<256x32xf32>
    %131 = vector.extract_strided_slice %3 {offsets = [24, 0], sizes = [256, 8], strides = [1, 1]} : vector<304x8xf32> to vector<256x8xf32>
    %c0_i32_47 = arith.constant 0 : i32
    %132 = vector.broadcast %c0_i32_47 : i32 to vector<256x1xi32>
    %133 = arith.addi %13, %132 : vector<256x1xi32>
    %c0_i32_48 = arith.constant 0 : i32
    %134 = vector.broadcast %c0_i32_48 : i32 to vector<256x1xi32>
    %135 = arith.cmpi sge, %133, %134 : vector<256x1xi32>
    %c0_i32_49 = arith.constant 0 : i32
    %136 = vector.broadcast %c0_i32_49 : i32 to vector<256x1xi32>
    %137 = arith.addi %13, %136 : vector<256x1xi32>
    %c16_i32_50 = arith.constant 16 : i32
    %138 = vector.broadcast %c16_i32_50 : i32 to vector<256x1xi32>
    %139 = arith.cmpi slt, %137, %138 : vector<256x1xi32>
    %140 = arith.andi %135, %139 : vector<256x1xi1>
    %c0_i32_51 = arith.constant 0 : i32
    %141 = vector.broadcast %c0_i32_51 : i32 to vector<256x1xi32>
    %142 = arith.addi %9, %141 : vector<256x1xi32>
    %c0_i32_52 = arith.constant 0 : i32
    %143 = vector.broadcast %c0_i32_52 : i32 to vector<256x1xi32>
    %144 = arith.cmpi sge, %142, %143 : vector<256x1xi32>
    %145 = arith.andi %140, %144 : vector<256x1xi1>
    %c0_i32_53 = arith.constant 0 : i32
    %146 = vector.broadcast %c0_i32_53 : i32 to vector<256x1xi32>
    %147 = arith.addi %9, %146 : vector<256x1xi32>
    %c16_i32_54 = arith.constant 16 : i32
    %148 = vector.broadcast %c16_i32_54 : i32 to vector<256x1xi32>
    %149 = arith.cmpi slt, %147, %148 : vector<256x1xi32>
    %150 = arith.andi %145, %149 : vector<256x1xi1>
    %cst_55 = arith.constant 0.000000e+00 : f32
    %151 = vector.shape_cast %150 : vector<256x1xi1> to vector<256x1xi1>
    %152 = vector.broadcast %151 : vector<256x1xi1> to vector<256x8xi1>
    %153 = vector.broadcast %cst_55 : f32 to vector<256x8xf32>
    %154 = arith.select %152, %131, %153 : vector<256x8xi1>, vector<256x8xf32>
    %155 = arith.truncf %154 : vector<256x8xf32> to vector<256x8xbf16>
    %c4 = arith.constant 4 : index
    %c0_56 = arith.constant 0 : index
    %c0_57 = arith.constant 0 : index
    %156 = vector.load %arg2[%c4, %c0_56, %c0_57] : memref<9x8x32xbf16, #tpu.memory_space<vmem>>, vector<1x8x32xbf16>
    %157 = vector.shape_cast %156 : vector<1x8x32xbf16> to vector<8x32xbf16>
    %cst_58 = arith.constant dense<0.000000e+00> : vector<256x32xf32>
    %158 = tpu.matmul %155, %157, %cst_58 {dimension_numbers = #tpu.dot_dimension_numbers<[1], [0], [0], [1], [0, 0, 1, 1], [], []>} : vector<256x8xbf16>, vector<8x32xbf16>, vector<256x32xf32> -> vector<256x32xf32>
    %159 = arith.addf %130, %158 : vector<256x32xf32>
    %160 = vector.extract_strided_slice %3 {offsets = [25, 0], sizes = [256, 8], strides = [1, 1]} : vector<304x8xf32> to vector<256x8xf32>
    %c0_i32_59 = arith.constant 0 : i32
    %161 = vector.broadcast %c0_i32_59 : i32 to vector<256x1xi32>
    %162 = arith.addi %13, %161 : vector<256x1xi32>
    %c0_i32_60 = arith.constant 0 : i32
    %163 = vector.broadcast %c0_i32_60 : i32 to vector<256x1xi32>
    %164 = arith.cmpi sge, %162, %163 : vector<256x1xi32>
    %c0_i32_61 = arith.constant 0 : i32
    %165 = vector.broadcast %c0_i32_61 : i32 to vector<256x1xi32>
    %166 = arith.addi %13, %165 : vector<256x1xi32>
    %c16_i32_62 = arith.constant 16 : i32
    %167 = vector.broadcast %c16_i32_62 : i32 to vector<256x1xi32>
    %168 = arith.cmpi slt, %166, %167 : vector<256x1xi32>
    %169 = arith.andi %164, %168 : vector<256x1xi1>
    %c1_i32_63 = arith.constant 1 : i32
    %170 = vector.broadcast %c1_i32_63 : i32 to vector<256x1xi32>
    %171 = arith.addi %9, %170 : vector<256x1xi32>
    %c0_i32_64 = arith.constant 0 : i32
    %172 = vector.broadcast %c0_i32_64 : i32 to vector<256x1xi32>
    %173 = arith.cmpi sge, %171, %172 : vector<256x1xi32>
    %174 = arith.andi %169, %173 : vector<256x1xi1>
    %c1_i32_65 = arith.constant 1 : i32
    %175 = vector.broadcast %c1_i32_65 : i32 to vector<256x1xi32>
    %176 = arith.addi %9, %175 : vector<256x1xi32>
    %c16_i32_66 = arith.constant 16 : i32
    %177 = vector.broadcast %c16_i32_66 : i32 to vector<256x1xi32>
    %178 = arith.cmpi slt, %176, %177 : vector<256x1xi32>
    %179 = arith.andi %174, %178 : vector<256x1xi1>
    %cst_67 = arith.constant 0.000000e+00 : f32
    %180 = vector.shape_cast %179 : vector<256x1xi1> to vector<256x1xi1>
    %181 = vector.broadcast %180 : vector<256x1xi1> to vector<256x8xi1>
    %182 = vector.broadcast %cst_67 : f32 to vector<256x8xf32>
    %183 = arith.select %181, %160, %182 : vector<256x8xi1>, vector<256x8xf32>
    %184 = arith.truncf %183 : vector<256x8xf32> to vector<256x8xbf16>
    %c5 = arith.constant 5 : index
    %c0_68 = arith.constant 0 : index
    %c0_69 = arith.constant 0 : index
    %185 = vector.load %arg2[%c5, %c0_68, %c0_69] : memref<9x8x32xbf16, #tpu.memory_space<vmem>>, vector<1x8x32xbf16>
    %186 = vector.shape_cast %185 : vector<1x8x32xbf16> to vector<8x32xbf16>
    %cst_70 = arith.constant dense<0.000000e+00> : vector<256x32xf32>
    %187 = tpu.matmul %184, %186, %cst_70 {dimension_numbers = #tpu.dot_dimension_numbers<[1], [0], [0], [1], [0, 0, 1, 1], [], []>} : vector<256x8xbf16>, vector<8x32xbf16>, vector<256x32xf32> -> vector<256x32xf32>
    %188 = arith.addf %159, %187 : vector<256x32xf32>
    %189 = vector.extract_strided_slice %3 {offsets = [39, 0], sizes = [256, 8], strides = [1, 1]} : vector<304x8xf32> to vector<256x8xf32>
    %c1_i32_71 = arith.constant 1 : i32
    %190 = vector.broadcast %c1_i32_71 : i32 to vector<256x1xi32>
    %191 = arith.addi %13, %190 : vector<256x1xi32>
    %c0_i32_72 = arith.constant 0 : i32
    %192 = vector.broadcast %c0_i32_72 : i32 to vector<256x1xi32>
    %193 = arith.cmpi sge, %191, %192 : vector<256x1xi32>
    %c1_i32_73 = arith.constant 1 : i32
    %194 = vector.broadcast %c1_i32_73 : i32 to vector<256x1xi32>
    %195 = arith.addi %13, %194 : vector<256x1xi32>
    %c16_i32_74 = arith.constant 16 : i32
    %196 = vector.broadcast %c16_i32_74 : i32 to vector<256x1xi32>
    %197 = arith.cmpi slt, %195, %196 : vector<256x1xi32>
    %198 = arith.andi %193, %197 : vector<256x1xi1>
    %c-1_i32_75 = arith.constant -1 : i32
    %199 = vector.broadcast %c-1_i32_75 : i32 to vector<256x1xi32>
    %200 = arith.addi %9, %199 : vector<256x1xi32>
    %c0_i32_76 = arith.constant 0 : i32
    %201 = vector.broadcast %c0_i32_76 : i32 to vector<256x1xi32>
    %202 = arith.cmpi sge, %200, %201 : vector<256x1xi32>
    %203 = arith.andi %198, %202 : vector<256x1xi1>
    %c-1_i32_77 = arith.constant -1 : i32
    %204 = vector.broadcast %c-1_i32_77 : i32 to vector<256x1xi32>
    %205 = arith.addi %9, %204 : vector<256x1xi32>
    %c16_i32_78 = arith.constant 16 : i32
    %206 = vector.broadcast %c16_i32_78 : i32 to vector<256x1xi32>
    %207 = arith.cmpi slt, %205, %206 : vector<256x1xi32>
    %208 = arith.andi %203, %207 : vector<256x1xi1>
    %cst_79 = arith.constant 0.000000e+00 : f32
    %209 = vector.shape_cast %208 : vector<256x1xi1> to vector<256x1xi1>
    %210 = vector.broadcast %209 : vector<256x1xi1> to vector<256x8xi1>
    %211 = vector.broadcast %cst_79 : f32 to vector<256x8xf32>
    %212 = arith.select %210, %189, %211 : vector<256x8xi1>, vector<256x8xf32>
    %213 = arith.truncf %212 : vector<256x8xf32> to vector<256x8xbf16>
    %c6 = arith.constant 6 : index
    %c0_80 = arith.constant 0 : index
    %c0_81 = arith.constant 0 : index
    %214 = vector.load %arg2[%c6, %c0_80, %c0_81] : memref<9x8x32xbf16, #tpu.memory_space<vmem>>, vector<1x8x32xbf16>
    %215 = vector.shape_cast %214 : vector<1x8x32xbf16> to vector<8x32xbf16>
    %cst_82 = arith.constant dense<0.000000e+00> : vector<256x32xf32>
    %216 = tpu.matmul %213, %215, %cst_82 {dimension_numbers = #tpu.dot_dimension_numbers<[1], [0], [0], [1], [0, 0, 1, 1], [], []>} : vector<256x8xbf16>, vector<8x32xbf16>, vector<256x32xf32> -> vector<256x32xf32>
    %217 = arith.addf %188, %216 : vector<256x32xf32>
    %218 = vector.extract_strided_slice %3 {offsets = [40, 0], sizes = [256, 8], strides = [1, 1]} : vector<304x8xf32> to vector<256x8xf32>
    %c1_i32_83 = arith.constant 1 : i32
    %219 = vector.broadcast %c1_i32_83 : i32 to vector<256x1xi32>
    %220 = arith.addi %13, %219 : vector<256x1xi32>
    %c0_i32_84 = arith.constant 0 : i32
    %221 = vector.broadcast %c0_i32_84 : i32 to vector<256x1xi32>
    %222 = arith.cmpi sge, %220, %221 : vector<256x1xi32>
    %c1_i32_85 = arith.constant 1 : i32
    %223 = vector.broadcast %c1_i32_85 : i32 to vector<256x1xi32>
    %224 = arith.addi %13, %223 : vector<256x1xi32>
    %c16_i32_86 = arith.constant 16 : i32
    %225 = vector.broadcast %c16_i32_86 : i32 to vector<256x1xi32>
    %226 = arith.cmpi slt, %224, %225 : vector<256x1xi32>
    %227 = arith.andi %222, %226 : vector<256x1xi1>
    %c0_i32_87 = arith.constant 0 : i32
    %228 = vector.broadcast %c0_i32_87 : i32 to vector<256x1xi32>
    %229 = arith.addi %9, %228 : vector<256x1xi32>
    %c0_i32_88 = arith.constant 0 : i32
    %230 = vector.broadcast %c0_i32_88 : i32 to vector<256x1xi32>
    %231 = arith.cmpi sge, %229, %230 : vector<256x1xi32>
    %232 = arith.andi %227, %231 : vector<256x1xi1>
    %c0_i32_89 = arith.constant 0 : i32
    %233 = vector.broadcast %c0_i32_89 : i32 to vector<256x1xi32>
    %234 = arith.addi %9, %233 : vector<256x1xi32>
    %c16_i32_90 = arith.constant 16 : i32
    %235 = vector.broadcast %c16_i32_90 : i32 to vector<256x1xi32>
    %236 = arith.cmpi slt, %234, %235 : vector<256x1xi32>
    %237 = arith.andi %232, %236 : vector<256x1xi1>
    %cst_91 = arith.constant 0.000000e+00 : f32
    %238 = vector.shape_cast %237 : vector<256x1xi1> to vector<256x1xi1>
    %239 = vector.broadcast %238 : vector<256x1xi1> to vector<256x8xi1>
    %240 = vector.broadcast %cst_91 : f32 to vector<256x8xf32>
    %241 = arith.select %239, %218, %240 : vector<256x8xi1>, vector<256x8xf32>
    %242 = arith.truncf %241 : vector<256x8xf32> to vector<256x8xbf16>
    %c7 = arith.constant 7 : index
    %c0_92 = arith.constant 0 : index
    %c0_93 = arith.constant 0 : index
    %243 = vector.load %arg2[%c7, %c0_92, %c0_93] : memref<9x8x32xbf16, #tpu.memory_space<vmem>>, vector<1x8x32xbf16>
    %244 = vector.shape_cast %243 : vector<1x8x32xbf16> to vector<8x32xbf16>
    %cst_94 = arith.constant dense<0.000000e+00> : vector<256x32xf32>
    %245 = tpu.matmul %242, %244, %cst_94 {dimension_numbers = #tpu.dot_dimension_numbers<[1], [0], [0], [1], [0, 0, 1, 1], [], []>} : vector<256x8xbf16>, vector<8x32xbf16>, vector<256x32xf32> -> vector<256x32xf32>
    %246 = arith.addf %217, %245 : vector<256x32xf32>
    %247 = vector.extract_strided_slice %3 {offsets = [41, 0], sizes = [256, 8], strides = [1, 1]} : vector<304x8xf32> to vector<256x8xf32>
    %c1_i32_95 = arith.constant 1 : i32
    %248 = vector.broadcast %c1_i32_95 : i32 to vector<256x1xi32>
    %249 = arith.addi %13, %248 : vector<256x1xi32>
    %c0_i32_96 = arith.constant 0 : i32
    %250 = vector.broadcast %c0_i32_96 : i32 to vector<256x1xi32>
    %251 = arith.cmpi sge, %249, %250 : vector<256x1xi32>
    %c1_i32_97 = arith.constant 1 : i32
    %252 = vector.broadcast %c1_i32_97 : i32 to vector<256x1xi32>
    %253 = arith.addi %13, %252 : vector<256x1xi32>
    %c16_i32_98 = arith.constant 16 : i32
    %254 = vector.broadcast %c16_i32_98 : i32 to vector<256x1xi32>
    %255 = arith.cmpi slt, %253, %254 : vector<256x1xi32>
    %256 = arith.andi %251, %255 : vector<256x1xi1>
    %c1_i32_99 = arith.constant 1 : i32
    %257 = vector.broadcast %c1_i32_99 : i32 to vector<256x1xi32>
    %258 = arith.addi %9, %257 : vector<256x1xi32>
    %c0_i32_100 = arith.constant 0 : i32
    %259 = vector.broadcast %c0_i32_100 : i32 to vector<256x1xi32>
    %260 = arith.cmpi sge, %258, %259 : vector<256x1xi32>
    %261 = arith.andi %256, %260 : vector<256x1xi1>
    %c1_i32_101 = arith.constant 1 : i32
    %262 = vector.broadcast %c1_i32_101 : i32 to vector<256x1xi32>
    %263 = arith.addi %9, %262 : vector<256x1xi32>
    %c16_i32_102 = arith.constant 16 : i32
    %264 = vector.broadcast %c16_i32_102 : i32 to vector<256x1xi32>
    %265 = arith.cmpi slt, %263, %264 : vector<256x1xi32>
    %266 = arith.andi %261, %265 : vector<256x1xi1>
    %cst_103 = arith.constant 0.000000e+00 : f32
    %267 = vector.shape_cast %266 : vector<256x1xi1> to vector<256x1xi1>
    %268 = vector.broadcast %267 : vector<256x1xi1> to vector<256x8xi1>
    %269 = vector.broadcast %cst_103 : f32 to vector<256x8xf32>
    %270 = arith.select %268, %247, %269 : vector<256x8xi1>, vector<256x8xf32>
    %271 = arith.truncf %270 : vector<256x8xf32> to vector<256x8xbf16>
    %c8 = arith.constant 8 : index
    %c0_104 = arith.constant 0 : index
    %c0_105 = arith.constant 0 : index
    %272 = vector.load %arg2[%c8, %c0_104, %c0_105] : memref<9x8x32xbf16, #tpu.memory_space<vmem>>, vector<1x8x32xbf16>
    %273 = vector.shape_cast %272 : vector<1x8x32xbf16> to vector<8x32xbf16>
    %cst_106 = arith.constant dense<0.000000e+00> : vector<256x32xf32>
    %274 = tpu.matmul %271, %273, %cst_106 {dimension_numbers = #tpu.dot_dimension_numbers<[1], [0], [0], [1], [0, 0, 1, 1], [], []>} : vector<256x8xbf16>, vector<8x32xbf16>, vector<256x32xf32> -> vector<256x32xf32>
    %275 = arith.addf %246, %274 : vector<256x32xf32>
    %c0_107 = arith.constant 0 : index
    %c0_108 = arith.constant 0 : index
    %276 = vector.load %arg3[%c0_107, %c0_108] : memref<1x32xf32, #tpu.memory_space<vmem>>, vector<1x32xf32>
    %277 = vector.broadcast %276 : vector<1x32xf32> to vector<256x32xf32>
    %278 = arith.addf %275, %277 : vector<256x32xf32>
    %cst_109 = arith.constant 0.000000e+00 : f32
    %279 = vector.broadcast %cst_109 : f32 to vector<256x32xf32>
    %280 = arith.maximumf %278, %279 : vector<256x32xf32>
    %281 = arith.truncf %280 : vector<256x32xf32> to vector<256x32xbf16>
    %c0_110 = arith.constant 0 : index
    %c0_111 = arith.constant 0 : index
    %282 = vector.load %arg4[%c0_110, %c0_111] : memref<32x128xbf16, #tpu.memory_space<vmem>>, vector<32x128xbf16>
    %cst_112 = arith.constant dense<0.000000e+00> : vector<256x128xf32>
    %283 = tpu.matmul %281, %282, %cst_112 {dimension_numbers = #tpu.dot_dimension_numbers<[1], [0], [0], [1], [0, 0, 1, 1], [], []>} : vector<256x32xbf16>, vector<32x128xbf16>, vector<256x128xf32> -> vector<256x128xf32>
    %c0_113 = arith.constant 0 : index
    %c0_114 = arith.constant 0 : index
    %284 = vector.load %arg5[%c0_113, %c0_114] : memref<1x128xf32, #tpu.memory_space<vmem>>, vector<1x128xf32>
    %285 = vector.broadcast %284 : vector<1x128xf32> to vector<256x128xf32>
    %286 = arith.addf %283, %285 : vector<256x128xf32>
    %c0_115 = arith.constant 0 : index
    %c0_116 = arith.constant 0 : index
    %287 = vector.load %arg6[%c0_115, %c0_116] : memref<256x128xf32, #tpu.memory_space<vmem>>, vector<256x128xf32>
    tpu.vector_store %arg6[%c0_115, %c0_116], %286 {strides = array<i32>} : memref<256x128xf32, #tpu.memory_space<vmem>>, vector<256x128xf32>,
    return
  }
  func.func @transform_0(%arg0: i32) -> (i32, i32) {
    %c0_i32 = arith.constant 0 : i32
    %c0_i32_0 = arith.constant 0 : i32
    %c0_i32_1 = arith.constant 0 : i32
    return %c0_i32, %c0_i32_0 : i32, i32
  }
  func.func @transform_1(%arg0: i32) -> (i32, i32, i32) {
    %c0_i32 = arith.constant 0 : i32
    %c0_i32_0 = arith.constant 0 : i32
    %c0_i32_1 = arith.constant 0 : i32
    %c0_i32_2 = arith.constant 0 : i32
    return %c0_i32, %c0_i32_0, %c0_i32_1 : i32, i32, i32
  }
  func.func @transform_2(%arg0: i32) -> (i32, i32) {
    %c0_i32 = arith.constant 0 : i32
    %c0_i32_0 = arith.constant 0 : i32
    %c0_i32_1 = arith.constant 0 : i32
    return %c0_i32, %c0_i32_0 : i32, i32
  }
  func.func @transform_3(%arg0: i32) -> (i32, i32) {
    %c0_i32 = arith.constant 0 : i32
    %c0_i32_0 = arith.constant 0 : i32
    %c0_i32_1 = arith.constant 0 : i32
    return %c0_i32, %c0_i32_0 : i32, i32
  }
  func.func @transform_4(%arg0: i32) -> (i32, i32) {
    %c0_i32 = arith.constant 0 : i32
    %c0_i32_0 = arith.constant 0 : i32
    %c0_i32_1 = arith.constant 0 : i32
    return %c0_i32, %c0_i32_0 : i32, i32
  }
  func.func @transform_5(%arg0: i32) -> (i32, i32) {
    %c0_i32 = arith.constant 0 : i32
    %c0_i32_0 = arith.constant 0 : i32
    return %arg0, %c0_i32 : i32, i32
  }
}

</mosaic_0001>

<llo_original>
// kernel: a_call__.1
$region0: #{a_call__.1}
  #allocation0 [shape = 'u32[]', space=smem, size = 0x4, offset = 0x4, fixed_abs, tag = 'smem constant byte address 0x4 - core index']
  #allocation1 [shape = 'u32[144,128]{1,0:T(1,128)}', space=vmem, size = 0x12000, scoped, tag = 'internal scratch']
  %s0 = inlined_call_operand.vmem [shape: f32[560,8], index: 0, kind: input, shape index: {}]
  %s1 = inlined_call_operand.vmem [shape: bf16[9,8,32], index: 1, kind: input, shape index: {}]
  %s2 = inlined_call_operand.vmem [shape: f32[1,32], index: 2, kind: input, shape index: {}]
  %s3 = inlined_call_operand.vmem [shape: bf16[32,128], index: 3, kind: input, shape index: {}]
  %s4 = inlined_call_operand.vmem [shape: f32[1,128], index: 4, kind: input, shape index: {}]
  %s5 = inlined_call_operand.vmem [shape: f32[512,128], index: 5, kind: output, shape index: {}]
  %s6 = sld [smem:[#allocation0]]
  $region53: #{a_call__.1} parent=0
    _
  %s8 = ssub.s32 1, %s6
  %s9 = scalar_select 0, %s8, %s6
  loop: start=0, step=1, limit=4
  $region2: #{a_call__.1} parent=0 // loop_pre_header
    _
  $region3: #{a_call__.1} parent=0 // loop_header
    %s11 = sphi 0, %s15
    %p12 = scmp.ge.s32.totalorder %s11, 4
    %s19 = sphi 0, %s19
    %s21 = sphi 0, %s19
    %s22 = sphi 0, %s21
    %s36 = sphi 0, %s22
    %s40 = sphi 0, %s40
    %s42 = sphi 0, %s40
    %s43 = sphi 0, %s42
    %s57 = sphi 0, %s43
    %s61 = sphi 0, %s61
    %s63 = sphi 0, %s61
    %s64 = sphi 0, %s63
    %s78 = sphi 0, %s64
    %s82 = sphi 0, %s82
    %s84 = sphi 0, %s82
    %s85 = sphi 0, %s84
    %s99 = sphi 0, %s85
    %s103 = sphi 0, %s103
    %s105 = sphi 0, %s103
    %s106 = sphi 0, %s105
    %s120 = sphi 0, %s106
    %s126 = sphi 0, %s128
    %s129 = sphi 0, %s126
    %s130 = sphi 0, %s129
    %s146 = sphi 0, %s130
  $region4: #{a_call__.1} parent=0 // loop_header_branch
    %14 = sbr.rel (%p12) target = $region8
  $region5: #{a_call__.1} parent=0 // loop_body
    %s16 = ssub.s32 %s11, 1
    %s17 = ssub.s32 %s11, 2
    %s18 = sadd.s32 %s11, 1
    %s20 = sadd.s32 %s19, 1
    %p23 = scmp.eq.s32.totalorder %s11, 1
    %p24 = scmp.ne.s32.totalorder %s19, %s21
    %p25 = scmp.eq.s32.totalorder %s11, 0
    %p26 = por %p24, %p25
    %p27 = scmp.ne.s32.totalorder %s19, %s21
    %p28 = scmp.eq.s32.totalorder %s16, 1
    %p29 = por %p27, %p28
    %p30 = scmp.ne.s32.totalorder %s21, %s22
    %p31 = scmp.eq.s32.totalorder %s16, 0
    %p32 = por %p30, %p31
    %p33 = scmp.ne.s32.totalorder %s21, %s22
    %p34 = scmp.eq.s32.totalorder %s17, 1
    %p35 = por %p33, %p34
    %p37 = scmp.ne.s32.totalorder %s22, %s36
    %p38 = scmp.eq.s32.totalorder %s17, 0
    %p39 = por %p37, %p38
    %s41 = sadd.s32 %s40, 1
    %p44 = scmp.eq.s32.totalorder %s11, 1
    %p45 = scmp.ne.s32.totalorder %s40, %s42
    %p46 = scmp.eq.s32.totalorder %s11, 0
    %p47 = por %p45, %p46
    %p48 = scmp.ne.s32.totalorder %s40, %s42
    %p49 = scmp.eq.s32.totalorder %s16, 1
    %p50 = por %p48, %p49
    %p51 = scmp.ne.s32.totalorder %s42, %s43
    %p52 = scmp.eq.s32.totalorder %s16, 0
    %p53 = por %p51, %p52
    %p54 = scmp.ne.s32.totalorder %s42, %s43
    %p55 = scmp.eq.s32.totalorder %s17, 1
    %p56 = por %p54, %p55
    %p58 = scmp.ne.s32.totalorder %s43, %s57
    %p59 = scmp.eq.s32.totalorder %s17, 0
    %p60 = por %p58, %p59
    %s62 = sadd.s32 %s61, 1
    %p65 = scmp.eq.s32.totalorder %s11, 1
    %p66 = scmp.ne.s32.totalorder %s61, %s63
    %p67 = scmp.eq.s32.totalorder %s11, 0
    %p68 = por %p66, %p67
    %p69 = scmp.ne.s32.totalorder %s61, %s63
    %p70 = scmp.eq.s32.totalorder %s16, 1
    %p71 = por %p69, %p70
    %p72 = scmp.ne.s32.totalorder %s63, %s64
    %p73 = scmp.eq.s32.totalorder %s16, 0
    %p74 = por %p72, %p73
    %p75 = scmp.ne.s32.totalorder %s63, %s64
    %p76 = scmp.eq.s32.totalorder %s17, 1
    %p77 = por %p75, %p76
    %p79 = scmp.ne.s32.totalorder %s64, %s78
    %p80 = scmp.eq.s32.totalorder %s17, 0
    %p81 = por %p79, %p80
    %s83 = sadd.s32 %s82, 1
    %p86 = scmp.eq.s32.totalorder %s11, 1
    %p87 = scmp.ne.s32.totalorder %s82, %s84
    %p88 = scmp.eq.s32.totalorder %s11, 0
    %p89 = por %p87, %p88
    %p90 = scmp.ne.s32.totalorder %s82, %s84
    %p91 = scmp.eq.s32.totalorder %s16, 1
    %p92 = por %p90, %p91
    %p93 = scmp.ne.s32.totalorder %s84, %s85
    %p94 = scmp.eq.s32.totalorder %s16, 0
    %p95 = por %p93, %p94
    %p96 = scmp.ne.s32.totalorder %s84, %s85
    %p97 = scmp.eq.s32.totalorder %s17, 1
    %p98 = por %p96, %p97
    %p100 = scmp.ne.s32.totalorder %s85, %s99
    %p101 = scmp.eq.s32.totalorder %s17, 0
    %p102 = por %p100, %p101
    %s104 = sadd.s32 %s103, 1
    %p107 = scmp.eq.s32.totalorder %s11, 1
    %p108 = scmp.ne.s32.totalorder %s103, %s105
    %p109 = scmp.eq.s32.totalorder %s11, 0
    %p110 = por %p108, %p109
    %p111 = scmp.ne.s32.totalorder %s103, %s105
    %p112 = scmp.eq.s32.totalorder %s16, 1
    %p113 = por %p111, %p112
    %p114 = scmp.ne.s32.totalorder %s105, %s106
    %p115 = scmp.eq.s32.totalorder %s16, 0
    %p116 = por %p114, %p115
    %p117 = scmp.ne.s32.totalorder %s105, %s106
    %p118 = scmp.eq.s32.totalorder %s17, 1
    %p119 = por %p117, %p118
    %p121 = scmp.ne.s32.totalorder %s106, %s120
    %p122 = scmp.eq.s32.totalorder %s17, 0
    %p123 = por %p121, %p122
    %s124 = ssub.s32 %s11, %s18
    %p125 = scmp.eq.s32.totalorder %s124, 0
    %s127 = sadd.s32 %s126, 1
    %s128 = scalar_select %p125, %s126, %s127
    %p131 = pneg %p125
    %p132 = scmp.eq.s32.totalorder %s11, 1
    %p133 = por %p131, %p132
    %p134 = scmp.ne.s32.totalorder %s126, %s129
    %p135 = scmp.eq.s32.totalorder %s11, 0
    %p136 = por %p134, %p135
    %p137 = scmp.ne.s32.totalorder %s126, %s129
    %p138 = scmp.eq.s32.totalorder %s16, 1
    %p139 = por %p137, %p138
    %p140 = scmp.ne.s32.totalorder %s129, %s130
    %p141 = scmp.eq.s32.totalorder %s16, 0
    %p142 = por %p140, %p141
    %p143 = scmp.ne.s32.totalorder %s129, %s130
    %p144 = scmp.eq.s32.totalorder %s17, 1
    %p145 = por %p143, %p144
    %p147 = scmp.ne.s32.totalorder %s130, %s146
    %p148 = scmp.eq.s32.totalorder %s17, 0
    %p149 = por %p147, %p148
    %p150 = scmp.le.s32.totalorder 1, %s11
    %p151 = scmp.lt.s32.totalorder %s11, 3
    %p152 = pnand %p150, %p151
    %p153 = pneg %p152
    // Predicated region
    $region9: #{a_call__.1} parent=5 // pred_check
      _
    $region10: #{a_call__.1} parent=5 // pred_check_branch
      %155 = sbr.rel (%p152) target = $region12
    $region11: #{a_call__.1} parent=5 // pred_region
      %s156 = ssub.s32 %s11, 1
      // Predicated region
      $region13: #{a_call__.1} parent=11 // pred_check
        %p157 = pneg %p32
      $region14: #{a_call__.1} parent=11 // pred_check_branch
        %159 = sbr.rel (%p157) target = $region16
      $region15: #{a_call__.1} parent=11 // pred_region
        _
      $region16: #{a_call__.1} parent=11 // pred_fallthru
        _
      // Predicated region
      $region17: #{a_call__.1} parent=11 // pred_check
        %p160 = pneg %p53
      $region18: #{a_call__.1} parent=11 // pred_check_branch
        %162 = sbr.rel (%p160) target = $region20
      $region19: #{a_call__.1} parent=11 // pred_region
        _
      $region20: #{a_call__.1} parent=11 // pred_fallthru
        _
      // Predicated region
      $region21: #{a_call__.1} parent=11 // pred_check
        %p163 = pneg %p74
      $region22: #{a_call__.1} parent=11 // pred_check_branch
        %165 = sbr.rel (%p163) target = $region24
      $region23: #{a_call__.1} parent=11 // pred_region
        _
      $region24: #{a_call__.1} parent=11 // pred_fallthru
        _
      // Predicated region
      $region25: #{a_call__.1} parent=11 // pred_check
        %p166 = pneg %p95
      $region26: #{a_call__.1} parent=11 // pred_check_branch
        %168 = sbr.rel (%p166) target = $region28
      $region27: #{a_call__.1} parent=11 // pred_region
        _
      $region28: #{a_call__.1} parent=11 // pred_fallthru
        _
      // Predicated region
      $region29: #{a_call__.1} parent=11 // pred_check
        %p169 = pneg %p116
      $region30: #{a_call__.1} parent=11 // pred_check_branch
        %171 = sbr.rel (%p169) target = $region32
      $region31: #{a_call__.1} parent=11 // pred_region
        _
      $region32: #{a_call__.1} parent=11 // pred_fallthru
        _
    $region12: #{a_call__.1} parent=5 // pred_fallthru
      _
    %p172 = scmp.lt.s32.totalorder %s11, 2
    // Predicated region
    $region33: #{a_call__.1} parent=5 // pred_check
      %p173 = pneg %p172
    $region34: #{a_call__.1} parent=5 // pred_check_branch
      %175 = sbr.rel (%p173) target = $region36
    $region35: #{a_call__.1} parent=5 // pred_region
      _
    $region36: #{a_call__.1} parent=5 // pred_fallthru
      _
    %p176 = scmp.le.s32.totalorder 1, %s11
    %p177 = scmp.lt.s32.totalorder %s11, 3
    %p178 = pnand %p176, %p177
    %p179 = pneg %p178
    // Predicated region
    $region37: #{a_call__.1} parent=5 // pred_check
      _
    $region38: #{a_call__.1} parent=5 // pred_check_branch
      %181 = sbr.rel (%p178) target = $region40
    $region39: #{a_call__.1} parent=5 // pred_region
      %s182 = ssub.s32 %s11, 1
      %p183 = pneg %p32
      %p184 = pneg %p29
      %p185 = pneg %p53
      %p186 = pneg %p50
      %p187 = pneg %p74
      %p188 = pneg %p71
      %p189 = pneg %p95
      %p190 = pneg %p92
      %p191 = pneg %p116
      %p192 = pneg %p113
      %p193 = pneg %p142
      %p194 = pneg %p139
      %s195 = smul.u32 32, %s16
      %p196 = scmp.lt.s32.totalorder %s195, 63
      %s197 = scalar_select %p196, %s195, 63
      %s198 = smul.addr %s197, 8
      %s199 = scalar_lea.vmem %s5, %s198
      %s200 = smul.u32 32, %s16
      %p201 = scmp.lt.s32.totalorder %s200, 63
      %s202 = scalar_select %p201, %s200, 63
      %s203 = smul.addr %s202, 8
      %s204 = scalar_lea.vmem %s5, %s203
      %s205 = smul.u32 32, %s16
      %s207 = smul.u32 %s16, 256
      %s208 = scalar_lea.vmem %s0, %s207
      %v209 = vld [vmem:[%s208] sm:$0xff]
      %v210 = vld [vmem:[%s208 + $0x8] sm:$0xff]
      %v211 = vld [vmem:[%s208 + $0x10] sm:$0xff]
      %v212 = vld [vmem:[%s208 + $0x18] sm:$0xff]
      %v213 = vld [vmem:[%s208 + $0x20] sm:$0xff]
      %v214 = vld [vmem:[%s208 + $0x28] sm:$0xff]
      %v215 = vld [vmem:[%s208 + $0x30] sm:$0xff]
      %v216 = vld [vmem:[%s208 + $0x38] sm:$0xff]
      %v217 = vld [vmem:[%s208 + $0x40] sm:$0xff]
      %v218 = vld [vmem:[%s208 + $0x48] sm:$0xff]
      %v219 = vld [vmem:[%s208 + $0x50] sm:$0xff]
      %v220 = vld [vmem:[%s208 + $0x58] sm:$0xff]
      %v221 = vld [vmem:[%s208 + $0x60] sm:$0xff]
      %v222 = vld [vmem:[%s208 + $0x68] sm:$0xff]
      %v223 = vld [vmem:[%s208 + $0x70] sm:$0xff]
      %v224 = vld [vmem:[%s208 + $0x78] sm:$0xff]
      %v225 = vld [vmem:[%s208 + $0x80] sm:$0xff]
      %v226 = vld [vmem:[%s208 + $0x88] sm:$0xff]
      %v227 = vld [vmem:[%s208 + $0x90] sm:$0xff]
      %v228 = vld [vmem:[%s208 + $0x98] sm:$0xff]
      %v229 = vld [vmem:[%s208 + $0xa0] sm:$0xff]
      %v230 = vld [vmem:[%s208 + $0xa8] sm:$0xff]
      %v231 = vld [vmem:[%s208 + $0xb0] sm:$0xff]
      %v232 = vld [vmem:[%s208 + $0xb8] sm:$0xff]
      %v233 = vld [vmem:[%s208 + $0xc0] sm:$0xff]
      %v234 = vld [vmem:[%s208 + $0xc8] sm:$0xff]
      %v235 = vld [vmem:[%s208 + $0xd0] sm:$0xff]
      %v236 = vld [vmem:[%s208 + $0xd8] sm:$0xff]
      %v237 = vld [vmem:[%s208 + $0xe0] sm:$0xff]
      %v238 = vld [vmem:[%s208 + $0xe8] sm:$0xff]
      %v239 = vld [vmem:[%s208 + $0xf0] sm:$0xff]
      %v240 = vld [vmem:[%s208 + $0xf8] sm:$0xff]
      %v241 = vld [vmem:[%s208 + $0x100] sm:$0xff]
      %v242 = vld [vmem:[%s208 + $0x108] sm:$0xff]
      %v243 = vld [vmem:[%s208 + $0x110] sm:$0xff]
      %v244 = vld [vmem:[%s208 + $0x118] sm:$0xff]
      %v245 = vld [vmem:[%s208 + $0x120] sm:$0xff]
      %v246 = vld [vmem:[%s208 + $0x128] sm:$0xff]
      %v247 = vlaneseq
      %v248 = vshrl.u32 %v247, 7
      %v249 = vadd.s32 %v248, 8
      %v250 = vadd.s32 %v248, 16
      %v251 = vadd.s32 %v248, 24
      %v252 = vadd.s32 %v248, 32
      %v253 = vadd.s32 %v248, 40
      %v254 = vadd.s32 %v248, 48
      %v255 = vadd.s32 %v248, 56
      %v256 = vadd.s32 %v248, 64
      %v257 = vadd.s32 %v248, 72
      %v258 = vadd.s32 %v248, 80
      %v259 = vadd.s32 %v248, 88
      %v260 = vadd.s32 %v248, 96
      %v261 = vadd.s32 %v248, 104
      %v262 = vadd.s32 %v248, 112
      %v263 = vadd.s32 %v248, 120
      %v264 = vadd.s32 %v248, 128
      %v265 = vadd.s32 %v248, 136
      %v266 = vadd.s32 %v248, 144
      %v267 = vadd.s32 %v248, 152
      %v268 = vadd.s32 %v248, 160
      %v269 = vadd.s32 %v248, 168
      %v270 = vadd.s32 %v248, 176
      %v271 = vadd.s32 %v248, 184
      %v272 = vadd.s32 %v248, 192
      %v273 = vadd.s32 %v248, 200
      %v274 = vadd.s32 %v248, 208
      %v275 = vadd.s32 %v248, 216
      %v276 = vadd.s32 %v248, 224
      %v277 = vadd.s32 %v248, 232
      %v278 = vadd.s32 %v248, 240
      %v279 = vadd.s32 %v248, 248
      %v280 = vstv %s207
      %v281 = vadd.s32 %v248, %v280
      %v282 = vadd.s32 %v249, %v280
      %v283 = vadd.s32 %v250, %v280
      %v284 = vadd.s32 %v251, %v280
      %v285 = vadd.s32 %v252, %v280
      %v286 = vadd.s32 %v253, %v280
      %v287 = vadd.s32 %v254, %v280
      %v288 = vadd.s32 %v255, %v280
      %v289 = vadd.s32 %v256, %v280
      %v290 = vadd.s32 %v257, %v280
      %v291 = vadd.s32 %v258, %v280
      %v292 = vadd.s32 %v259, %v280
      %v293 = vadd.s32 %v260, %v280
      %v294 = vadd.s32 %v261, %v280
      %v295 = vadd.s32 %v262, %v280
      %v296 = vadd.s32 %v263, %v280
      %v297 = vadd.s32 %v264, %v280
      %v298 = vadd.s32 %v265, %v280
      %v299 = vadd.s32 %v266, %v280
      %v300 = vadd.s32 %v267, %v280
      %v301 = vadd.s32 %v268, %v280
      %v302 = vadd.s32 %v269, %v280
      %v303 = vadd.s32 %v270, %v280
      %v304 = vadd.s32 %v271, %v280
      %v305 = vadd.s32 %v272, %v280
      %v306 = vadd.s32 %v273, %v280
      %v307 = vadd.s32 %v274, %v280
      %v308 = vadd.s32 %v275, %v280
      %v309 = vadd.s32 %v276, %v280
      %v310 = vadd.s32 %v277, %v280
      %v311 = vadd.s32 %v278, %v280
      %v312 = vadd.s32 %v279, %v280
      %v313 = vand.u32 %v281, 15
      %v314 = vand.u32 %v282, 15
      %v315 = vand.u32 %v283, 15
      %v316 = vand.u32 %v284, 15
      %v317 = vand.u32 %v285, 15
      %v318 = vand.u32 %v286, 15
      %v319 = vand.u32 %v287, 15
      %v320 = vand.u32 %v288, 15
      %v321 = vand.u32 %v289, 15
      %v322 = vand.u32 %v290, 15
      %v323 = vand.u32 %v291, 15
      %v324 = vand.u32 %v292, 15
      %v325 = vand.u32 %v293, 15
      %v326 = vand.u32 %v294, 15
      %v327 = vand.u32 %v295, 15
      %v328 = vand.u32 %v296, 15
      %v329 = vand.u32 %v297, 15
      %v330 = vand.u32 %v298, 15
      %v331 = vand.u32 %v299, 15
      %v332 = vand.u32 %v300, 15
      %v333 = vand.u32 %v301, 15
      %v334 = vand.u32 %v302, 15
      %v335 = vand.u32 %v303, 15
      %v336 = vand.u32 %v304, 15
      %v337 = vand.u32 %v305, 15
      %v338 = vand.u32 %v306, 15
      %v339 = vand.u32 %v307, 15
      %v340 = vand.u32 %v308, 15
      %v341 = vand.u32 %v309, 15
      %v342 = vand.u32 %v310, 15
      %v343 = vand.u32 %v311, 15
      %v344 = vand.u32 %v312, 15
      %v345 = vshra.s32 %v281, 4
      %v346 = vshra.s32 %v282, 4
      %v347 = vshra.s32 %v283, 4
      %v348 = vshra.s32 %v284, 4
      %v349 = vshra.s32 %v285, 4
      %v350 = vshra.s32 %v286, 4
      %v351 = vshra.s32 %v287, 4
      %v352 = vshra.s32 %v288, 4
      %v353 = vshra.s32 %v289, 4
      %v354 = vshra.s32 %v290, 4
      %v355 = vshra.s32 %v291, 4
      %v356 = vshra.s32 %v292, 4
      %v357 = vshra.s32 %v293, 4
      %v358 = vshra.s32 %v294, 4
      %v359 = vshra.s32 %v295, 4
      %v360 = vshra.s32 %v296, 4
      %v361 = vshra.s32 %v297, 4
      %v362 = vshra.s32 %v298, 4
      %v363 = vshra.s32 %v299, 4
      %v364 = vshra.s32 %v300, 4
      %v365 = vshra.s32 %v301, 4
      %v366 = vshra.s32 %v302, 4
      %v367 = vshra.s32 %v303, 4
      %v368 = vshra.s32 %v304, 4
      %v369 = vshra.s32 %v305, 4
      %v370 = vshra.s32 %v306, 4
      %v371 = vshra.s32 %v307, 4
      %v372 = vshra.s32 %v308, 4
      %v373 = vshra.s32 %v309, 4
      %v374 = vshra.s32 %v310, 4
      %v375 = vshra.s32 %v311, 4
      %v376 = vshra.s32 %v312, 4
      %v377 = vand.u32 %v345, 15
      %v378 = vand.u32 %v346, 15
      %v379 = vand.u32 %v347, 15
      %v380 = vand.u32 %v348, 15
      %v381 = vand.u32 %v349, 15
      %v382 = vand.u32 %v350, 15
      %v383 = vand.u32 %v351, 15
      %v384 = vand.u32 %v352, 15
      %v385 = vand.u32 %v353, 15
      %v386 = vand.u32 %v354, 15
      %v387 = vand.u32 %v355, 15
      %v388 = vand.u32 %v356, 15
      %v389 = vand.u32 %v357, 15
      %v390 = vand.u32 %v358, 15
      %v391 = vand.u32 %v359, 15
      %v392 = vand.u32 %v360, 15
      %v393 = vand.u32 %v361, 15
      %v394 = vand.u32 %v362, 15
      %v395 = vand.u32 %v363, 15
      %v396 = vand.u32 %v364, 15
      %v397 = vand.u32 %v365, 15
      %v398 = vand.u32 %v366, 15
      %v399 = vand.u32 %v367, 15
      %v400 = vand.u32 %v368, 15
      %v401 = vand.u32 %v369, 15
      %v402 = vand.u32 %v370, 15
      %v403 = vand.u32 %v371, 15
      %v404 = vand.u32 %v372, 15
      %v405 = vand.u32 %v373, 15
      %v406 = vand.u32 %v374, 15
      %v407 = vand.u32 %v375, 15
      %v408 = vand.u32 %v376, 15
      %v409 = vadd.s32 %v377, 4294967295
      %v410 = vadd.s32 %v378, 4294967295
      %v411 = vadd.s32 %v379, 4294967295
      %v412 = vadd.s32 %v380, 4294967295
      %v413 = vadd.s32 %v381, 4294967295
      %v414 = vadd.s32 %v382, 4294967295
      %v415 = vadd.s32 %v383, 4294967295
      %v416 = vadd.s32 %v384, 4294967295
      %v417 = vadd.s32 %v385, 4294967295
      %v418 = vadd.s32 %v386, 4294967295
      %v419 = vadd.s32 %v387, 4294967295
      %v420 = vadd.s32 %v388, 4294967295
      %v421 = vadd.s32 %v389, 4294967295
      %v422 = vadd.s32 %v390, 4294967295
      %v423 = vadd.s32 %v391, 4294967295
      %v424 = vadd.s32 %v392, 4294967295
      %v425 = vadd.s32 %v393, 4294967295
      %v426 = vadd.s32 %v394, 4294967295
      %v427 = vadd.s32 %v395, 4294967295
      %v428 = vadd.s32 %v396, 4294967295
      %v429 = vadd.s32 %v397, 4294967295
      %v430 = vadd.s32 %v398, 4294967295
      %v431 = vadd.s32 %v399, 4294967295
      %v432 = vadd.s32 %v400, 4294967295
      %v433 = vadd.s32 %v401, 4294967295
      %v434 = vadd.s32 %v402, 4294967295
      %v435 = vadd.s32 %v403, 4294967295
      %v436 = vadd.s32 %v404, 4294967295
      %v437 = vadd.s32 %v405, 4294967295
      %v438 = vadd.s32 %v406, 4294967295
      %v439 = vadd.s32 %v407, 4294967295
      %v440 = vadd.s32 %v408, 4294967295
      %vm441 = vcmp.ge.s32.totalorder %v409, 0
      %vm442 = vcmp.ge.s32.totalorder %v410, 0
      %vm443 = vcmp.ge.s32.totalorder %v411, 0
      %vm444 = vcmp.ge.s32.totalorder %v412, 0
      %vm445 = vcmp.ge.s32.totalorder %v413, 0
      %vm446 = vcmp.ge.s32.totalorder %v414, 0
      %vm447 = vcmp.ge.s32.totalorder %v415, 0
      %vm448 = vcmp.ge.s32.totalorder %v416, 0
      %vm449 = vcmp.ge.s32.totalorder %v417, 0
      %vm450 = vcmp.ge.s32.totalorder %v418, 0
      %vm451 = vcmp.ge.s32.totalorder %v419, 0
      %vm452 = vcmp.ge.s32.totalorder %v420, 0
      %vm453 = vcmp.ge.s32.totalorder %v421, 0
      %vm454 = vcmp.ge.s32.totalorder %v422, 0
      %vm455 = vcmp.ge.s32.totalorder %v423, 0
      %vm456 = vcmp.ge.s32.totalorder %v424, 0
      %vm457 = vcmp.ge.s32.totalorder %v425, 0
      %vm458 = vcmp.ge.s32.totalorder %v426, 0
      %vm459 = vcmp.ge.s32.totalorder %v427, 0
      %vm460 = vcmp.ge.s32.totalorder %v428, 0
      %vm461 = vcmp.ge.s32.totalorder %v429, 0
      %vm462 = vcmp.ge.s32.totalorder %v430, 0
      %vm463 = vcmp.ge.s32.totalorder %v431, 0
      %vm464 = vcmp.ge.s32.totalorder %v432, 0
      %vm465 = vcmp.ge.s32.totalorder %v433, 0
      %vm466 = vcmp.ge.s32.totalorder %v434, 0
      %vm467 = vcmp.ge.s32.totalorder %v435, 0
      %vm468 = vcmp.ge.s32.totalorder %v436, 0
      %vm469 = vcmp.ge.s32.totalorder %v437, 0
      %vm470 = vcmp.ge.s32.totalorder %v438, 0
      %vm471 = vcmp.ge.s32.totalorder %v439, 0
      %vm472 = vcmp.ge.s32.totalorder %v440, 0
      %vm473 = vcmp.lt.s32.totalorder %v409, 16
      %vm474 = vcmp.lt.s32.totalorder %v410, 16
      %vm475 = vcmp.lt.s32.totalorder %v411, 16
      %vm476 = vcmp.lt.s32.totalorder %v412, 16
      %vm477 = vcmp.lt.s32.totalorder %v413, 16
      %vm478 = vcmp.lt.s32.totalorder %v414, 16
      %vm479 = vcmp.lt.s32.totalorder %v415, 16
      %vm480 = vcmp.lt.s32.totalorder %v416, 16
      %vm481 = vcmp.lt.s32.totalorder %v417, 16
      %vm482 = vcmp.lt.s32.totalorder %v418, 16
      %vm483 = vcmp.lt.s32.totalorder %v419, 16
      %vm484 = vcmp.lt.s32.totalorder %v420, 16
      %vm485 = vcmp.lt.s32.totalorder %v421, 16
      %vm486 = vcmp.lt.s32.totalorder %v422, 16
      %vm487 = vcmp.lt.s32.totalorder %v423, 16
      %vm488 = vcmp.lt.s32.totalorder %v424, 16
      %vm489 = vcmp.lt.s32.totalorder %v425, 16
      %vm490 = vcmp.lt.s32.totalorder %v426, 16
      %vm491 = vcmp.lt.s32.totalorder %v427, 16
      %vm492 = vcmp.lt.s32.totalorder %v428, 16
      %vm493 = vcmp.lt.s32.totalorder %v429, 16
      %vm494 = vcmp.lt.s32.totalorder %v430, 16
      %vm495 = vcmp.lt.s32.totalorder %v431, 16
      %vm496 = vcmp.lt.s32.totalorder %v432, 16
      %vm497 = vcmp.lt.s32.totalorder %v433, 16
      %vm498 = vcmp.lt.s32.totalorder %v434, 16
      %vm499 = vcmp.lt.s32.totalorder %v435, 16
      %vm500 = vcmp.lt.s32.totalorder %v436, 16
      %vm501 = vcmp.lt.s32.totalorder %v437, 16
      %vm502 = vcmp.lt.s32.totalorder %v438, 16
      %vm503 = vcmp.lt.s32.totalorder %v439, 16
      %vm504 = vcmp.lt.s32.totalorder %v440, 16
      %vm505 = vmand %vm441, %vm473
      %vm506 = vmand %vm442, %vm474
      %vm507 = vmand %vm443, %vm475
      %vm508 = vmand %vm444, %vm476
      %vm509 = vmand %vm445, %vm477
      %vm510 = vmand %vm446, %vm478
      %vm511 = vmand %vm447, %vm479
      %vm512 = vmand %vm448, %vm480
      %vm513 = vmand %vm449, %vm481
      %vm514 = vmand %vm450, %vm482
      %vm515 = vmand %vm451, %vm483
      %vm516 = vmand %vm452, %vm484
      %vm517 = vmand %vm453, %vm485
      %vm518 = vmand %vm454, %vm486
      %vm519 = vmand %vm455, %vm487
      %vm520 = vmand %vm456, %vm488
      %vm521 = vmand %vm457, %vm489
      %vm522 = vmand %vm458, %vm490
      %vm523 = vmand %vm459, %vm491
      %vm524 = vmand %vm460, %vm492
      %vm525 = vmand %vm461, %vm493
      %vm526 = vmand %vm462, %vm494
      %vm527 = vmand %vm463, %vm495
      %vm528 = vmand %vm464, %vm496
      %vm529 = vmand %vm465, %vm497
      %vm530 = vmand %vm466, %vm498
      %vm531 = vmand %vm467, %vm499
      %vm532 = vmand %vm468, %vm500
      %vm533 = vmand %vm469, %vm501
      %vm534 = vmand %vm470, %vm502
      %vm535 = vmand %vm471, %vm503
      %vm536 = vmand %vm472, %vm504
      %v537 = vadd.s32 %v313, 4294967295
      %v538 = vadd.s32 %v314, 4294967295
      %v539 = vadd.s32 %v315, 4294967295
      %v540 = vadd.s32 %v316, 4294967295
      %v541 = vadd.s32 %v317, 4294967295
      %v542 = vadd.s32 %v318, 4294967295
      %v543 = vadd.s32 %v319, 4294967295
      %v544 = vadd.s32 %v320, 4294967295
      %v545 = vadd.s32 %v321, 4294967295
      %v546 = vadd.s32 %v322, 4294967295
      %v547 = vadd.s32 %v323, 4294967295
      %v548 = vadd.s32 %v324, 4294967295
      %v549 = vadd.s32 %v325, 4294967295
      %v550 = vadd.s32 %v326, 4294967295
      %v551 = vadd.s32 %v327, 4294967295
      %v552 = vadd.s32 %v328, 4294967295
      %v553 = vadd.s32 %v329, 4294967295
      %v554 = vadd.s32 %v330, 4294967295
      %v555 = vadd.s32 %v331, 4294967295
      %v556 = vadd.s32 %v332, 4294967295
      %v557 = vadd.s32 %v333, 4294967295
      %v558 = vadd.s32 %v334, 4294967295
      %v559 = vadd.s32 %v335, 4294967295
      %v560 = vadd.s32 %v336, 4294967295
      %v561 = vadd.s32 %v337, 4294967295
      %v562 = vadd.s32 %v338, 4294967295
      %v563 = vadd.s32 %v339, 4294967295
      %v564 = vadd.s32 %v340, 4294967295
      %v565 = vadd.s32 %v341, 4294967295
      %v566 = vadd.s32 %v342, 4294967295
      %v567 = vadd.s32 %v343, 4294967295
      %v568 = vadd.s32 %v344, 4294967295
      %vm569 = vcmp.ge.s32.totalorder %v537, 0
      %vm570 = vcmp.ge.s32.totalorder %v538, 0
      %vm571 = vcmp.ge.s32.totalorder %v539, 0
      %vm572 = vcmp.ge.s32.totalorder %v540, 0
      %vm573 = vcmp.ge.s32.totalorder %v541, 0
      %vm574 = vcmp.ge.s32.totalorder %v542, 0
      %vm575 = vcmp.ge.s32.totalorder %v543, 0
      %vm576 = vcmp.ge.s32.totalorder %v544, 0
      %vm577 = vcmp.ge.s32.totalorder %v545, 0
      %vm578 = vcmp.ge.s32.totalorder %v546, 0
      %vm579 = vcmp.ge.s32.totalorder %v547, 0
      %vm580 = vcmp.ge.s32.totalorder %v548, 0
      %vm581 = vcmp.ge.s32.totalorder %v549, 0
      %vm582 = vcmp.ge.s32.totalorder %v550, 0
      %vm583 = vcmp.ge.s32.totalorder %v551, 0
      %vm584 = vcmp.ge.s32.totalorder %v552, 0
      %vm585 = vcmp.ge.s32.totalorder %v553, 0
      %vm586 = vcmp.ge.s32.totalorder %v554, 0
      %vm587 = vcmp.ge.s32.totalorder %v555, 0
      %vm588 = vcmp.ge.s32.totalorder %v556, 0
      %vm589 = vcmp.ge.s32.totalorder %v557, 0
      %vm590 = vcmp.ge.s32.totalorder %v558, 0
      %vm591 = vcmp.ge.s32.totalorder %v559, 0
      %vm592 = vcmp.ge.s32.totalorder %v560, 0
      %vm593 = vcmp.ge.s32.totalorder %v561, 0
      %vm594 = vcmp.ge.s32.totalorder %v562, 0
      %vm595 = vcmp.ge.s32.totalorder %v563, 0
      %vm596 = vcmp.ge.s32.totalorder %v564, 0
      %vm597 = vcmp.ge.s32.totalorder %v565, 0
      %vm598 = vcmp.ge.s32.totalorder %v566, 0
      %vm599 = vcmp.ge.s32.totalorder %v567, 0
      %vm600 = vcmp.ge.s32.totalorder %v568, 0
      %vm601 = vmand %vm505, %vm569
      %vm602 = vmand %vm506, %vm570
      %vm603 = vmand %vm507, %vm571
      %vm604 = vmand %vm508, %vm572
      %vm605 = vmand %vm509, %vm573
      %vm606 = vmand %vm510, %vm574
      %vm607 = vmand %vm511, %vm575
      %vm608 = vmand %vm512, %vm576
      %vm609 = vmand %vm513, %vm577
      %vm610 = vmand %vm514, %vm578
      %vm611 = vmand %vm515, %vm579
      %vm612 = vmand %vm516, %vm580
      %vm613 = vmand %vm517, %vm581
      %vm614 = vmand %vm518, %vm582
      %vm615 = vmand %vm519, %vm583
      %vm616 = vmand %vm520, %vm584
      %vm617 = vmand %vm521, %vm585
      %vm618 = vmand %vm522, %vm586
      %vm619 = vmand %vm523, %vm587
      %vm620 = vmand %vm524, %vm588
      %vm621 = vmand %vm525, %vm589
      %vm622 = vmand %vm526, %vm590
      %vm623 = vmand %vm527, %vm591
      %vm624 = vmand %vm528, %vm592
      %vm625 = vmand %vm529, %vm593
      %vm626 = vmand %vm530, %vm594
      %vm627 = vmand %vm531, %vm595
      %vm628 = vmand %vm532, %vm596
      %vm629 = vmand %vm533, %vm597
      %vm630 = vmand %vm534, %vm598
      %vm631 = vmand %vm535, %vm599
      %vm632 = vmand %vm536, %vm600
      %vm633 = vcmp.lt.s32.totalorder %v537, 16
      %vm634 = vcmp.lt.s32.totalorder %v538, 16
      %vm635 = vcmp.lt.s32.totalorder %v539, 16
      %vm636 = vcmp.lt.s32.totalorder %v540, 16
      %vm637 = vcmp.lt.s32.totalorder %v541, 16
      %vm638 = vcmp.lt.s32.totalorder %v542, 16
      %vm639 = vcmp.lt.s32.totalorder %v543, 16
      %vm640 = vcmp.lt.s32.totalorder %v544, 16
      %vm641 = vcmp.lt.s32.totalorder %v545, 16
      %vm642 = vcmp.lt.s32.totalorder %v546, 16
      %vm643 = vcmp.lt.s32.totalorder %v547, 16
      %vm644 = vcmp.lt.s32.totalorder %v548, 16
      %vm645 = vcmp.lt.s32.totalorder %v549, 16
      %vm646 = vcmp.lt.s32.totalorder %v550, 16
      %vm647 = vcmp.lt.s32.totalorder %v551, 16
      %vm648 = vcmp.lt.s32.totalorder %v552, 16
      %vm649 = vcmp.lt.s32.totalorder %v553, 16
      %vm650 = vcmp.lt.s32.totalorder %v554, 16
      %vm651 = vcmp.lt.s32.totalorder %v555, 16
      %vm652 = vcmp.lt.s32.totalorder %v556, 16
      %vm653 = vcmp.lt.s32.totalorder %v557, 16
      %vm654 = vcmp.lt.s32.totalorder %v558, 16
      %vm655 = vcmp.lt.s32.totalorder %v559, 16
      %vm656 = vcmp.lt.s32.totalorder %v560, 16
      %vm657 = vcmp.lt.s32.totalorder %v561, 16
      %vm658 = vcmp.lt.s32.totalorder %v562, 16
      %vm659 = vcmp.lt.s32.totalorder %v563, 16
      %vm660 = vcmp.lt.s32.totalorder %v564, 16
      %vm661 = vcmp.lt.s32.totalorder %v565, 16
      %vm662 = vcmp.lt.s32.totalorder %v566, 16
      %vm663 = vcmp.lt.s32.totalorder %v567, 16
      %vm664 = vcmp.lt.s32.totalorder %v568, 16
      %vm665 = vmand %vm601, %vm633
      %vm666 = vmand %vm602, %vm634
      %vm667 = vmand %vm603, %vm635
      %vm668 = vmand %vm604, %vm636
      %vm669 = vmand %vm605, %vm637
      %vm670 = vmand %vm606, %vm638
      %vm671 = vmand %vm607, %vm639
      %vm672 = vmand %vm608, %vm640
      %vm673 = vmand %vm609, %vm641
      %vm674 = vmand %vm610, %vm642
      %vm675 = vmand %vm611, %vm643
      %vm676 = vmand %vm612, %vm644
      %vm677 = vmand %vm613, %vm645
      %vm678 = vmand %vm614, %vm646
      %vm679 = vmand %vm615, %vm647
      %vm680 = vmand %vm616, %vm648
      %vm681 = vmand %vm617, %vm649
      %vm682 = vmand %vm618, %vm650
      %vm683 = vmand %vm619, %vm651
      %vm684 = vmand %vm620, %vm652
      %vm685 = vmand %vm621, %vm653
      %vm686 = vmand %vm622, %vm654
      %vm687 = vmand %vm623, %vm655
      %vm688 = vmand %vm624, %vm656
      %vm689 = vmand %vm625, %vm657
      %vm690 = vmand %vm626, %vm658
      %vm691 = vmand %vm627, %vm659
      %vm692 = vmand %vm628, %vm660
      %vm693 = vmand %vm629, %vm661
      %vm694 = vmand %vm630, %vm662
      %vm695 = vmand %vm631, %vm663
      %vm696 = vmand %vm632, %vm664
      %v697 = vsel %vm665, 1, 0
      %v698 = vsel %vm666, 1, 0
      %v699 = vsel %vm667, 1, 0
      %v700 = vsel %vm668, 1, 0
      %v701 = vsel %vm669, 1, 0
      %v702 = vsel %vm670, 1, 0
      %v703 = vsel %vm671, 1, 0
      %v704 = vsel %vm672, 1, 0
      %v705 = vsel %vm673, 1, 0
      %v706 = vsel %vm674, 1, 0
      %v707 = vsel %vm675, 1, 0
      %v708 = vsel %vm676, 1, 0
      %v709 = vsel %vm677, 1, 0
      %v710 = vsel %vm678, 1, 0
      %v711 = vsel %vm679, 1, 0
      %v712 = vsel %vm680, 1, 0
      %v713 = vsel %vm681, 1, 0
      %v714 = vsel %vm682, 1, 0
      %v715 = vsel %vm683, 1, 0
      %v716 = vsel %vm684, 1, 0
      %v717 = vsel %vm685, 1, 0
      %v718 = vsel %vm686, 1, 0
      %v719 = vsel %vm687, 1, 0
      %v720 = vsel %vm688, 1, 0
      %v721 = vsel %vm689, 1, 0
      %v722 = vsel %vm690, 1, 0
      %v723 = vsel %vm691, 1, 0
      %v724 = vsel %vm692, 1, 0
      %v725 = vsel %vm693, 1, 0
      %v726 = vsel %vm694, 1, 0
      %v727 = vsel %vm695, 1, 0
      %v728 = vsel %vm696, 1, 0
      %vm729 = vcmp.eq.s32.totalorder %v697, 1
      %vm730 = vcmp.eq.s32.totalorder %v698, 1
      %vm731 = vcmp.eq.s32.totalorder %v699, 1
      %vm732 = vcmp.eq.s32.totalorder %v700, 1
      %vm733 = vcmp.eq.s32.totalorder %v701, 1
      %vm734 = vcmp.eq.s32.totalorder %v702, 1
      %vm735 = vcmp.eq.s32.totalorder %v703, 1
      %vm736 = vcmp.eq.s32.totalorder %v704, 1
      %vm737 = vcmp.eq.s32.totalorder %v705, 1
      %vm738 = vcmp.eq.s32.totalorder %v706, 1
      %vm739 = vcmp.eq.s32.totalorder %v707, 1
      %vm740 = vcmp.eq.s32.totalorder %v708, 1
      %vm741 = vcmp.eq.s32.totalorder %v709, 1
      %vm742 = vcmp.eq.s32.totalorder %v710, 1
      %vm743 = vcmp.eq.s32.totalorder %v711, 1
      %vm744 = vcmp.eq.s32.totalorder %v712, 1
      %vm745 = vcmp.eq.s32.totalorder %v713, 1
      %vm746 = vcmp.eq.s32.totalorder %v714, 1
      %vm747 = vcmp.eq.s32.totalorder %v715, 1
      %vm748 = vcmp.eq.s32.totalorder %v716, 1
      %vm749 = vcmp.eq.s32.totalorder %v717, 1
      %vm750 = vcmp.eq.s32.totalorder %v718, 1
      %vm751 = vcmp.eq.s32.totalorder %v719, 1
      %vm752 = vcmp.eq.s32.totalorder %v720, 1
      %vm753 = vcmp.eq.s32.totalorder %v721, 1
      %vm754 = vcmp.eq.s32.totalorder %v722, 1
      %vm755 = vcmp.eq.s32.totalorder %v723, 1
      %vm756 = vcmp.eq.s32.totalorder %v724, 1
      %vm757 = vcmp.eq.s32.totalorder %v725, 1
      %vm758 = vcmp.eq.s32.totalorder %v726, 1
      %vm759 = vcmp.eq.s32.totalorder %v727, 1
      %vm760 = vcmp.eq.s32.totalorder %v728, 1
      %vm794 = vcmask 1040384
      %v795 = vrot.slane %v209, 7
      %v796 = vrot.slane %v210, 7
      %v797 = vsel %vm794, %v795, %v796
      %v798 = vrot.slane %v211, 7
      %v799 = vsel %vm794, %v796, %v798
      %v800 = vrot.slane %v212, 7
      %v801 = vsel %vm794, %v798, %v800
      %v802 = vrot.slane %v213, 7
      %v803 = vsel %vm794, %v800, %v802
      %v804 = vrot.slane %v214, 7
      %v805 = vsel %vm794, %v802, %v804
      %v806 = vrot.slane %v215, 7
      %v807 = vsel %vm794, %v804, %v806
      %v808 = vrot.slane %v216, 7
      %v809 = vsel %vm794, %v806, %v808
      %v810 = vrot.slane %v217, 7
      %v811 = vsel %vm794, %v808, %v810
      %v812 = vrot.slane %v218, 7
      %v813 = vsel %vm794, %v810, %v812
      %v814 = vrot.slane %v219, 7
      %v815 = vsel %vm794, %v812, %v814
      %v816 = vrot.slane %v220, 7
      %v817 = vsel %vm794, %v814, %v816
      %v818 = vrot.slane %v221, 7
      %v819 = vsel %vm794, %v816, %v818
      %v820 = vrot.slane %v222, 7
      %v821 = vsel %vm794, %v818, %v820
      %v822 = vrot.slane %v223, 7
      %v823 = vsel %vm794, %v820, %v822
      %v824 = vrot.slane %v224, 7
      %v825 = vsel %vm794, %v822, %v824
      %v826 = vrot.slane %v225, 7
      %v827 = vsel %vm794, %v824, %v826
      %v828 = vrot.slane %v226, 7
      %v829 = vsel %vm794, %v826, %v828
      %v830 = vrot.slane %v227, 7
      %v831 = vsel %vm794, %v828, %v830
      %v832 = vrot.slane %v228, 7
      %v833 = vsel %vm794, %v830, %v832
      %v834 = vrot.slane %v229, 7
      %v835 = vsel %vm794, %v832, %v834
      %v836 = vrot.slane %v230, 7
      %v837 = vsel %vm794, %v834, %v836
      %v838 = vrot.slane %v231, 7
      %v839 = vsel %vm794, %v836, %v838
      %v840 = vrot.slane %v232, 7
      %v841 = vsel %vm794, %v838, %v840
      %v842 = vrot.slane %v233, 7
      %v843 = vsel %vm794, %v840, %v842
      %v844 = vrot.slane %v234, 7
      %v845 = vsel %vm794, %v842, %v844
      %v846 = vrot.slane %v235, 7
      %v847 = vsel %vm794, %v844, %v846
      %v848 = vrot.slane %v236, 7
      %v849 = vsel %vm794, %v846, %v848
      %v850 = vrot.slane %v237, 7
      %v851 = vsel %vm794, %v848, %v850
      %v852 = vrot.slane %v238, 7
      %v853 = vsel %vm794, %v850, %v852
      %v854 = vrot.slane %v239, 7
      %v855 = vsel %vm794, %v852, %v854
      %v856 = vrot.slane %v240, 7
      %v857 = vsel %vm794, %v854, %v856
      %v858 = vrot.slane %v241, 7
      %v859 = vsel %vm794, %v856, %v858
      %v892 = vsel %vm729, %v797, 0.0
      %v893 = vsel %vm730, %v799, 0.0
      %v894 = vsel %vm731, %v801, 0.0
      %v895 = vsel %vm732, %v803, 0.0
      %v896 = vsel %vm733, %v805, 0.0
      %v897 = vsel %vm734, %v807, 0.0
      %v898 = vsel %vm735, %v809, 0.0
      %v899 = vsel %vm736, %v811, 0.0
      %v900 = vsel %vm737, %v813, 0.0
      %v901 = vsel %vm738, %v815, 0.0
      %v902 = vsel %vm739, %v817, 0.0
      %v903 = vsel %vm740, %v819, 0.0
      %v904 = vsel %vm741, %v821, 0.0
      %v905 = vsel %vm742, %v823, 0.0
      %v906 = vsel %vm743, %v825, 0.0
      %v907 = vsel %vm744, %v827, 0.0
      %v908 = vsel %vm745, %v829, 0.0
      %v909 = vsel %vm746, %v831, 0.0
      %v910 = vsel %vm747, %v833, 0.0
      %v911 = vsel %vm748, %v835, 0.0
      %v912 = vsel %vm749, %v837, 0.0
      %v913 = vsel %vm750, %v839, 0.0
      %v914 = vsel %vm751, %v841, 0.0
      %v915 = vsel %vm752, %v843, 0.0
      %v916 = vsel %vm753, %v845, 0.0
      %v917 = vsel %vm754, %v847, 0.0
      %v918 = vsel %vm755, %v849, 0.0
      %v919 = vsel %vm756, %v851, 0.0
      %v920 = vsel %vm757, %v853, 0.0
      %v921 = vsel %vm758, %v855, 0.0
      %v922 = vsel %vm759, %v857, 0.0
      %v923 = vsel %vm760, %v859, 0.0
      %v924 = vpack.c.bf16 %v893, %v892
      %v925 = vpack.c.bf16 %v895, %v894
      %v926 = vpack.c.bf16 %v897, %v896
      %v927 = vpack.c.bf16 %v899, %v898
      %v928 = vpack.c.bf16 %v901, %v900
      %v929 = vpack.c.bf16 %v903, %v902
      %v930 = vpack.c.bf16 %v905, %v904
      %v931 = vpack.c.bf16 %v907, %v906
      %v932 = vpack.c.bf16 %v909, %v908
      %v933 = vpack.c.bf16 %v911, %v910
      %v934 = vpack.c.bf16 %v913, %v912
      %v935 = vpack.c.bf16 %v915, %v914
      %v936 = vpack.c.bf16 %v917, %v916
      %v937 = vpack.c.bf16 %v919, %v918
      %v938 = vpack.c.bf16 %v921, %v920
      %v939 = vpack.c.bf16 %v923, %v922
      %v940 = vld [vmem:[%s1] sm:$0xf]
      %vm941 = vcmp.ge.s32.totalorder %v313, 0
      %vm942 = vcmp.ge.s32.totalorder %v314, 0
      %vm943 = vcmp.ge.s32.totalorder %v315, 0
      %vm944 = vcmp.ge.s32.totalorder %v316, 0
      %vm945 = vcmp.ge.s32.totalorder %v317, 0
      %vm946 = vcmp.ge.s32.totalorder %v318, 0
      %vm947 = vcmp.ge.s32.totalorder %v319, 0
      %vm948 = vcmp.ge.s32.totalorder %v320, 0
      %vm949 = vcmp.ge.s32.totalorder %v321, 0
      %vm950 = vcmp.ge.s32.totalorder %v322, 0
      %vm951 = vcmp.ge.s32.totalorder %v323, 0
      %vm952 = vcmp.ge.s32.totalorder %v324, 0
      %vm953 = vcmp.ge.s32.totalorder %v325, 0
      %vm954 = vcmp.ge.s32.totalorder %v326, 0
      %vm955 = vcmp.ge.s32.totalorder %v327, 0
      %vm956 = vcmp.ge.s32.totalorder %v328, 0
      %vm957 = vcmp.ge.s32.totalorder %v329, 0
      %vm958 = vcmp.ge.s32.totalorder %v330, 0
      %vm959 = vcmp.ge.s32.totalorder %v331, 0
      %vm960 = vcmp.ge.s32.totalorder %v332, 0
      %vm961 = vcmp.ge.s32.totalorder %v333, 0
      %vm962 = vcmp.ge.s32.totalorder %v334, 0
      %vm963 = vcmp.ge.s32.totalorder %v335, 0
      %vm964 = vcmp.ge.s32.totalorder %v336, 0
      %vm965 = vcmp.ge.s32.totalorder %v337, 0
      %vm966 = vcmp.ge.s32.totalorder %v338, 0
      %vm967 = vcmp.ge.s32.totalorder %v339, 0
      %vm968 = vcmp.ge.s32.totalorder %v340, 0
      %vm969 = vcmp.ge.s32.totalorder %v341, 0
      %vm970 = vcmp.ge.s32.totalorder %v342, 0
      %vm971 = vcmp.ge.s32.totalorder %v343, 0
      %vm972 = vcmp.ge.s32.totalorder %v344, 0
      %vm973 = vmand %vm505, %vm941
      %vm974 = vmand %vm506, %vm942
      %vm975 = vmand %vm507, %vm943
      %vm976 = vmand %vm508, %vm944
      %vm977 = vmand %vm509, %vm945
      %vm978 = vmand %vm510, %vm946
      %vm979 = vmand %vm511, %vm947
      %vm980 = vmand %vm512, %vm948
      %vm981 = vmand %vm513, %vm949
      %vm982 = vmand %vm514, %vm950
      %vm983 = vmand %vm515, %vm951
      %vm984 = vmand %vm516, %vm952
      %vm985 = vmand %vm517, %vm953
      %vm986 = vmand %vm518, %vm954
      %vm987 = vmand %vm519, %vm955
      %vm988 = vmand %vm520, %vm956
      %vm989 = vmand %vm521, %vm957
      %vm990 = vmand %vm522, %vm958
      %vm991 = vmand %vm523, %vm959
      %vm992 = vmand %vm524, %vm960
      %vm993 = vmand %vm525, %vm961
      %vm994 = vmand %vm526, %vm962
      %vm995 = vmand %vm527, %vm963
      %vm996 = vmand %vm528, %vm964
      %vm997 = vmand %vm529, %vm965
      %vm998 = vmand %vm530, %vm966
      %vm999 = vmand %vm531, %vm967
      %vm1000 = vmand %vm532, %vm968
      %vm1001 = vmand %vm533, %vm969
      %vm1002 = vmand %vm534, %vm970
      %vm1003 = vmand %vm535, %vm971
      %vm1004 = vmand %vm536, %vm972
      %vm1005 = vcmp.lt.s32.totalorder %v313, 16
      %vm1006 = vcmp.lt.s32.totalorder %v314, 16
      %vm1007 = vcmp.lt.s32.totalorder %v315, 16
      %vm1008 = vcmp.lt.s32.totalorder %v316, 16
      %vm1009 = vcmp.lt.s32.totalorder %v317, 16
      %vm1010 = vcmp.lt.s32.totalorder %v318, 16
      %vm1011 = vcmp.lt.s32.totalorder %v319, 16
      %vm1012 = vcmp.lt.s32.totalorder %v320, 16
      %vm1013 = vcmp.lt.s32.totalorder %v321, 16
      %vm1014 = vcmp.lt.s32.totalorder %v322, 16
      %vm1015 = vcmp.lt.s32.totalorder %v323, 16
      %vm1016 = vcmp.lt.s32.totalorder %v324, 16
      %vm1017 = vcmp.lt.s32.totalorder %v325, 16
      %vm1018 = vcmp.lt.s32.totalorder %v326, 16
      %vm1019 = vcmp.lt.s32.totalorder %v327, 16
      %vm1020 = vcmp.lt.s32.totalorder %v328, 16
      %vm1021 = vcmp.lt.s32.totalorder %v329, 16
      %vm1022 = vcmp.lt.s32.totalorder %v330, 16
      %vm1023 = vcmp.lt.s32.totalorder %v331, 16
      %vm1024 = vcmp.lt.s32.totalorder %v332, 16
      %vm1025 = vcmp.lt.s32.totalorder %v333, 16
      %vm1026 = vcmp.lt.s32.totalorder %v334, 16
      %vm1027 = vcmp.lt.s32.totalorder %v335, 16
      %vm1028 = vcmp.lt.s32.totalorder %v336, 16
      %vm1029 = vcmp.lt.s32.totalorder %v337, 16
      %vm1030 = vcmp.lt.s32.totalorder %v338, 16
      %vm1031 = vcmp.lt.s32.totalorder %v339, 16
      %vm1032 = vcmp.lt.s32.totalorder %v340, 16
      %vm1033 = vcmp.lt.s32.totalorder %v341, 16
      %vm1034 = vcmp.lt.s32.totalorder %v342, 16
      %vm1035 = vcmp.lt.s32.totalorder %v343, 16
      %vm1036 = vcmp.lt.s32.totalorder %v344, 16
      %vm1037 = vmand %vm973, %vm1005
      %vm1038 = vmand %vm974, %vm1006
      %vm1039 = vmand %vm975, %vm1007
      %vm1040 = vmand %vm976, %vm1008
      %vm1041 = vmand %vm977, %vm1009
      %vm1042 = vmand %vm978, %vm1010
      %vm1043 = vmand %vm979, %vm1011
      %vm1044 = vmand %vm980, %vm1012
      %vm1045 = vmand %vm981, %vm1013
      %vm1046 = vmand %vm982, %vm1014
      %vm1047 = vmand %vm983, %vm1015
      %vm1048 = vmand %vm984, %vm1016
      %vm1049 = vmand %vm985, %vm1017
      %vm1050 = vmand %vm986, %vm1018
      %vm1051 = vmand %vm987, %vm1019
      %vm1052 = vmand %vm988, %vm1020
      %vm1053 = vmand %vm989, %vm1021
      %vm1054 = vmand %vm990, %vm1022
      %vm1055 = vmand %vm991, %vm1023
      %vm1056 = vmand %vm992, %vm1024
      %vm1057 = vmand %vm993, %vm1025
      %vm1058 = vmand %vm994, %vm1026
      %vm1059 = vmand %vm995, %vm1027
      %vm1060 = vmand %vm996, %vm1028
      %vm1061 = vmand %vm997, %vm1029
      %vm1062 = vmand %vm998, %vm1030
      %vm1063 = vmand %vm999, %vm1031
      %vm1064 = vmand %vm1000, %vm1032
      %vm1065 = vmand %vm1001, %vm1033
      %vm1066 = vmand %vm1002, %vm1034
      %vm1067 = vmand %vm1003, %vm1035
      %vm1068 = vmand %vm1004, %vm1036
      %v1069 = vsel %vm1037, 1, 0
      %v1070 = vsel %vm1038, 1, 0
      %v1071 = vsel %vm1039, 1, 0
      %v1072 = vsel %vm1040, 1, 0
      %v1073 = vsel %vm1041, 1, 0
      %v1074 = vsel %vm1042, 1, 0
      %v1075 = vsel %vm1043, 1, 0
      %v1076 = vsel %vm1044, 1, 0
      %v1077 = vsel %vm1045, 1, 0
      %v1078 = vsel %vm1046, 1, 0
      %v1079 = vsel %vm1047, 1, 0
      %v1080 = vsel %vm1048, 1, 0
      %v1081 = vsel %vm1049, 1, 0
      %v1082 = vsel %vm1050, 1, 0
      %v1083 = vsel %vm1051, 1, 0
      %v1084 = vsel %vm1052, 1, 0
      %v1085 = vsel %vm1053, 1, 0
      %v1086 = vsel %vm1054, 1, 0
      %v1087 = vsel %vm1055, 1, 0
      %v1088 = vsel %vm1056, 1, 0
      %v1089 = vsel %vm1057, 1, 0
      %v1090 = vsel %vm1058, 1, 0
      %v1091 = vsel %vm1059, 1, 0
      %v1092 = vsel %vm1060, 1, 0
      %v1093 = vsel %vm1061, 1, 0
      %v1094 = vsel %vm1062, 1, 0
      %v1095 = vsel %vm1063, 1, 0
      %v1096 = vsel %vm1064, 1, 0
      %v1097 = vsel %vm1065, 1, 0
      %v1098 = vsel %vm1066, 1, 0
      %v1099 = vsel %vm1067, 1, 0
      %v1100 = vsel %vm1068, 1, 0
      %vm1101 = vcmp.eq.s32.totalorder %v1069, 1
      %vm1102 = vcmp.eq.s32.totalorder %v1070, 1
      %vm1103 = vcmp.eq.s32.totalorder %v1071, 1
      %vm1104 = vcmp.eq.s32.totalorder %v1072, 1
      %vm1105 = vcmp.eq.s32.totalorder %v1073, 1
      %vm1106 = vcmp.eq.s32.totalorder %v1074, 1
      %vm1107 = vcmp.eq.s32.totalorder %v1075, 1
      %vm1108 = vcmp.eq.s32.totalorder %v1076, 1
      %vm1109 = vcmp.eq.s32.totalorder %v1077, 1
      %vm1110 = vcmp.eq.s32.totalorder %v1078, 1
      %vm1111 = vcmp.eq.s32.totalorder %v1079, 1
      %vm1112 = vcmp.eq.s32.totalorder %v1080, 1
      %vm1113 = vcmp.eq.s32.totalorder %v1081, 1
      %vm1114 = vcmp.eq.s32.totalorder %v1082, 1
      %vm1115 = vcmp.eq.s32.totalorder %v1083, 1
      %vm1116 = vcmp.eq.s32.totalorder %v1084, 1
      %vm1117 = vcmp.eq.s32.totalorder %v1085, 1
      %vm1118 = vcmp.eq.s32.totalorder %v1086, 1
      %vm1119 = vcmp.eq.s32.totalorder %v1087, 1
      %vm1120 = vcmp.eq.s32.totalorder %v1088, 1
      %vm1121 = vcmp.eq.s32.totalorder %v1089, 1
      %vm1122 = vcmp.eq.s32.totalorder %v1090, 1
      %vm1123 = vcmp.eq.s32.totalorder %v1091, 1
      %vm1124 = vcmp.eq.s32.totalorder %v1092, 1
      %vm1125 = vcmp.eq.s32.totalorder %v1093, 1
      %vm1126 = vcmp.eq.s32.totalorder %v1094, 1
      %vm1127 = vcmp.eq.s32.totalorder %v1095, 1
      %vm1128 = vcmp.eq.s32.totalorder %v1096, 1
      %vm1129 = vcmp.eq.s32.totalorder %v1097, 1
      %vm1130 = vcmp.eq.s32.totalorder %v1098, 1
      %vm1131 = vcmp.eq.s32.totalorder %v1099, 1
      %vm1132 = vcmp.eq.s32.totalorder %v1100, 1
      %v1133 = vsel %vm1101, %v210, 0.0
      %v1134 = vsel %vm1102, %v211, 0.0
      %v1135 = vsel %vm1103, %v212, 0.0
      %v1136 = vsel %vm1104, %v213, 0.0
      %v1137 = vsel %vm1105, %v214, 0.0
      %v1138 = vsel %vm1106, %v215, 0.0
      %v1139 = vsel %vm1107, %v216, 0.0
      %v1140 = vsel %vm1108, %v217, 0.0
      %v1141 = vsel %vm1109, %v218, 0.0
      %v1142 = vsel %vm1110, %v219, 0.0
      %v1143 = vsel %vm1111, %v220, 0.0
      %v1144 = vsel %vm1112, %v221, 0.0
      %v1145 = vsel %vm1113, %v222, 0.0
      %v1146 = vsel %vm1114, %v223, 0.0
      %v1147 = vsel %vm1115, %v224, 0.0
      %v1148 = vsel %vm1116, %v225, 0.0
      %v1149 = vsel %vm1117, %v226, 0.0
      %v1150 = vsel %vm1118, %v227, 0.0
      %v1151 = vsel %vm1119, %v228, 0.0
      %v1152 = vsel %vm1120, %v229, 0.0
      %v1153 = vsel %vm1121, %v230, 0.0
      %v1154 = vsel %vm1122, %v231, 0.0
      %v1155 = vsel %vm1123, %v232, 0.0
      %v1156 = vsel %vm1124, %v233, 0.0
      %v1157 = vsel %vm1125, %v234, 0.0
      %v1158 = vsel %vm1126, %v235, 0.0
      %v1159 = vsel %vm1127, %v236, 0.0
      %v1160 = vsel %vm1128, %v237, 0.0
      %v1161 = vsel %vm1129, %v238, 0.0
      %v1162 = vsel %vm1130, %v239, 0.0
      %v1163 = vsel %vm1131, %v240, 0.0
      %v1164 = vsel %vm1132, %v241, 0.0
      %v1165 = vpack.c.bf16 %v1134, %v1133
      %v1166 = vpack.c.bf16 %v1136, %v1135
      %v1167 = vpack.c.bf16 %v1138, %v1137
      %v1168 = vpack.c.bf16 %v1140, %v1139
      %v1169 = vpack.c.bf16 %v1142, %v1141
      %v1170 = vpack.c.bf16 %v1144, %v1143
      %v1171 = vpack.c.bf16 %v1146, %v1145
      %v1172 = vpack.c.bf16 %v1148, %v1147
      %v1173 = vpack.c.bf16 %v1150, %v1149
      %v1174 = vpack.c.bf16 %v1152, %v1151
      %v1175 = vpack.c.bf16 %v1154, %v1153
      %v1176 = vpack.c.bf16 %v1156, %v1155
      %v1177 = vpack.c.bf16 %v1158, %v1157
      %v1178 = vpack.c.bf16 %v1160, %v1159
      %v1179 = vpack.c.bf16 %v1162, %v1161
      %v1180 = vpack.c.bf16 %v1164, %v1163
      %s1181 = scalar_lea.vmem %s1, 4
      %v1182 = vld [vmem:[%s1181] sm:$0xf]
      %vm1183 = vcmask 64512
      %v1185 = vsel %vm1183, %v1165, 0
      %v1188 = vsel %vm1183, %v1166, 0
      %v1191 = vsel %vm1183, %v1167, 0
      %v1194 = vsel %vm1183, %v1168, 0
      %v1197 = vsel %vm1183, %v1169, 0
      %v1200 = vsel %vm1183, %v1170, 0
      %v1203 = vsel %vm1183, %v1171, 0
      %v1206 = vsel %vm1183, %v1172, 0
      %v1209 = vsel %vm1183, %v1173, 0
      %v1212 = vsel %vm1183, %v1174, 0
      %v1215 = vsel %vm1183, %v1175, 0
      %v1218 = vsel %vm1183, %v1176, 0
      %v1221 = vsel %vm1183, %v1177, 0
      %v1224 = vsel %vm1183, %v1178, 0
      %v1227 = vsel %vm1183, %v1179, 0
      %v1230 = vsel %vm1183, %v1180, 0
      %vm1232 = vcmask 1043456
      %v1234 = vsel %vm1232, %v1182, 0
      %1236 = vmatprep.subr.bf16.mxu0 0
      %1237 = vmatpush1.bf16.msra.mxu0 %v1234
      %1238 = vmatprep.subr.bf16.mxu0 0
      %1239 = vmatpush1.bf16.msra.mxu0 0
      %1240 = vmatprep.subr.bf16.mxu0 0
      %1241 = vmatpush1.bf16.msra.mxu0 0
      %1242 = vmatprep.subr.bf16.mxu0 0
      %1243 = vmatpush1.bf16.msra.mxu0 0
      %1244 = vmatprep.subr.bf16.mxu0 0
      %1245 = vmatpush1.bf16.msra.mxu0 0
      %1246 = vmatprep.subr.bf16.mxu0 0
      %1247 = vmatpush1.bf16.msra.mxu0 0
      %1248 = vmatprep.subr.bf16.mxu0 0
      %1249 = vmatpush1.bf16.msra.mxu0 0
      %1250 = vmatprep.subr.bf16.mxu0 0
      %1251 = vmatpush1.bf16.msra.mxu0 0
      %1252 = vmatprep.subr.bf16.mxu0 0
      %1253 = vmatpush1.bf16.msra.mxu0 0
      %1254 = vmatprep.subr.bf16.mxu0 0
      %1255 = vmatpush1.bf16.msra.mxu0 0
      %1256 = vmatprep.subr.bf16.mxu0 0
      %1257 = vmatpush1.bf16.msra.mxu0 0
      %1258 = vmatprep.subr.bf16.mxu0 0
      %1259 = vmatpush1.bf16.msra.mxu0 0
      %1260 = vmatprep.subr.bf16.mxu0 0
      %1261 = vmatpush1.bf16.msra.mxu0 0
      %1262 = vmatprep.subr.bf16.mxu0 0
      %1263 = vmatpush1.bf16.msra.mxu0 0
      %1264 = vmatprep.subr.bf16.mxu0 0
      %1265 = vmatpush1.bf16.msra.mxu0 0
      %1266 = vmatprep.subr.bf16.mxu0 0
      %1267 = vmatpush1.bf16.msra.mxu0 0
      %1268 = vmatprep.mubr.bf16.mxu0 0
      %1269 = vmatmul.mubr.bf16.gmra.mrb[0].mxu0 %v1185
      %v1270 = vpop.f32.mrb[0].mxu0
      %v1271 = vadd.f32 0.0, %v1270
      %v1272 = vpop.f32.mrb[0].mxu0
      %v1273 = vpop.f32.mrb[0].mxu0
      %v1274 = vadd.f32 0.0, %v1273
      %v1275 = vpop.f32.mrb[0].mxu0
      %1276 = vmatprep.mubr.bf16.mxu0 0
      %1277 = vmatmul.mubr.bf16.gmra.mrb[0].mxu0 %v1188
      %v1278 = vpop.f32.mrb[0].mxu0
      %v1279 = vadd.f32 0.0, %v1278
      %v1280 = vpop.f32.mrb[0].mxu0
      %v1281 = vpop.f32.mrb[0].mxu0
      %v1282 = vadd.f32 0.0, %v1281
      %v1283 = vpop.f32.mrb[0].mxu0
      %1284 = vmatprep.mubr.bf16.mxu0 0
      %1285 = vmatmul.mubr.bf16.gmra.mrb[0].mxu0 %v1191
      %v1286 = vpop.f32.mrb[0].mxu0
      %v1287 = vadd.f32 0.0, %v1286
      %v1288 = vpop.f32.mrb[0].mxu0
      %v1289 = vpop.f32.mrb[0].mxu0
      %v1290 = vadd.f32 0.0, %v1289
      %v1291 = vpop.f32.mrb[0].mxu0
      %1292 = vmatprep.mubr.bf16.mxu0 0
      %1293 = vmatmul.mubr.bf16.gmra.mrb[0].mxu0 %v1194
      %v1294 = vpop.f32.mrb[0].mxu0
      %v1295 = vadd.f32 0.0, %v1294
      %v1296 = vpop.f32.mrb[0].mxu0
      %v1297 = vpop.f32.mrb[0].mxu0
      %v1298 = vadd.f32 0.0, %v1297
      %v1299 = vpop.f32.mrb[0].mxu0
      %1300 = vmatprep.mubr.bf16.mxu0 0
      %1301 = vmatmul.mubr.bf16.gmra.mrb[0].mxu0 %v1197
      %v1302 = vpop.f32.mrb[0].mxu0
      %v1303 = vadd.f32 0.0, %v1302
      %v1304 = vpop.f32.mrb[0].mxu0
      %v1305 = vpop.f32.mrb[0].mxu0
      %v1306 = vadd.f32 0.0, %v1305
      %v1307 = vpop.f32.mrb[0].mxu0
      %1308 = vmatprep.mubr.bf16.mxu0 0
      %1309 = vmatmul.mubr.bf16.gmra.mrb[0].mxu0 %v1200
      %v1310 = vpop.f32.mrb[0].mxu0
      %v1311 = vadd.f32 0.0, %v1310
      %v1312 = vpop.f32.mrb[0].mxu0
      %v1313 = vpop.f32.mrb[0].mxu0
      %v1314 = vadd.f32 0.0, %v1313
      %v1315 = vpop.f32.mrb[0].mxu0
      %1316 = vmatprep.mubr.bf16.mxu0 0
      %1317 = vmatmul.mubr.bf16.gmra.mrb[0].mxu0 %v1203
      %v1318 = vpop.f32.mrb[0].mxu0
      %v1319 = vadd.f32 0.0, %v1318
      %v1320 = vpop.f32.mrb[0].mxu0
      %v1321 = vpop.f32.mrb[0].mxu0
      %v1322 = vadd.f32 0.0, %v1321
      %v1323 = vpop.f32.mrb[0].mxu0
      %1324 = vmatprep.mubr.bf16.mxu0 0
      %1325 = vmatmul.mubr.bf16.gmra.mrb[0].mxu0 %v1206
      %v1326 = vpop.f32.mrb[0].mxu0
      %v1327 = vadd.f32 0.0, %v1326
      %v1328 = vpop.f32.mrb[0].mxu0
      %v1329 = vpop.f32.mrb[0].mxu0
      %v1330 = vadd.f32 0.0, %v1329
      %v1331 = vpop.f32.mrb[0].mxu0
      %1332 = vmatprep.mubr.bf16.mxu0 0
      %1333 = vmatmul.mubr.bf16.gmra.mrb[0].mxu0 %v1209
      %v1334 = vpop.f32.mrb[0].mxu0
      %v1335 = vadd.f32 0.0, %v1334
      %v1336 = vpop.f32.mrb[0].mxu0
      %v1337 = vpop.f32.mrb[0].mxu0
      %v1338 = vadd.f32 0.0, %v1337
      %v1339 = vpop.f32.mrb[0].mxu0
      %1340 = vmatprep.mubr.bf16.mxu0 0
      %1341 = vmatmul.mubr.bf16.gmra.mrb[0].mxu0 %v1212
      %v1342 = vpop.f32.mrb[0].mxu0
      %v1343 = vadd.f32 0.0, %v1342
      %v1344 = vpop.f32.mrb[0].mxu0
      %v1345 = vpop.f32.mrb[0].mxu0
      %v1346 = vadd.f32 0.0, %v1345
      %v1347 = vpop.f32.mrb[0].mxu0
      %1348 = vmatprep.mubr.bf16.mxu0 0
      %1349 = vmatmul.mubr.bf16.gmra.mrb[0].mxu0 %v1215
      %v1350 = vpop.f32.mrb[0].mxu0
      %v1351 = vadd.f32 0.0, %v1350
      %v1352 = vpop.f32.mrb[0].mxu0
      %v1353 = vpop.f32.mrb[0].mxu0
      %v1354 = vadd.f32 0.0, %v1353
      %v1355 = vpop.f32.mrb[0].mxu0
      %1356 = vmatprep.mubr.bf16.mxu0 0
      %1357 = vmatmul.mubr.bf16.gmra.mrb[0].mxu0 %v1218
      %v1358 = vpop.f32.mrb[0].mxu0
      %v1359 = vadd.f32 0.0, %v1358
      %v1360 = vpop.f32.mrb[0].mxu0
      %v1361 = vpop.f32.mrb[0].mxu0
      %v1362 = vadd.f32 0.0, %v1361
      %v1363 = vpop.f32.mrb[0].mxu0
      %1364 = vmatprep.mubr.bf16.mxu0 0
      %1365 = vmatmul.mubr.bf16.gmra.mrb[0].mxu0 %v1221
      %v1366 = vpop.f32.mrb[0].mxu0
      %v1367 = vadd.f32 0.0, %v1366
      %v1368 = vpop.f32.mrb[0].mxu0
      %v1369 = vpop.f32.mrb[0].mxu0
      %v1370 = vadd.f32 0.0, %v1369
      %v1371 = vpop.f32.mrb[0].mxu0
      %1372 = vmatprep.mubr.bf16.mxu0 0
      %1373 = vmatmul.mubr.bf16.gmra.mrb[0].mxu0 %v1224
      %v1374 = vpop.f32.mrb[0].mxu0
      %v1375 = vadd.f32 0.0, %v1374
      %v1376 = vpop.f32.mrb[0].mxu0
      %v1377 = vpop.f32.mrb[0].mxu0
      %v1378 = vadd.f32 0.0, %v1377
      %v1379 = vpop.f32.mrb[0].mxu0
      %1380 = vmatprep.mubr.bf16.mxu0 0
      %1381 = vmatmul.mubr.bf16.gmra.mrb[0].mxu0 %v1227
      %v1382 = vpop.f32.mrb[0].mxu0
      %v1383 = vadd.f32 0.0, %v1382
      %v1384 = vpop.f32.mrb[0].mxu0
      %v1385 = vpop.f32.mrb[0].mxu0
      %v1386 = vadd.f32 0.0, %v1385
      %v1387 = vpop.f32.mrb[0].mxu0
      %1388 = vmatprep.mubr.bf16.mxu0 0
      %1389 = vmatmul.mubr.bf16.gmra.mrb[0].mxu0 %v1230
      %v1390 = vpop.f32.mrb[0].mxu0
      %v1391 = vadd.f32 0.0, %v1390
      %v1392 = vpop.f32.mrb[0].mxu0
      %v1393 = vpop.f32.mrb[0].mxu0
      %v1394 = vadd.f32 0.0, %v1393
      %v1395 = vpop.f32.mrb[0].mxu0
      %1396 = vdwg.mxu0
      %v1398 = vsel %vm1183, %v924, 0
      %v1401 = vsel %vm1183, %v925, 0
      %v1404 = vsel %vm1183, %v926, 0
      %v1407 = vsel %vm1183, %v927, 0
      %v1410 = vsel %vm1183, %v928, 0
      %v1413 = vsel %vm1183, %v929, 0
      %v1416 = vsel %vm1183, %v930, 0
      %v1419 = vsel %vm1183, %v931, 0
      %v1422 = vsel %vm1183, %v932, 0
      %v1425 = vsel %vm1183, %v933, 0
      %v1428 = vsel %vm1183, %v934, 0
      %v1431 = vsel %vm1183, %v935, 0
      %v1434 = vsel %vm1183, %v936, 0
      %v1437 = vsel %vm1183, %v937, 0
      %v1440 = vsel %vm1183, %v938, 0
      %v1443 = vsel %vm1183, %v939, 0
      %v1446 = vsel %vm1232, %v940, 0
      %1448 = vmatprep.subr.bf16.mxu0 0
      %1449 = vmatpush1.bf16.msra.mxu0 %v1446
      %1450 = vmatprep.subr.bf16.mxu0 0
      %1451 = vmatpush1.bf16.msra.mxu0 0
      %1452 = vmatprep.subr.bf16.mxu0 0
      %1453 = vmatpush1.bf16.msra.mxu0 0
      %1454 = vmatprep.subr.bf16.mxu0 0
      %1455 = vmatpush1.bf16.msra.mxu0 0
      %1456 = vmatprep.subr.bf16.mxu0 0
      %1457 = vmatpush1.bf16.msra.mxu0 0
      %1458 = vmatprep.subr.bf16.mxu0 0
      %1459 = vmatpush1.bf16.msra.mxu0 0
      %1460 = vmatprep.subr.bf16.mxu0 0
      %1461 = vmatpush1.bf16.msra.mxu0 0
      %1462 = vmatprep.subr.bf16.mxu0 0
      %1463 = vmatpush1.bf16.msra.mxu0 0
      %1464 = vmatprep.subr.bf16.mxu0 0
      %1465 = vmatpush1.bf16.msra.mxu0 0
      %1466 = vmatprep.subr.bf16.mxu0 0
      %1467 = vmatpush1.bf16.msra.mxu0 0
      %1468 = vmatprep.subr.bf16.mxu0 0
      %1469 = vmatpush1.bf16.msra.mxu0 0
      %1470 = vmatprep.subr.bf16.mxu0 0
      %1471 = vmatpush1.bf16.msra.mxu0 0
      %1472 = vmatprep.subr.bf16.mxu0 0
      %1473 = vmatpush1.bf16.msra.mxu0 0
      %1474 = vmatprep.subr.bf16.mxu0 0
      %1475 = vmatpush1.bf16.msra.mxu0 0
      %1476 = vmatprep.subr.bf16.mxu0 0
      %1477 = vmatpush1.bf16.msra.mxu0 0
      %1478 = vmatprep.subr.bf16.mxu0 0
      %1479 = vmatpush1.bf16.msra.mxu0 0
      %1480 = vmatprep.mubr.bf16.mxu0 0
      %1481 = vmatmul.mubr.bf16.gmra.mrb[0].mxu0 %v1398
      %v1482 = vpop.f32.mrb[0].mxu0
      %v1483 = vadd.f32 %v1271, %v1482
      %v1484 = vpop.f32.mrb[0].mxu0
      %v1485 = vpop.f32.mrb[0].mxu0
      %v1486 = vadd.f32 %v1274, %v1485
      %v1487 = vpop.f32.mrb[0].mxu0
      %1488 = vmatprep.mubr.bf16.mxu0 0
      %1489 = vmatmul.mubr.bf16.gmra.mrb[0].mxu0 %v1401
      %v1490 = vpop.f32.mrb[0].mxu0
      %v1491 = vadd.f32 %v1279, %v1490
      %v1492 = vpop.f32.mrb[0].mxu0
      %v1493 = vpop.f32.mrb[0].mxu0
      %v1494 = vadd.f32 %v1282, %v1493
      %v1495 = vpop.f32.mrb[0].mxu0
      %1496 = vmatprep.mubr.bf16.mxu0 0
      %1497 = vmatmul.mubr.bf16.gmra.mrb[0].mxu0 %v1404
      %v1498 = vpop.f32.mrb[0].mxu0
      %v1499 = vadd.f32 %v1287, %v1498
      %v1500 = vpop.f32.mrb[0].mxu0
      %v1501 = vpop.f32.mrb[0].mxu0
      %v1502 = vadd.f32 %v1290, %v1501
      %v1503 = vpop.f32.mrb[0].mxu0
      %1504 = vmatprep.mubr.bf16.mxu0 0
      %1505 = vmatmul.mubr.bf16.gmra.mrb[0].mxu0 %v1407
      %v1506 = vpop.f32.mrb[0].mxu0
      %v1507 = vadd.f32 %v1295, %v1506
      %v1508 = vpop.f32.mrb[0].mxu0
      %v1509 = vpop.f32.mrb[0].mxu0
      %v1510 = vadd.f32 %v1298, %v1509
      %v1511 = vpop.f32.mrb[0].mxu0
      %1512 = vmatprep.mubr.bf16.mxu0 0
      %1513 = vmatmul.mubr.bf16.gmra.mrb[0].mxu0 %v1410
      %v1514 = vpop.f32.mrb[0].mxu0
      %v1515 = vadd.f32 %v1303, %v1514
      %v1516 = vpop.f32.mrb[0].mxu0
      %v1517 = vpop.f32.mrb[0].mxu0
      %v1518 = vadd.f32 %v1306, %v1517
      %v1519 = vpop.f32.mrb[0].mxu0
      %1520 = vmatprep.mubr.bf16.mxu0 0
      %1521 = vmatmul.mubr.bf16.gmra.mrb[0].mxu0 %v1413
      %v1522 = vpop.f32.mrb[0].mxu0
      %v1523 = vadd.f32 %v1311, %v1522
      %v1524 = vpop.f32.mrb[0].mxu0
      %v1525 = vpop.f32.mrb[0].mxu0
      %v1526 = vadd.f32 %v1314, %v1525
      %v1527 = vpop.f32.mrb[0].mxu0
      %1528 = vmatprep.mubr.bf16.mxu0 0
      %1529 = vmatmul.mubr.bf16.gmra.mrb[0].mxu0 %v1416
      %v1530 = vpop.f32.mrb[0].mxu0
      %v1531 = vadd.f32 %v1319, %v1530
      %v1532 = vpop.f32.mrb[0].mxu0
      %v1533 = vpop.f32.mrb[0].mxu0
      %v1534 = vadd.f32 %v1322, %v1533
      %v1535 = vpop.f32.mrb[0].mxu0
      %1536 = vmatprep.mubr.bf16.mxu0 0
      %1537 = vmatmul.mubr.bf16.gmra.mrb[0].mxu0 %v1419
      %v1538 = vpop.f32.mrb[0].mxu0
      %v1539 = vadd.f32 %v1327, %v1538
      %v1540 = vpop.f32.mrb[0].mxu0
      %v1541 = vpop.f32.mrb[0].mxu0
      %v1542 = vadd.f32 %v1330, %v1541
      %v1543 = vpop.f32.mrb[0].mxu0
      %1544 = vmatprep.mubr.bf16.mxu0 0
      %1545 = vmatmul.mubr.bf16.gmra.mrb[0].mxu0 %v1422
      %v1546 = vpop.f32.mrb[0].mxu0
      %v1547 = vadd.f32 %v1335, %v1546
      %v1548 = vpop.f32.mrb[0].mxu0
      %v1549 = vpop.f32.mrb[0].mxu0
      %v1550 = vadd.f32 %v1338, %v1549
      %v1551 = vpop.f32.mrb[0].mxu0
      %1552 = vmatprep.mubr.bf16.mxu0 0
      %1553 = vmatmul.mubr.bf16.gmra.mrb[0].mxu0 %v1425
      %v1554 = vpop.f32.mrb[0].mxu0
      %v1555 = vadd.f32 %v1343, %v1554
      %v1556 = vpop.f32.mrb[0].mxu0
      %v1557 = vpop.f32.mrb[0].mxu0
      %v1558 = vadd.f32 %v1346, %v1557
      %v1559 = vpop.f32.mrb[0].mxu0
      %1560 = vmatprep.mubr.bf16.mxu0 0
      %1561 = vmatmul.mubr.bf16.gmra.mrb[0].mxu0 %v1428
      %v1562 = vpop.f32.mrb[0].mxu0
      %v1563 = vadd.f32 %v1351, %v1562
      %v1564 = vpop.f32.mrb[0].mxu0
      %v1565 = vpop.f32.mrb[0].mxu0
      %v1566 = vadd.f32 %v1354, %v1565
      %v1567 = vpop.f32.mrb[0].mxu0
      %1568 = vmatprep.mubr.bf16.mxu0 0
      %1569 = vmatmul.mubr.bf16.gmra.mrb[0].mxu0 %v1431
      %v1570 = vpop.f32.mrb[0].mxu0
      %v1571 = vadd.f32 %v1359, %v1570
      %v1572 = vpop.f32.mrb[0].mxu0
      %v1573 = vpop.f32.mrb[0].mxu0
      %v1574 = vadd.f32 %v1362, %v1573
      %v1575 = vpop.f32.mrb[0].mxu0
      %1576 = vmatprep.mubr.bf16.mxu0 0
      %1577 = vmatmul.mubr.bf16.gmra.mrb[0].mxu0 %v1434
      %v1578 = vpop.f32.mrb[0].mxu0
      %v1579 = vadd.f32 %v1367, %v1578
      %v1580 = vpop.f32.mrb[0].mxu0
      %v1581 = vpop.f32.mrb[0].mxu0
      %v1582 = vadd.f32 %v1370, %v1581
      %v1583 = vpop.f32.mrb[0].mxu0
      %1584 = vmatprep.mubr.bf16.mxu0 0
      %1585 = vmatmul.mubr.bf16.gmra.mrb[0].mxu0 %v1437
      %v1586 = vpop.f32.mrb[0].mxu0
      %v1587 = vadd.f32 %v1375, %v1586
      %v1588 = vpop.f32.mrb[0].mxu0
      %v1589 = vpop.f32.mrb[0].mxu0
      %v1590 = vadd.f32 %v1378, %v1589
      %v1591 = vpop.f32.mrb[0].mxu0
      %1592 = vmatprep.mubr.bf16.mxu0 0
      %1593 = vmatmul.mubr.bf16.gmra.mrb[0].mxu0 %v1440
      %v1594 = vpop.f32.mrb[0].mxu0
      %v1595 = vadd.f32 %v1383, %v1594
      %v1596 = vpop.f32.mrb[0].mxu0
      %v1597 = vpop.f32.mrb[0].mxu0
      %v1598 = vadd.f32 %v1386, %v1597
      %v1599 = vpop.f32.mrb[0].mxu0
      %1600 = vmatprep.mubr.bf16.mxu0 0
      %1601 = vmatmul.mubr.bf16.gmra.mrb[0].mxu0 %v1443
      %v1602 = vpop.f32.mrb[0].mxu0
      %v1603 = vadd.f32 %v1391, %v1602
      %v1604 = vpop.f32.mrb[0].mxu0
      %v1605 = vpop.f32.mrb[0].mxu0
      %v1606 = vadd.f32 %v1394, %v1605
      %v1607 = vpop.f32.mrb[0].mxu0
      %1608 = vdwg.mxu0
      %v1609 = vadd.s32 %v313, 1
      %v1610 = vadd.s32 %v314, 1
      %v1611 = vadd.s32 %v315, 1
      %v1612 = vadd.s32 %v316, 1
      %v1613 = vadd.s32 %v317, 1
      %v1614 = vadd.s32 %v318, 1
      %v1615 = vadd.s32 %v319, 1
      %v1616 = vadd.s32 %v320, 1
      %v1617 = vadd.s32 %v321, 1
      %v1618 = vadd.s32 %v322, 1
      %v1619 = vadd.s32 %v323, 1
      %v1620 = vadd.s32 %v324, 1
      %v1621 = vadd.s32 %v325, 1
      %v1622 = vadd.s32 %v326, 1
      %v1623 = vadd.s32 %v327, 1
      %v1624 = vadd.s32 %v328, 1
      %v1625 = vadd.s32 %v329, 1
      %v1626 = vadd.s32 %v330, 1
      %v1627 = vadd.s32 %v331, 1
      %v1628 = vadd.s32 %v332, 1
      %v1629 = vadd.s32 %v333, 1
      %v1630 = vadd.s32 %v334, 1
      %v1631 = vadd.s32 %v335, 1
      %v1632 = vadd.s32 %v336, 1
      %v1633 = vadd.s32 %v337, 1
      %v1634 = vadd.s32 %v338, 1
      %v1635 = vadd.s32 %v339, 1
      %v1636 = vadd.s32 %v340, 1
      %v1637 = vadd.s32 %v341, 1
      %v1638 = vadd.s32 %v342, 1
      %v1639 = vadd.s32 %v343, 1
      %v1640 = vadd.s32 %v344, 1
      %vm1641 = vcmp.ge.s32.totalorder %v1609, 0
      %vm1642 = vcmp.ge.s32.totalorder %v1610, 0
      %vm1643 = vcmp.ge.s32.totalorder %v1611, 0
      %vm1644 = vcmp.ge.s32.totalorder %v1612, 0
      %vm1645 = vcmp.ge.s32.totalorder %v1613, 0
      %vm1646 = vcmp.ge.s32.totalorder %v1614, 0
      %vm1647 = vcmp.ge.s32.totalorder %v1615, 0
      %vm1648 = vcmp.ge.s32.totalorder %v1616, 0
      %vm1649 = vcmp.ge.s32.totalorder %v1617, 0
      %vm1650 = vcmp.ge.s32.totalorder %v1618, 0
      %vm1651 = vcmp.ge.s32.totalorder %v1619, 0
      %vm1652 = vcmp.ge.s32.totalorder %v1620, 0
      %vm1653 = vcmp.ge.s32.totalorder %v1621, 0
      %vm1654 = vcmp.ge.s32.totalorder %v1622, 0
      %vm1655 = vcmp.ge.s32.totalorder %v1623, 0
      %vm1656 = vcmp.ge.s32.totalorder %v1624, 0
      %vm1657 = vcmp.ge.s32.totalorder %v1625, 0
      %vm1658 = vcmp.ge.s32.totalorder %v1626, 0
      %vm1659 = vcmp.ge.s32.totalorder %v1627, 0
      %vm1660 = vcmp.ge.s32.totalorder %v1628, 0
      %vm1661 = vcmp.ge.s32.totalorder %v1629, 0
      %vm1662 = vcmp.ge.s32.totalorder %v1630, 0
      %vm1663 = vcmp.ge.s32.totalorder %v1631, 0
      %vm1664 = vcmp.ge.s32.totalorder %v1632, 0
      %vm1665 = vcmp.ge.s32.totalorder %v1633, 0
      %vm1666 = vcmp.ge.s32.totalorder %v1634, 0
      %vm1667 = vcmp.ge.s32.totalorder %v1635, 0
      %vm1668 = vcmp.ge.s32.totalorder %v1636, 0
      %vm1669 = vcmp.ge.s32.totalorder %v1637, 0
      %vm1670 = vcmp.ge.s32.totalorder %v1638, 0
      %vm1671 = vcmp.ge.s32.totalorder %v1639, 0
      %vm1672 = vcmp.ge.s32.totalorder %v1640, 0
      %vm1673 = vmand %vm505, %vm1641
      %vm1674 = vmand %vm506, %vm1642
      %vm1675 = vmand %vm507, %vm1643
      %vm1676 = vmand %vm508, %vm1644
      %vm1677 = vmand %vm509, %vm1645
      %vm1678 = vmand %vm510, %vm1646
      %vm1679 = vmand %vm511, %vm1647
      %vm1680 = vmand %vm512, %vm1648
      %vm1681 = vmand %vm513, %vm1649
      %vm1682 = vmand %vm514, %vm1650
      %vm1683 = vmand %vm515, %vm1651
      %vm1684 = vmand %vm516, %vm1652
      %vm1685 = vmand %vm517, %vm1653
      %vm1686 = vmand %vm518, %vm1654
      %vm1687 = vmand %vm519, %vm1655
      %vm1688 = vmand %vm520, %vm1656
      %vm1689 = vmand %vm521, %vm1657
      %vm1690 = vmand %vm522, %vm1658
      %vm1691 = vmand %vm523, %vm1659
      %vm1692 = vmand %vm524, %vm1660
      %vm1693 = vmand %vm525, %vm1661
      %vm1694 = vmand %vm526, %vm1662
      %vm1695 = vmand %vm527, %vm1663
      %vm1696 = vmand %vm528, %vm1664
      %vm1697 = vmand %vm529, %vm1665
      %vm1698 = vmand %vm530, %vm1666
      %vm1699 = vmand %vm531, %vm1667
      %vm1700 = vmand %vm532, %vm1668
      %vm1701 = vmand %vm533, %vm1669
      %vm1702 = vmand %vm534, %vm1670
      %vm1703 = vmand %vm535, %vm1671
      %vm1704 = vmand %vm536, %vm1672
      %vm1705 = vcmp.lt.s32.totalorder %v1609, 16
      %vm1706 = vcmp.lt.s32.totalorder %v1610, 16
      %vm1707 = vcmp.lt.s32.totalorder %v1611, 16
      %vm1708 = vcmp.lt.s32.totalorder %v1612, 16
      %vm1709 = vcmp.lt.s32.totalorder %v1613, 16
      %vm1710 = vcmp.lt.s32.totalorder %v1614, 16
      %vm1711 = vcmp.lt.s32.totalorder %v1615, 16
      %vm1712 = vcmp.lt.s32.totalorder %v1616, 16
      %vm1713 = vcmp.lt.s32.totalorder %v1617, 16
      %vm1714 = vcmp.lt.s32.totalorder %v1618, 16
      %vm1715 = vcmp.lt.s32.totalorder %v1619, 16
      %vm1716 = vcmp.lt.s32.totalorder %v1620, 16
      %vm1717 = vcmp.lt.s32.totalorder %v1621, 16
      %vm1718 = vcmp.lt.s32.totalorder %v1622, 16
      %vm1719 = vcmp.lt.s32.totalorder %v1623, 16
      %vm1720 = vcmp.lt.s32.totalorder %v1624, 16
      %vm1721 = vcmp.lt.s32.totalorder %v1625, 16
      %vm1722 = vcmp.lt.s32.totalorder %v1626, 16
      %vm1723 = vcmp.lt.s32.totalorder %v1627, 16
      %vm1724 = vcmp.lt.s32.totalorder %v1628, 16
      %vm1725 = vcmp.lt.s32.totalorder %v1629, 16
      %vm1726 = vcmp.lt.s32.totalorder %v1630, 16
      %vm1727 = vcmp.lt.s32.totalorder %v1631, 16
      %vm1728 = vcmp.lt.s32.totalorder %v1632, 16
      %vm1729 = vcmp.lt.s32.totalorder %v1633, 16
      %vm1730 = vcmp.lt.s32.totalorder %v1634, 16
      %vm1731 = vcmp.lt.s32.totalorder %v1635, 16
      %vm1732 = vcmp.lt.s32.totalorder %v1636, 16
      %vm1733 = vcmp.lt.s32.totalorder %v1637, 16
      %vm1734 = vcmp.lt.s32.totalorder %v1638, 16
      %vm1735 = vcmp.lt.s32.totalorder %v1639, 16
      %vm1736 = vcmp.lt.s32.totalorder %v1640, 16
      %vm1737 = vmand %vm1673, %vm1705
      %vm1738 = vmand %vm1674, %vm1706
      %vm1739 = vmand %vm1675, %vm1707
      %vm1740 = vmand %vm1676, %vm1708
      %vm1741 = vmand %vm1677, %vm1709
      %vm1742 = vmand %vm1678, %vm1710
      %vm1743 = vmand %vm1679, %vm1711
      %vm1744 = vmand %vm1680, %vm1712
      %vm1745 = vmand %vm1681, %vm1713
      %vm1746 = vmand %vm1682, %vm1714
      %vm1747 = vmand %vm1683, %vm1715
      %vm1748 = vmand %vm1684, %vm1716
      %vm1749 = vmand %vm1685, %vm1717
      %vm1750 = vmand %vm1686, %vm1718
      %vm1751 = vmand %vm1687, %vm1719
      %vm1752 = vmand %vm1688, %vm1720
      %vm1753 = vmand %vm1689, %vm1721
      %vm1754 = vmand %vm1690, %vm1722
      %vm1755 = vmand %vm1691, %vm1723
      %vm1756 = vmand %vm1692, %vm1724
      %vm1757 = vmand %vm1693, %vm1725
      %vm1758 = vmand %vm1694, %vm1726
      %vm1759 = vmand %vm1695, %vm1727
      %vm1760 = vmand %vm1696, %vm1728
      %vm1761 = vmand %vm1697, %vm1729
      %vm1762 = vmand %vm1698, %vm1730
      %vm1763 = vmand %vm1699, %vm1731
      %vm1764 = vmand %vm1700, %vm1732
      %vm1765 = vmand %vm1701, %vm1733
      %vm1766 = vmand %vm1702, %vm1734
      %vm1767 = vmand %vm1703, %vm1735
      %vm1768 = vmand %vm1704, %vm1736
      %v1769 = vsel %vm1737, 1, 0
      %v1770 = vsel %vm1738, 1, 0
      %v1771 = vsel %vm1739, 1, 0
      %v1772 = vsel %vm1740, 1, 0
      %v1773 = vsel %vm1741, 1, 0
      %v1774 = vsel %vm1742, 1, 0
      %v1775 = vsel %vm1743, 1, 0
      %v1776 = vsel %vm1744, 1, 0
      %v1777 = vsel %vm1745, 1, 0
      %v1778 = vsel %vm1746, 1, 0
      %v1779 = vsel %vm1747, 1, 0
      %v1780 = vsel %vm1748, 1, 0
      %v1781 = vsel %vm1749, 1, 0
      %v1782 = vsel %vm1750, 1, 0
      %v1783 = vsel %vm1751, 1, 0
      %v1784 = vsel %vm1752, 1, 0
      %v1785 = vsel %vm1753, 1, 0
      %v1786 = vsel %vm1754, 1, 0
      %v1787 = vsel %vm1755, 1, 0
      %v1788 = vsel %vm1756, 1, 0
      %v1789 = vsel %vm1757, 1, 0
      %v1790 = vsel %vm1758, 1, 0
      %v1791 = vsel %vm1759, 1, 0
      %v1792 = vsel %vm1760, 1, 0
      %v1793 = vsel %vm1761, 1, 0
      %v1794 = vsel %vm1762, 1, 0
      %v1795 = vsel %vm1763, 1, 0
      %v1796 = vsel %vm1764, 1, 0
      %v1797 = vsel %vm1765, 1, 0
      %v1798 = vsel %vm1766, 1, 0
      %v1799 = vsel %vm1767, 1, 0
      %v1800 = vsel %vm1768, 1, 0
      %vm1801 = vcmp.eq.s32.totalorder %v1769, 1
      %vm1802 = vcmp.eq.s32.totalorder %v1770, 1
      %vm1803 = vcmp.eq.s32.totalorder %v1771, 1
      %vm1804 = vcmp.eq.s32.totalorder %v1772, 1
      %vm1805 = vcmp.eq.s32.totalorder %v1773, 1
      %vm1806 = vcmp.eq.s32.totalorder %v1774, 1
      %vm1807 = vcmp.eq.s32.totalorder %v1775, 1
      %vm1808 = vcmp.eq.s32.totalorder %v1776, 1
      %vm1809 = vcmp.eq.s32.totalorder %v1777, 1
      %vm1810 = vcmp.eq.s32.totalorder %v1778, 1
      %vm1811 = vcmp.eq.s32.totalorder %v1779, 1
      %vm1812 = vcmp.eq.s32.totalorder %v1780, 1
      %vm1813 = vcmp.eq.s32.totalorder %v1781, 1
      %vm1814 = vcmp.eq.s32.totalorder %v1782, 1
      %vm1815 = vcmp.eq.s32.totalorder %v1783, 1
      %vm1816 = vcmp.eq.s32.totalorder %v1784, 1
      %vm1817 = vcmp.eq.s32.totalorder %v1785, 1
      %vm1818 = vcmp.eq.s32.totalorder %v1786, 1
      %vm1819 = vcmp.eq.s32.totalorder %v1787, 1
      %vm1820 = vcmp.eq.s32.totalorder %v1788, 1
      %vm1821 = vcmp.eq.s32.totalorder %v1789, 1
      %vm1822 = vcmp.eq.s32.totalorder %v1790, 1
      %vm1823 = vcmp.eq.s32.totalorder %v1791, 1
      %vm1824 = vcmp.eq.s32.totalorder %v1792, 1
      %vm1825 = vcmp.eq.s32.totalorder %v1793, 1
      %vm1826 = vcmp.eq.s32.totalorder %v1794, 1
      %vm1827 = vcmp.eq.s32.totalorder %v1795, 1
      %vm1828 = vcmp.eq.s32.totalorder %v1796, 1
      %vm1829 = vcmp.eq.s32.totalorder %v1797, 1
      %vm1830 = vcmp.eq.s32.totalorder %v1798, 1
      %vm1831 = vcmp.eq.s32.totalorder %v1799, 1
      %vm1832 = vcmp.eq.s32.totalorder %v1800, 1
      %vm1834 = vcmask 1046528
      %v1835 = vrot.slane %v210, 1
      %v1836 = vrot.slane %v211, 1
      %v1837 = vsel %vm1834, %v1835, %v1836
      %v1838 = vrot.slane %v212, 1
      %v1839 = vsel %vm1834, %v1836, %v1838
      %v1840 = vrot.slane %v213, 1
      %v1841 = vsel %vm1834, %v1838, %v1840
      %v1842 = vrot.slane %v214, 1
      %v1843 = vsel %vm1834, %v1840, %v1842
      %v1844 = vrot.slane %v215, 1
      %v1845 = vsel %vm1834, %v1842, %v1844
      %v1846 = vrot.slane %v216, 1
      %v1847 = vsel %vm1834, %v1844, %v1846
      %v1848 = vrot.slane %v217, 1
      %v1849 = vsel %vm1834, %v1846, %v1848
      %v1850 = vrot.slane %v218, 1
      %v1851 = vsel %vm1834, %v1848, %v1850
      %v1852 = vrot.slane %v219, 1
      %v1853 = vsel %vm1834, %v1850, %v1852
      %v1854 = vrot.slane %v220, 1
      %v1855 = vsel %vm1834, %v1852, %v1854
      %v1856 = vrot.slane %v221, 1
      %v1857 = vsel %vm1834, %v1854, %v1856
      %v1858 = vrot.slane %v222, 1
      %v1859 = vsel %vm1834, %v1856, %v1858
      %v1860 = vrot.slane %v223, 1
      %v1861 = vsel %vm1834, %v1858, %v1860
      %v1862 = vrot.slane %v224, 1
      %v1863 = vsel %vm1834, %v1860, %v1862
      %v1864 = vrot.slane %v225, 1
      %v1865 = vsel %vm1834, %v1862, %v1864
      %v1866 = vrot.slane %v226, 1
      %v1867 = vsel %vm1834, %v1864, %v1866
      %v1868 = vrot.slane %v227, 1
      %v1869 = vsel %vm1834, %v1866, %v1868
      %v1870 = vrot.slane %v228, 1
      %v1871 = vsel %vm1834, %v1868, %v1870
      %v1872 = vrot.slane %v229, 1
      %v1873 = vsel %vm1834, %v1870, %v1872
      %v1874 = vrot.slane %v230, 1
      %v1875 = vsel %vm1834, %v1872, %v1874
      %v1876 = vrot.slane %v231, 1
      %v1877 = vsel %vm1834, %v1874, %v1876
      %v1878 = vrot.slane %v232, 1
      %v1879 = vsel %vm1834, %v1876, %v1878
      %v1880 = vrot.slane %v233, 1
      %v1881 = vsel %vm1834, %v1878, %v1880
      %v1882 = vrot.slane %v234, 1
      %v1883 = vsel %vm1834, %v1880, %v1882
      %v1884 = vrot.slane %v235, 1
      %v1885 = vsel %vm1834, %v1882, %v1884
      %v1886 = vrot.slane %v236, 1
      %v1887 = vsel %vm1834, %v1884, %v1886
      %v1888 = vrot.slane %v237, 1
      %v1889 = vsel %vm1834, %v1886, %v1888
      %v1890 = vrot.slane %v238, 1
      %v1891 = vsel %vm1834, %v1888, %v1890
      %v1892 = vrot.slane %v239, 1
      %v1893 = vsel %vm1834, %v1890, %v1892
      %v1894 = vrot.slane %v240, 1
      %v1895 = vsel %vm1834, %v1892, %v1894
      %v1896 = vrot.slane %v241, 1
      %v1897 = vsel %vm1834, %v1894, %v1896
      %v1898 = vrot.slane %v242, 1
      %v1899 = vsel %vm1834, %v1896, %v1898
      %v1932 = vsel %vm1801, %v1837, 0.0
      %v1933 = vsel %vm1802, %v1839, 0.0
      %v1934 = vsel %vm1803, %v1841, 0.0
      %v1935 = vsel %vm1804, %v1843, 0.0
      %v1936 = vsel %vm1805, %v1845, 0.0
      %v1937 = vsel %vm1806, %v1847, 0.0
      %v1938 = vsel %vm1807, %v1849, 0.0
      %v1939 = vsel %vm1808, %v1851, 0.0
      %v1940 = vsel %vm1809, %v1853, 0.0
      %v1941 = vsel %vm1810, %v1855, 0.0
      %v1942 = vsel %vm1811, %v1857, 0.0
      %v1943 = vsel %vm1812, %v1859, 0.0
      %v1944 = vsel %vm1813, %v1861, 0.0
      %v1945 = vsel %vm1814, %v1863, 0.0
      %v1946 = vsel %vm1815, %v1865, 0.0
      %v1947 = vsel %vm1816, %v1867, 0.0
      %v1948 = vsel %vm1817, %v1869, 0.0
      %v1949 = vsel %vm1818, %v1871, 0.0
      %v1950 = vsel %vm1819, %v1873, 0.0
      %v1951 = vsel %vm1820, %v1875, 0.0
      %v1952 = vsel %vm1821, %v1877, 0.0
      %v1953 = vsel %vm1822, %v1879, 0.0
      %v1954 = vsel %vm1823, %v1881, 0.0
      %v1955 = vsel %vm1824, %v1883, 0.0
      %v1956 = vsel %vm1825, %v1885, 0.0
      %v1957 = vsel %vm1826, %v1887, 0.0
      %v1958 = vsel %vm1827, %v1889, 0.0
      %v1959 = vsel %vm1828, %v1891, 0.0
      %v1960 = vsel %vm1829, %v1893, 0.0
      %v1961 = vsel %vm1830, %v1895, 0.0
      %v1962 = vsel %vm1831, %v1897, 0.0
      %v1963 = vsel %vm1832, %v1899, 0.0
      %v1964 = vpack.c.bf16 %v1933, %v1932
      %v1965 = vpack.c.bf16 %v1935, %v1934
      %v1966 = vpack.c.bf16 %v1937, %v1936
      %v1967 = vpack.c.bf16 %v1939, %v1938
      %v1968 = vpack.c.bf16 %v1941, %v1940
      %v1969 = vpack.c.bf16 %v1943, %v1942
      %v1970 = vpack.c.bf16 %v1945, %v1944
      %v1971 = vpack.c.bf16 %v1947, %v1946
      %v1972 = vpack.c.bf16 %v1949, %v1948
      %v1973 = vpack.c.bf16 %v1951, %v1950
      %v1974 = vpack.c.bf16 %v1953, %v1952
      %v1975 = vpack.c.bf16 %v1955, %v1954
      %v1976 = vpack.c.bf16 %v1957, %v1956
      %v1977 = vpack.c.bf16 %v1959, %v1958
      %v1978 = vpack.c.bf16 %v1961, %v1960
      %v1979 = vpack.c.bf16 %v1963, %v1962
      %s1980 = scalar_lea.vmem %s1, 8
      %v1981 = vld [vmem:[%s1980] sm:$0xf]
      %v1983 = vsel %vm1183, %v1964, 0
      %v1986 = vsel %vm1183, %v1965, 0
      %v1989 = vsel %vm1183, %v1966, 0
      %v1992 = vsel %vm1183, %v1967, 0
      %v1995 = vsel %vm1183, %v1968, 0
      %v1998 = vsel %vm1183, %v1969, 0
      %v2001 = vsel %vm1183, %v1970, 0
      %v2004 = vsel %vm1183, %v1971, 0
      %v2007 = vsel %vm1183, %v1972, 0
      %v2010 = vsel %vm1183, %v1973, 0
      %v2013 = vsel %vm1183, %v1974, 0
      %v2016 = vsel %vm1183, %v1975, 0
      %v2019 = vsel %vm1183, %v1976, 0
      %v2022 = vsel %vm1183, %v1977, 0
      %v2025 = vsel %vm1183, %v1978, 0
      %v2028 = vsel %vm1183, %v1979, 0
      %v2031 = vsel %vm1232, %v1981, 0
      %2033 = vmatprep.subr.bf16.mxu0 0
      %2034 = vmatpush1.bf16.msra.mxu0 %v2031
      %2035 = vmatprep.subr.bf16.mxu0 0
      %2036 = vmatpush1.bf16.msra.mxu0 0
      %2037 = vmatprep.subr.bf16.mxu0 0
      %2038 = vmatpush1.bf16.msra.mxu0 0
      %2039 = vmatprep.subr.bf16.mxu0 0
      %2040 = vmatpush1.bf16.msra.mxu0 0
      %2041 = vmatprep.subr.bf16.mxu0 0
      %2042 = vmatpush1.bf16.msra.mxu0 0
      %2043 = vmatprep.subr.bf16.mxu0 0
      %2044 = vmatpush1.bf16.msra.mxu0 0
      %2045 = vmatprep.subr.bf16.mxu0 0
      %2046 = vmatpush1.bf16.msra.mxu0 0
      %2047 = vmatprep.subr.bf16.mxu0 0
      %2048 = vmatpush1.bf16.msra.mxu0 0
      %2049 = vmatprep.subr.bf16.mxu0 0
      %2050 = vmatpush1.bf16.msra.mxu0 0
      %2051 = vmatprep.subr.bf16.mxu0 0
      %2052 = vmatpush1.bf16.msra.mxu0 0
      %2053 = vmatprep.subr.bf16.mxu0 0
      %2054 = vmatpush1.bf16.msra.mxu0 0
      %2055 = vmatprep.subr.bf16.mxu0 0
      %2056 = vmatpush1.bf16.msra.mxu0 0
      %2057 = vmatprep.subr.bf16.mxu0 0
      %2058 = vmatpush1.bf16.msra.mxu0 0
      %2059 = vmatprep.subr.bf16.mxu0 0
      %2060 = vmatpush1.bf16.msra.mxu0 0
      %2061 = vmatprep.subr.bf16.mxu0 0
      %2062 = vmatpush1.bf16.msra.mxu0 0
      %2063 = vmatprep.subr.bf16.mxu0 0
      %2064 = vmatpush1.bf16.msra.mxu0 0
      %2065 = vmatprep.mubr.bf16.mxu0 0
      %2066 = vmatmul.mubr.bf16.gmra.mrb[0].mxu0 %v1983
      %v2067 = vpop.f32.mrb[0].mxu0
      %v2068 = vadd.f32 0.0, %v2067
      %v2069 = vpop.f32.mrb[0].mxu0
      %v2070 = vpop.f32.mrb[0].mxu0
      %v2071 = vadd.f32 0.0, %v2070
      %v2072 = vpop.f32.mrb[0].mxu0
      %2073 = vmatprep.mubr.bf16.mxu0 0
      %2074 = vmatmul.mubr.bf16.gmra.mrb[0].mxu0 %v1986
      %v2075 = vpop.f32.mrb[0].mxu0
      %v2076 = vadd.f32 0.0, %v2075
      %v2077 = vpop.f32.mrb[0].mxu0
      %v2078 = vpop.f32.mrb[0].mxu0
      %v2079 = vadd.f32 0.0, %v2078
      %v2080 = vpop.f32.mrb[0].mxu0
      %2081 = vmatprep.mubr.bf16.mxu0 0
      %2082 = vmatmul.mubr.bf16.gmra.mrb[0].mxu0 %v1989
      %v2083 = vpop.f32.mrb[0].mxu0
      %v2084 = vadd.f32 0.0, %v2083
      %v2085 = vpop.f32.mrb[0].mxu0
      %v2086 = vpop.f32.mrb[0].mxu0
      %v2087 = vadd.f32 0.0, %v2086
      %v2088 = vpop.f32.mrb[0].mxu0
      %2089 = vmatprep.mubr.bf16.mxu0 0
      %2090 = vmatmul.mubr.bf16.gmra.mrb[0].mxu0 %v1992
      %v2091 = vpop.f32.mrb[0].mxu0
      %v2092 = vadd.f32 0.0, %v2091
      %v2093 = vpop.f32.mrb[0].mxu0
      %v2094 = vpop.f32.mrb[0].mxu0
      %v2095 = vadd.f32 0.0, %v2094
      %v2096 = vpop.f32.mrb[0].mxu0
      %2097 = vmatprep.mubr.bf16.mxu0 0
      %2098 = vmatmul.mubr.bf16.gmra.mrb[0].mxu0 %v1995
      %v2099 = vpop.f32.mrb[0].mxu0
      %v2100 = vadd.f32 0.0, %v2099
      %v2101 = vpop.f32.mrb[0].mxu0
      %v2102 = vpop.f32.mrb[0].mxu0
      %v2103 = vadd.f32 0.0, %v2102
      %v2104 = vpop.f32.mrb[0].mxu0
      %2105 = vmatprep.mubr.bf16.mxu0 0
      %2106 = vmatmul.mubr.bf16.gmra.mrb[0].mxu0 %v1998
      %v2107 = vpop.f32.mrb[0].mxu0
      %v2108 = vadd.f32 0.0, %v2107
      %v2109 = vpop.f32.mrb[0].mxu0
      %v2110 = vpop.f32.mrb[0].mxu0
      %v2111 = vadd.f32 0.0, %v2110
      %v2112 = vpop.f32.mrb[0].mxu0
      %2113 = vmatprep.mubr.bf16.mxu0 0
      %2114 = vmatmul.mubr.bf16.gmra.mrb[0].mxu0 %v2001
      %v2115 = vpop.f32.mrb[0].mxu0
      %v2116 = vadd.f32 0.0, %v2115
      %v2117 = vpop.f32.mrb[0].mxu0
      %v2118 = vpop.f32.mrb[0].mxu0
      %v2119 = vadd.f32 0.0, %v2118
      %v2120 = vpop.f32.mrb[0].mxu0
      %2121 = vmatprep.mubr.bf16.mxu0 0
      %2122 = vmatmul.mubr.bf16.gmra.mrb[0].mxu0 %v2004
      %v2123 = vpop.f32.mrb[0].mxu0
      %v2124 = vadd.f32 0.0, %v2123
      %v2125 = vpop.f32.mrb[0].mxu0
      %v2126 = vpop.f32.mrb[0].mxu0
      %v2127 = vadd.f32 0.0, %v2126
      %v2128 = vpop.f32.mrb[0].mxu0
      %2129 = vmatprep.mubr.bf16.mxu0 0
      %2130 = vmatmul.mubr.bf16.gmra.mrb[0].mxu0 %v2007
      %v2131 = vpop.f32.mrb[0].mxu0
      %v2132 = vadd.f32 0.0, %v2131
      %v2133 = vpop.f32.mrb[0].mxu0
      %v2134 = vpop.f32.mrb[0].mxu0
      %v2135 = vadd.f32 0.0, %v2134
      %v2136 = vpop.f32.mrb[0].mxu0
      %2137 = vmatprep.mubr.bf16.mxu0 0
      %2138 = vmatmul.mubr.bf16.gmra.mrb[0].mxu0 %v2010
      %v2139 = vpop.f32.mrb[0].mxu0
      %v2140 = vadd.f32 0.0, %v2139
      %v2141 = vpop.f32.mrb[0].mxu0
      %v2142 = vpop.f32.mrb[0].mxu0
      %v2143 = vadd.f32 0.0, %v2142
      %v2144 = vpop.f32.mrb[0].mxu0
      %2145 = vmatprep.mubr.bf16.mxu0 0
      %2146 = vmatmul.mubr.bf16.gmra.mrb[0].mxu0 %v2013
      %v2147 = vpop.f32.mrb[0].mxu0
      %v2148 = vadd.f32 0.0, %v2147
      %v2149 = vpop.f32.mrb[0].mxu0
      %v2150 = vpop.f32.mrb[0].mxu0
      %v2151 = vadd.f32 0.0, %v2150
      %v2152 = vpop.f32.mrb[0].mxu0
      %2153 = vmatprep.mubr.bf16.mxu0 0
      %2154 = vmatmul.mubr.bf16.gmra.mrb[0].mxu0 %v2016
      %v2155 = vpop.f32.mrb[0].mxu0
      %v2156 = vadd.f32 0.0, %v2155
      %v2157 = vpop.f32.mrb[0].mxu0
      %v2158 = vpop.f32.mrb[0].mxu0
      %v2159 = vadd.f32 0.0, %v2158
      %v2160 = vpop.f32.mrb[0].mxu0
      %2161 = vmatprep.mubr.bf16.mxu0 0
      %2162 = vmatmul.mubr.bf16.gmra.mrb[0].mxu0 %v2019
      %v2163 = vpop.f32.mrb[0].mxu0
      %v2164 = vadd.f32 0.0, %v2163
      %v2165 = vpop.f32.mrb[0].mxu0
      %v2166 = vpop.f32.mrb[0].mxu0
      %v2167 = vadd.f32 0.0, %v2166
      %v2168 = vpop.f32.mrb[0].mxu0
      %2169 = vmatprep.mubr.bf16.mxu0 0
      %2170 = vmatmul.mubr.bf16.gmra.mrb[0].mxu0 %v2022
      %v2171 = vpop.f32.mrb[0].mxu0
      %v2172 = vadd.f32 0.0, %v2171
      %v2173 = vpop.f32.mrb[0].mxu0
      %v2174 = vpop.f32.mrb[0].mxu0
      %v2175 = vadd.f32 0.0, %v2174
      %v2176 = vpop.f32.mrb[0].mxu0
      %2177 = vmatprep.mubr.bf16.mxu0 0
      %2178 = vmatmul.mubr.bf16.gmra.mrb[0].mxu0 %v2025
      %v2179 = vpop.f32.mrb[0].mxu0
      %v2180 = vadd.f32 0.0, %v2179
      %v2181 = vpop.f32.mrb[0].mxu0
      %v2182 = vpop.f32.mrb[0].mxu0
      %v2183 = vadd.f32 0.0, %v2182
      %v2184 = vpop.f32.mrb[0].mxu0
      %2185 = vmatprep.mubr.bf16.mxu0 0
      %2186 = vmatmul.mubr.bf16.gmra.mrb[0].mxu0 %v2028
      %v2187 = vpop.f32.mrb[0].mxu0
      %v2188 = vadd.f32 0.0, %v2187
      %v2189 = vpop.f32.mrb[0].mxu0
      %v2190 = vpop.f32.mrb[0].mxu0
      %v2191 = vadd.f32 0.0, %v2190
      %v2192 = vpop.f32.mrb[0].mxu0
      %2193 = vdwg.mxu0
      %v2194 = vadd.f32 %v1483, %v2068
      %v2195 = vadd.f32 %v1486, %v2071
      %v2196 = vadd.f32 %v1491, %v2076
      %v2197 = vadd.f32 %v1494, %v2079
      %v2198 = vadd.f32 %v1499, %v2084
      %v2199 = vadd.f32 %v1502, %v2087
      %v2200 = vadd.f32 %v1507, %v2092
      %v2201 = vadd.f32 %v1510, %v2095
      %v2202 = vadd.f32 %v1515, %v2100
      %v2203 = vadd.f32 %v1518, %v2103
      %v2204 = vadd.f32 %v1523, %v2108
      %v2205 = vadd.f32 %v1526, %v2111
      %v2206 = vadd.f32 %v1531, %v2116
      %v2207 = vadd.f32 %v1534, %v2119
      %v2208 = vadd.f32 %v1539, %v2124
      %v2209 = vadd.f32 %v1542, %v2127
      %v2210 = vadd.f32 %v1547, %v2132
      %v2211 = vadd.f32 %v1550, %v2135
      %v2212 = vadd.f32 %v1555, %v2140
      %v2213 = vadd.f32 %v1558, %v2143
      %v2214 = vadd.f32 %v1563, %v2148
      %v2215 = vadd.f32 %v1566, %v2151
      %v2216 = vadd.f32 %v1571, %v2156
      %v2217 = vadd.f32 %v1574, %v2159
      %v2218 = vadd.f32 %v1579, %v2164
      %v2219 = vadd.f32 %v1582, %v2167
      %v2220 = vadd.f32 %v1587, %v2172
      %v2221 = vadd.f32 %v1590, %v2175
      %v2222 = vadd.f32 %v1595, %v2180
      %v2223 = vadd.f32 %v1598, %v2183
      %v2224 = vadd.f32 %v1603, %v2188
      %v2225 = vadd.f32 %v1606, %v2191
      %vm2226 = vcmp.ge.s32.totalorder %v377, 0
      %vm2227 = vcmp.ge.s32.totalorder %v378, 0
      %vm2228 = vcmp.ge.s32.totalorder %v379, 0
      %vm2229 = vcmp.ge.s32.totalorder %v380, 0
      %vm2230 = vcmp.ge.s32.totalorder %v381, 0
      %vm2231 = vcmp.ge.s32.totalorder %v382, 0
      %vm2232 = vcmp.ge.s32.totalorder %v383, 0
      %vm2233 = vcmp.ge.s32.totalorder %v384, 0
      %vm2234 = vcmp.ge.s32.totalorder %v385, 0
      %vm2235 = vcmp.ge.s32.totalorder %v386, 0
      %vm2236 = vcmp.ge.s32.totalorder %v387, 0
      %vm2237 = vcmp.ge.s32.totalorder %v388, 0
      %vm2238 = vcmp.ge.s32.totalorder %v389, 0
      %vm2239 = vcmp.ge.s32.totalorder %v390, 0
      %vm2240 = vcmp.ge.s32.totalorder %v391, 0
      %vm2241 = vcmp.ge.s32.totalorder %v392, 0
      %vm2242 = vcmp.ge.s32.totalorder %v393, 0
      %vm2243 = vcmp.ge.s32.totalorder %v394, 0
      %vm2244 = vcmp.ge.s32.totalorder %v395, 0
      %vm2245 = vcmp.ge.s32.totalorder %v396, 0
      %vm2246 = vcmp.ge.s32.totalorder %v397, 0
      %vm2247 = vcmp.ge.s32.totalorder %v398, 0
      %vm2248 = vcmp.ge.s32.totalorder %v399, 0
      %vm2249 = vcmp.ge.s32.totalorder %v400, 0
      %vm2250 = vcmp.ge.s32.totalorder %v401, 0
      %vm2251 = vcmp.ge.s32.totalorder %v402, 0
      %vm2252 = vcmp.ge.s32.totalorder %v403, 0
      %vm2253 = vcmp.ge.s32.totalorder %v404, 0
      %vm2254 = vcmp.ge.s32.totalorder %v405, 0
      %vm2255 = vcmp.ge.s32.totalorder %v406, 0
      %vm2256 = vcmp.ge.s32.totalorder %v407, 0
      %vm2257 = vcmp.ge.s32.totalorder %v408, 0
      %vm2258 = vcmp.lt.s32.totalorder %v377, 16
      %vm2259 = vcmp.lt.s32.totalorder %v378, 16
      %vm2260 = vcmp.lt.s32.totalorder %v379, 16
      %vm2261 = vcmp.lt.s32.totalorder %v380, 16
      %vm2262 = vcmp.lt.s32.totalorder %v381, 16
      %vm2263 = vcmp.lt.s32.totalorder %v382, 16
      %vm2264 = vcmp.lt.s32.totalorder %v383, 16
      %vm2265 = vcmp.lt.s32.totalorder %v384, 16
      %vm2266 = vcmp.lt.s32.totalorder %v385, 16
      %vm2267 = vcmp.lt.s32.totalorder %v386, 16
      %vm2268 = vcmp.lt.s32.totalorder %v387, 16
      %vm2269 = vcmp.lt.s32.totalorder %v388, 16
      %vm2270 = vcmp.lt.s32.totalorder %v389, 16
      %vm2271 = vcmp.lt.s32.totalorder %v390, 16
      %vm2272 = vcmp.lt.s32.totalorder %v391, 16
      %vm2273 = vcmp.lt.s32.totalorder %v392, 16
      %vm2274 = vcmp.lt.s32.totalorder %v393, 16
      %vm2275 = vcmp.lt.s32.totalorder %v394, 16
      %vm2276 = vcmp.lt.s32.totalorder %v395, 16
      %vm2277 = vcmp.lt.s32.totalorder %v396, 16
      %vm2278 = vcmp.lt.s32.totalorder %v397, 16
      %vm2279 = vcmp.lt.s32.totalorder %v398, 16
      %vm2280 = vcmp.lt.s32.totalorder %v399, 16
      %vm2281 = vcmp.lt.s32.totalorder %v400, 16
      %vm2282 = vcmp.lt.s32.totalorder %v401, 16
      %vm2283 = vcmp.lt.s32.totalorder %v402, 16
      %vm2284 = vcmp.lt.s32.totalorder %v403, 16
      %vm2285 = vcmp.lt.s32.totalorder %v404, 16
      %vm2286 = vcmp.lt.s32.totalorder %v405, 16
      %vm2287 = vcmp.lt.s32.totalorder %v406, 16
      %vm2288 = vcmp.lt.s32.totalorder %v407, 16
      %vm2289 = vcmp.lt.s32.totalorder %v408, 16
      %vm2290 = vmand %vm2226, %vm2258
      %vm2291 = vmand %vm2227, %vm2259
      %vm2292 = vmand %vm2228, %vm2260
      %vm2293 = vmand %vm2229, %vm2261
      %vm2294 = vmand %vm2230, %vm2262
      %vm2295 = vmand %vm2231, %vm2263
      %vm2296 = vmand %vm2232, %vm2264
      %vm2297 = vmand %vm2233, %vm2265
      %vm2298 = vmand %vm2234, %vm2266
      %vm2299 = vmand %vm2235, %vm2267
      %vm2300 = vmand %vm2236, %vm2268
      %vm2301 = vmand %vm2237, %vm2269
      %vm2302 = vmand %vm2238, %vm2270
      %vm2303 = vmand %vm2239, %vm2271
      %vm2304 = vmand %vm2240, %vm2272
      %vm2305 = vmand %vm2241, %vm2273
      %vm2306 = vmand %vm2242, %vm2274
      %vm2307 = vmand %vm2243, %vm2275
      %vm2308 = vmand %vm2244, %vm2276
      %vm2309 = vmand %vm2245, %vm2277
      %vm2310 = vmand %vm2246, %vm2278
      %vm2311 = vmand %vm2247, %vm2279
      %vm2312 = vmand %vm2248, %vm2280
      %vm2313 = vmand %vm2249, %vm2281
      %vm2314 = vmand %vm2250, %vm2282
      %vm2315 = vmand %vm2251, %vm2283
      %vm2316 = vmand %vm2252, %vm2284
      %vm2317 = vmand %vm2253, %vm2285
      %vm2318 = vmand %vm2254, %vm2286
      %vm2319 = vmand %vm2255, %vm2287
      %vm2320 = vmand %vm2256, %vm2288
      %vm2321 = vmand %vm2257, %vm2289
      %vm2322 = vmand %vm2290, %vm569
      %vm2323 = vmand %vm2291, %vm570
      %vm2324 = vmand %vm2292, %vm571
      %vm2325 = vmand %vm2293, %vm572
      %vm2326 = vmand %vm2294, %vm573
      %vm2327 = vmand %vm2295, %vm574
      %vm2328 = vmand %vm2296, %vm575
      %vm2329 = vmand %vm2297, %vm576
      %vm2330 = vmand %vm2298, %vm577
      %vm2331 = vmand %vm2299, %vm578
      %vm2332 = vmand %vm2300, %vm579
      %vm2333 = vmand %vm2301, %vm580
      %vm2334 = vmand %vm2302, %vm581
      %vm2335 = vmand %vm2303, %vm582
      %vm2336 = vmand %vm2304, %vm583
      %vm2337 = vmand %vm2305, %vm584
      %vm2338 = vmand %vm2306, %vm585
      %vm2339 = vmand %vm2307, %vm586
      %vm2340 = vmand %vm2308, %vm587
      %vm2341 = vmand %vm2309, %vm588
      %vm2342 = vmand %vm2310, %vm589
      %vm2343 = vmand %vm2311, %vm590
      %vm2344 = vmand %vm2312, %vm591
      %vm2345 = vmand %vm2313, %vm592
      %vm2346 = vmand %vm2314, %vm593
      %vm2347 = vmand %vm2315, %vm594
      %vm2348 = vmand %vm2316, %vm595
      %vm2349 = vmand %vm2317, %vm596
      %vm2350 = vmand %vm2318, %vm597
      %vm2351 = vmand %vm2319, %vm598
      %vm2352 = vmand %vm2320, %vm599
      %vm2353 = vmand %vm2321, %vm600
      %vm2354 = vmand %vm2322, %vm633
      %vm2355 = vmand %vm2323, %vm634
      %vm2356 = vmand %vm2324, %vm635
      %vm2357 = vmand %vm2325, %vm636
      %vm2358 = vmand %vm2326, %vm637
      %vm2359 = vmand %vm2327, %vm638
      %vm2360 = vmand %vm2328, %vm639
      %vm2361 = vmand %vm2329, %vm640
      %vm2362 = vmand %vm2330, %vm641
      %vm2363 = vmand %vm2331, %vm642
      %vm2364 = vmand %vm2332, %vm643
      %vm2365 = vmand %vm2333, %vm644
      %vm2366 = vmand %vm2334, %vm645
      %vm2367 = vmand %vm2335, %vm646
      %vm2368 = vmand %vm2336, %vm647
      %vm2369 = vmand %vm2337, %vm648
      %vm2370 = vmand %vm2338, %vm649
      %vm2371 = vmand %vm2339, %vm650
      %vm2372 = vmand %vm2340, %vm651
      %vm2373 = vmand %vm2341, %vm652
      %vm2374 = vmand %vm2342, %vm653
      %vm2375 = vmand %vm2343, %vm654
      %vm2376 = vmand %vm2344, %vm655
      %vm2377 = vmand %vm2345, %vm656
      %vm2378 = vmand %vm2346, %vm657
      %vm2379 = vmand %vm2347, %vm658
      %vm2380 = vmand %vm2348, %vm659
      %vm2381 = vmand %vm2349, %vm660
      %vm2382 = vmand %vm2350, %vm661
      %vm2383 = vmand %vm2351, %vm662
      %vm2384 = vmand %vm2352, %vm663
      %vm2385 = vmand %vm2353, %vm664
      %v2386 = vsel %vm2354, 1, 0
      %v2387 = vsel %vm2355, 1, 0
      %v2388 = vsel %vm2356, 1, 0
      %v2389 = vsel %vm2357, 1, 0
      %v2390 = vsel %vm2358, 1, 0
      %v2391 = vsel %vm2359, 1, 0
      %v2392 = vsel %vm2360, 1, 0
      %v2393 = vsel %vm2361, 1, 0
      %v2394 = vsel %vm2362, 1, 0
      %v2395 = vsel %vm2363, 1, 0
      %v2396 = vsel %vm2364, 1, 0
      %v2397 = vsel %vm2365, 1, 0
      %v2398 = vsel %vm2366, 1, 0
      %v2399 = vsel %vm2367, 1, 0
      %v2400 = vsel %vm2368, 1, 0
      %v2401 = vsel %vm2369, 1, 0
      %v2402 = vsel %vm2370, 1, 0
      %v2403 = vsel %vm2371, 1, 0
      %v2404 = vsel %vm2372, 1, 0
      %v2405 = vsel %vm2373, 1, 0
      %v2406 = vsel %vm2374, 1, 0
      %v2407 = vsel %vm2375, 1, 0
      %v2408 = vsel %vm2376, 1, 0
      %v2409 = vsel %vm2377, 1, 0
      %v2410 = vsel %vm2378, 1, 0
      %v2411 = vsel %vm2379, 1, 0
      %v2412 = vsel %vm2380, 1, 0
      %v2413 = vsel %vm2381, 1, 0
      %v2414 = vsel %vm2382, 1, 0
      %v2415 = vsel %vm2383, 1, 0
      %v2416 = vsel %vm2384, 1, 0
      %v2417 = vsel %vm2385, 1, 0
      %vm2418 = vcmp.eq.s32.totalorder %v2386, 1
      %vm2419 = vcmp.eq.s32.totalorder %v2387, 1
      %vm2420 = vcmp.eq.s32.totalorder %v2388, 1
      %vm2421 = vcmp.eq.s32.totalorder %v2389, 1
      %vm2422 = vcmp.eq.s32.totalorder %v2390, 1
      %vm2423 = vcmp.eq.s32.totalorder %v2391, 1
      %vm2424 = vcmp.eq.s32.totalorder %v2392, 1
      %vm2425 = vcmp.eq.s32.totalorder %v2393, 1
      %vm2426 = vcmp.eq.s32.totalorder %v2394, 1
      %vm2427 = vcmp.eq.s32.totalorder %v2395, 1
      %vm2428 = vcmp.eq.s32.totalorder %v2396, 1
      %vm2429 = vcmp.eq.s32.totalorder %v2397, 1
      %vm2430 = vcmp.eq.s32.totalorder %v2398, 1
      %vm2431 = vcmp.eq.s32.totalorder %v2399, 1
      %vm2432 = vcmp.eq.s32.totalorder %v2400, 1
      %vm2433 = vcmp.eq.s32.totalorder %v2401, 1
      %vm2434 = vcmp.eq.s32.totalorder %v2402, 1
      %vm2435 = vcmp.eq.s32.totalorder %v2403, 1
      %vm2436 = vcmp.eq.s32.totalorder %v2404, 1
      %vm2437 = vcmp.eq.s32.totalorder %v2405, 1
      %vm2438 = vcmp.eq.s32.totalorder %v2406, 1
      %vm2439 = vcmp.eq.s32.totalorder %v2407, 1
      %vm2440 = vcmp.eq.s32.totalorder %v2408, 1
      %vm2441 = vcmp.eq.s32.totalorder %v2409, 1
      %vm2442 = vcmp.eq.s32.totalorder %v2410, 1
      %vm2443 = vcmp.eq.s32.totalorder %v2411, 1
      %vm2444 = vcmp.eq.s32.totalorder %v2412, 1
      %vm2445 = vcmp.eq.s32.totalorder %v2413, 1
      %vm2446 = vcmp.eq.s32.totalorder %v2414, 1
      %vm2447 = vcmp.eq.s32.totalorder %v2415, 1
      %vm2448 = vcmp.eq.s32.totalorder %v2416, 1
      %vm2449 = vcmp.eq.s32.totalorder %v2417, 1
      %v2451 = vrot.slane %v242, 7
      %v2452 = vsel %vm794, %v858, %v2451
      %v2453 = vrot.slane %v243, 7
      %v2454 = vsel %vm794, %v2451, %v2453
      %v2457 = vsel %vm2418, %v801, 0.0
      %v2458 = vsel %vm2419, %v803, 0.0
      %v2459 = vsel %vm2420, %v805, 0.0
      %v2460 = vsel %vm2421, %v807, 0.0
      %v2461 = vsel %vm2422, %v809, 0.0
      %v2462 = vsel %vm2423, %v811, 0.0
      %v2463 = vsel %vm2424, %v813, 0.0
      %v2464 = vsel %vm2425, %v815, 0.0
      %v2465 = vsel %vm2426, %v817, 0.0
      %v2466 = vsel %vm2427, %v819, 0.0
      %v2467 = vsel %vm2428, %v821, 0.0
      %v2468 = vsel %vm2429, %v823, 0.0
      %v2469 = vsel %vm2430, %v825, 0.0
      %v2470 = vsel %vm2431, %v827, 0.0
      %v2471 = vsel %vm2432, %v829, 0.0
      %v2472 = vsel %vm2433, %v831, 0.0
      %v2473 = vsel %vm2434, %v833, 0.0
      %v2474 = vsel %vm2435, %v835, 0.0
      %v2475 = vsel %vm2436, %v837, 0.0
      %v2476 = vsel %vm2437, %v839, 0.0
      %v2477 = vsel %vm2438, %v841, 0.0
      %v2478 = vsel %vm2439, %v843, 0.0
      %v2479 = vsel %vm2440, %v845, 0.0
      %v2480 = vsel %vm2441, %v847, 0.0
      %v2481 = vsel %vm2442, %v849, 0.0
      %v2482 = vsel %vm2443, %v851, 0.0
      %v2483 = vsel %vm2444, %v853, 0.0
      %v2484 = vsel %vm2445, %v855, 0.0
      %v2485 = vsel %vm2446, %v857, 0.0
      %v2486 = vsel %vm2447, %v859, 0.0
      %v2487 = vsel %vm2448, %v2452, 0.0
      %v2488 = vsel %vm2449, %v2454, 0.0
      %v2489 = vpack.c.bf16 %v2458, %v2457
      %v2490 = vpack.c.bf16 %v2460, %v2459
      %v2491 = vpack.c.bf16 %v2462, %v2461
      %v2492 = vpack.c.bf16 %v2464, %v2463
      %v2493 = vpack.c.bf16 %v2466, %v2465
      %v2494 = vpack.c.bf16 %v2468, %v2467
      %v2495 = vpack.c.bf16 %v2470, %v2469
      %v2496 = vpack.c.bf16 %v2472, %v2471
      %v2497 = vpack.c.bf16 %v2474, %v2473
      %v2498 = vpack.c.bf16 %v2476, %v2475
      %v2499 = vpack.c.bf16 %v2478, %v2477
      %v2500 = vpack.c.bf16 %v2480, %v2479
      %v2501 = vpack.c.bf16 %v2482, %v2481
      %v2502 = vpack.c.bf16 %v2484, %v2483
      %v2503 = vpack.c.bf16 %v2486, %v2485
      %v2504 = vpack.c.bf16 %v2488, %v2487
      %s2505 = scalar_lea.vmem %s1, 12
      %v2506 = vld [vmem:[%s2505] sm:$0xf]
      %v2508 = vsel %vm1183, %v2489, 0
      %v2511 = vsel %vm1183, %v2490, 0
      %v2514 = vsel %vm1183, %v2491, 0
      %v2517 = vsel %vm1183, %v2492, 0
      %v2520 = vsel %vm1183, %v2493, 0
      %v2523 = vsel %vm1183, %v2494, 0
      %v2526 = vsel %vm1183, %v2495, 0
      %v2529 = vsel %vm1183, %v2496, 0
      %v2532 = vsel %vm1183, %v2497, 0
      %v2535 = vsel %vm1183, %v2498, 0
      %v2538 = vsel %vm1183, %v2499, 0
      %v2541 = vsel %vm1183, %v2500, 0
      %v2544 = vsel %vm1183, %v2501, 0
      %v2547 = vsel %vm1183, %v2502, 0
      %v2550 = vsel %vm1183, %v2503, 0
      %v2553 = vsel %vm1183, %v2504, 0
      %v2556 = vsel %vm1232, %v2506, 0
      %2558 = vmatprep.subr.bf16.mxu0 0
      %2559 = vmatpush1.bf16.msra.mxu0 %v2556
      %2560 = vmatprep.subr.bf16.mxu0 0
      %2561 = vmatpush1.bf16.msra.mxu0 0
      %2562 = vmatprep.subr.bf16.mxu0 0
      %2563 = vmatpush1.bf16.msra.mxu0 0
      %2564 = vmatprep.subr.bf16.mxu0 0
      %2565 = vmatpush1.bf16.msra.mxu0 0
      %2566 = vmatprep.subr.bf16.mxu0 0
      %2567 = vmatpush1.bf16.msra.mxu0 0
      %2568 = vmatprep.subr.bf16.mxu0 0
      %2569 = vmatpush1.bf16.msra.mxu0 0
      %2570 = vmatprep.subr.bf16.mxu0 0
      %2571 = vmatpush1.bf16.msra.mxu0 0
      %2572 = vmatprep.subr.bf16.mxu0 0
      %2573 = vmatpush1.bf16.msra.mxu0 0
      %2574 = vmatprep.subr.bf16.mxu0 0
      %2575 = vmatpush1.bf16.msra.mxu0 0
      %2576 = vmatprep.subr.bf16.mxu0 0
      %2577 = vmatpush1.bf16.msra.mxu0 0
      %2578 = vmatprep.subr.bf16.mxu0 0
      %2579 = vmatpush1.bf16.msra.mxu0 0
      %2580 = vmatprep.subr.bf16.mxu0 0
      %2581 = vmatpush1.bf16.msra.mxu0 0
      %2582 = vmatprep.subr.bf16.mxu0 0
      %2583 = vmatpush1.bf16.msra.mxu0 0
      %2584 = vmatprep.subr.bf16.mxu0 0
      %2585 = vmatpush1.bf16.msra.mxu0 0
      %2586 = vmatprep.subr.bf16.mxu0 0
      %2587 = vmatpush1.bf16.msra.mxu0 0
      %2588 = vmatprep.subr.bf16.mxu0 0
      %2589 = vmatpush1.bf16.msra.mxu0 0
      %2590 = vmatprep.mubr.bf16.mxu0 0
      %2591 = vmatmul.mubr.bf16.gmra.mrb[0].mxu0 %v2508
      %v2592 = vpop.f32.mrb[0].mxu0
      %v2593 = vadd.f32 0.0, %v2592
      %v2594 = vpop.f32.mrb[0].mxu0
      %v2595 = vpop.f32.mrb[0].mxu0
      %v2596 = vadd.f32 0.0, %v2595
      %v2597 = vpop.f32.mrb[0].mxu0
      %2598 = vmatprep.mubr.bf16.mxu0 0
      %2599 = vmatmul.mubr.bf16.gmra.mrb[0].mxu0 %v2511
      %v2600 = vpop.f32.mrb[0].mxu0
      %v2601 = vadd.f32 0.0, %v2600
      %v2602 = vpop.f32.mrb[0].mxu0
      %v2603 = vpop.f32.mrb[0].mxu0
      %v2604 = vadd.f32 0.0, %v2603
      %v2605 = vpop.f32.mrb[0].mxu0
      %2606 = vmatprep.mubr.bf16.mxu0 0
      %2607 = vmatmul.mubr.bf16.gmra.mrb[0].mxu0 %v2514
      %v2608 = vpop.f32.mrb[0].mxu0
      %v2609 = vadd.f32 0.0, %v2608
      %v2610 = vpop.f32.mrb[0].mxu0
      %v2611 = vpop.f32.mrb[0].mxu0
      %v2612 = vadd.f32 0.0, %v2611
      %v2613 = vpop.f32.mrb[0].mxu0
      %2614 = vmatprep.mubr.bf16.mxu0 0
      %2615 = vmatmul.mubr.bf16.gmra.mrb[0].mxu0 %v2517
      %v2616 = vpop.f32.mrb[0].mxu0
      %v2617 = vadd.f32 0.0, %v2616
      %v2618 = vpop.f32.mrb[0].mxu0
      %v2619 = vpop.f32.mrb[0].mxu0
      %v2620 = vadd.f32 0.0, %v2619
      %v2621 = vpop.f32.mrb[0].mxu0
      %2622 = vmatprep.mubr.bf16.mxu0 0
      %2623 = vmatmul.mubr.bf16.gmra.mrb[0].mxu0 %v2520
      %v2624 = vpop.f32.mrb[0].mxu0
      %v2625 = vadd.f32 0.0, %v2624
      %v2626 = vpop.f32.mrb[0].mxu0
      %v2627 = vpop.f32.mrb[0].mxu0
      %v2628 = vadd.f32 0.0, %v2627
      %v2629 = vpop.f32.mrb[0].mxu0
      %2630 = vmatprep.mubr.bf16.mxu0 0
      %2631 = vmatmul.mubr.bf16.gmra.mrb[0].mxu0 %v2523
      %v2632 = vpop.f32.mrb[0].mxu0
      %v2633 = vadd.f32 0.0, %v2632
      %v2634 = vpop.f32.mrb[0].mxu0
      %v2635 = vpop.f32.mrb[0].mxu0
      %v2636 = vadd.f32 0.0, %v2635
      %v2637 = vpop.f32.mrb[0].mxu0
      %2638 = vmatprep.mubr.bf16.mxu0 0
      %2639 = vmatmul.mubr.bf16.gmra.mrb[0].mxu0 %v2526
      %v2640 = vpop.f32.mrb[0].mxu0
      %v2641 = vadd.f32 0.0, %v2640
      %v2642 = vpop.f32.mrb[0].mxu0
      %v2643 = vpop.f32.mrb[0].mxu0
      %v2644 = vadd.f32 0.0, %v2643
      %v2645 = vpop.f32.mrb[0].mxu0
      %2646 = vmatprep.mubr.bf16.mxu0 0
      %2647 = vmatmul.mubr.bf16.gmra.mrb[0].mxu0 %v2529
      %v2648 = vpop.f32.mrb[0].mxu0
      %v2649 = vadd.f32 0.0, %v2648
      %v2650 = vpop.f32.mrb[0].mxu0
      %v2651 = vpop.f32.mrb[0].mxu0
      %v2652 = vadd.f32 0.0, %v2651
      %v2653 = vpop.f32.mrb[0].mxu0
      %2654 = vmatprep.mubr.bf16.mxu0 0
      %2655 = vmatmul.mubr.bf16.gmra.mrb[0].mxu0 %v2532
      %v2656 = vpop.f32.mrb[0].mxu0
      %v2657 = vadd.f32 0.0, %v2656
      %v2658 = vpop.f32.mrb[0].mxu0
      %v2659 = vpop.f32.mrb[0].mxu0
      %v2660 = vadd.f32 0.0, %v2659
      %v2661 = vpop.f32.mrb[0].mxu0
      %2662 = vmatprep.mubr.bf16.mxu0 0
      %2663 = vmatmul.mubr.bf16.gmra.mrb[0].mxu0 %v2535
      %v2664 = vpop.f32.mrb[0].mxu0
      %v2665 = vadd.f32 0.0, %v2664
      %v2666 = vpop.f32.mrb[0].mxu0
      %v2667 = vpop.f32.mrb[0].mxu0
      %v2668 = vadd.f32 0.0, %v2667
      %v2669 = vpop.f32.mrb[0].mxu0
      %2670 = vmatprep.mubr.bf16.mxu0 0
      %2671 = vmatmul.mubr.bf16.gmra.mrb[0].mxu0 %v2538
      %v2672 = vpop.f32.mrb[0].mxu0
      %v2673 = vadd.f32 0.0, %v2672
      %v2674 = vpop.f32.mrb[0].mxu0
      %v2675 = vpop.f32.mrb[0].mxu0
      %v2676 = vadd.f32 0.0, %v2675
      %v2677 = vpop.f32.mrb[0].mxu0
      %2678 = vmatprep.mubr.bf16.mxu0 0
      %2679 = vmatmul.mubr.bf16.gmra.mrb[0].mxu0 %v2541
      %v2680 = vpop.f32.mrb[0].mxu0
      %v2681 = vadd.f32 0.0, %v2680
      %v2682 = vpop.f32.mrb[0].mxu0
      %v2683 = vpop.f32.mrb[0].mxu0
      %v2684 = vadd.f32 0.0, %v2683
      %v2685 = vpop.f32.mrb[0].mxu0
      %2686 = vmatprep.mubr.bf16.mxu0 0
      %2687 = vmatmul.mubr.bf16.gmra.mrb[0].mxu0 %v2544
      %v2688 = vpop.f32.mrb[0].mxu0
      %v2689 = vadd.f32 0.0, %v2688
      %v2690 = vpop.f32.mrb[0].mxu0
      %v2691 = vpop.f32.mrb[0].mxu0
      %v2692 = vadd.f32 0.0, %v2691
      %v2693 = vpop.f32.mrb[0].mxu0
      %2694 = vmatprep.mubr.bf16.mxu0 0
      %2695 = vmatmul.mubr.bf16.gmra.mrb[0].mxu0 %v2547
      %v2696 = vpop.f32.mrb[0].mxu0
      %v2697 = vadd.f32 0.0, %v2696
      %v2698 = vpop.f32.mrb[0].mxu0
      %v2699 = vpop.f32.mrb[0].mxu0
      %v2700 = vadd.f32 0.0, %v2699
      %v2701 = vpop.f32.mrb[0].mxu0
      %2702 = vmatprep.mubr.bf16.mxu0 0
      %2703 = vmatmul.mubr.bf16.gmra.mrb[0].mxu0 %v2550
      %v2704 = vpop.f32.mrb[0].mxu0
      %v2705 = vadd.f32 0.0, %v2704
      %v2706 = vpop.f32.mrb[0].mxu0
      %v2707 = vpop.f32.mrb[0].mxu0
      %v2708 = vadd.f32 0.0, %v2707
      %v2709 = vpop.f32.mrb[0].mxu0
      %2710 = vmatprep.mubr.bf16.mxu0 0
      %2711 = vmatmul.mubr.bf16.gmra.mrb[0].mxu0 %v2553
      %v2712 = vpop.f32.mrb[0].mxu0
      %v2713 = vadd.f32 0.0, %v2712
      %v2714 = vpop.f32.mrb[0].mxu0
      %v2715 = vpop.f32.mrb[0].mxu0
      %v2716 = vadd.f32 0.0, %v2715
      %v2717 = vpop.f32.mrb[0].mxu0
      %2718 = vdwg.mxu0
      %v2719 = vadd.f32 %v2194, %v2593
      %v2720 = vadd.f32 %v2195, %v2596
      %v2721 = vadd.f32 %v2196, %v2601
      %v2722 = vadd.f32 %v2197, %v2604
      %v2723 = vadd.f32 %v2198, %v2609
      %v2724 = vadd.f32 %v2199, %v2612
      %v2725 = vadd.f32 %v2200, %v2617
      %v2726 = vadd.f32 %v2201, %v2620
      %v2727 = vadd.f32 %v2202, %v2625
      %v2728 = vadd.f32 %v2203, %v2628
      %v2729 = vadd.f32 %v2204, %v2633
      %v2730 = vadd.f32 %v2205, %v2636
      %v2731 = vadd.f32 %v2206, %v2641
      %v2732 = vadd.f32 %v2207, %v2644
      %v2733 = vadd.f32 %v2208, %v2649
      %v2734 = vadd.f32 %v2209, %v2652
      %v2735 = vadd.f32 %v2210, %v2657
      %v2736 = vadd.f32 %v2211, %v2660
      %v2737 = vadd.f32 %v2212, %v2665
      %v2738 = vadd.f32 %v2213, %v2668
      %v2739 = vadd.f32 %v2214, %v2673
      %v2740 = vadd.f32 %v2215, %v2676
      %v2741 = vadd.f32 %v2216, %v2681
      %v2742 = vadd.f32 %v2217, %v2684
      %v2743 = vadd.f32 %v2218, %v2689
      %v2744 = vadd.f32 %v2219, %v2692
      %v2745 = vadd.f32 %v2220, %v2697
      %v2746 = vadd.f32 %v2221, %v2700
      %v2747 = vadd.f32 %v2222, %v2705
      %v2748 = vadd.f32 %v2223, %v2708
      %v2749 = vadd.f32 %v2224, %v2713
      %v2750 = vadd.f32 %v2225, %v2716
      %vm2751 = vmand %vm2290, %vm941
      %vm2752 = vmand %vm2291, %vm942
      %vm2753 = vmand %vm2292, %vm943
      %vm2754 = vmand %vm2293, %vm944
      %vm2755 = vmand %vm2294, %vm945
      %vm2756 = vmand %vm2295, %vm946
      %vm2757 = vmand %vm2296, %vm947
      %vm2758 = vmand %vm2297, %vm948
      %vm2759 = vmand %vm2298, %vm949
      %vm2760 = vmand %vm2299, %vm950
      %vm2761 = vmand %vm2300, %vm951
      %vm2762 = vmand %vm2301, %vm952
      %vm2763 = vmand %vm2302, %vm953
      %vm2764 = vmand %vm2303, %vm954
      %vm2765 = vmand %vm2304, %vm955
      %vm2766 = vmand %vm2305, %vm956
      %vm2767 = vmand %vm2306, %vm957
      %vm2768 = vmand %vm2307, %vm958
      %vm2769 = vmand %vm2308, %vm959
      %vm2770 = vmand %vm2309, %vm960
      %vm2771 = vmand %vm2310, %vm961
      %vm2772 = vmand %vm2311, %vm962
      %vm2773 = vmand %vm2312, %vm963
      %vm2774 = vmand %vm2313, %vm964
      %vm2775 = vmand %vm2314, %vm965
      %vm2776 = vmand %vm2315, %vm966
      %vm2777 = vmand %vm2316, %vm967
      %vm2778 = vmand %vm2317, %vm968
      %vm2779 = vmand %vm2318, %vm969
      %vm2780 = vmand %vm2319, %vm970
      %vm2781 = vmand %vm2320, %vm971
      %vm2782 = vmand %vm2321, %vm972
      %vm2783 = vmand %vm2751, %vm1005
      %vm2784 = vmand %vm2752, %vm1006
      %vm2785 = vmand %vm2753, %vm1007
      %vm2786 = vmand %vm2754, %vm1008
      %vm2787 = vmand %vm2755, %vm1009
      %vm2788 = vmand %vm2756, %vm1010
      %vm2789 = vmand %vm2757, %vm1011
      %vm2790 = vmand %vm2758, %vm1012
      %vm2791 = vmand %vm2759, %vm1013
      %vm2792 = vmand %vm2760, %vm1014
      %vm2793 = vmand %vm2761, %vm1015
      %vm2794 = vmand %vm2762, %vm1016
      %vm2795 = vmand %vm2763, %vm1017
      %vm2796 = vmand %vm2764, %vm1018
      %vm2797 = vmand %vm2765, %vm1019
      %vm2798 = vmand %vm2766, %vm1020
      %vm2799 = vmand %vm2767, %vm1021
      %vm2800 = vmand %vm2768, %vm1022
      %vm2801 = vmand %vm2769, %vm1023
      %vm2802 = vmand %vm2770, %vm1024
      %vm2803 = vmand %vm2771, %vm1025
      %vm2804 = vmand %vm2772, %vm1026
      %vm2805 = vmand %vm2773, %vm1027
      %vm2806 = vmand %vm2774, %vm1028
      %vm2807 = vmand %vm2775, %vm1029
      %vm2808 = vmand %vm2776, %vm1030
      %vm2809 = vmand %vm2777, %vm1031
      %vm2810 = vmand %vm2778, %vm1032
      %vm2811 = vmand %vm2779, %vm1033
      %vm2812 = vmand %vm2780, %vm1034
      %vm2813 = vmand %vm2781, %vm1035
      %vm2814 = vmand %vm2782, %vm1036
      %v2815 = vsel %vm2783, 1, 0
      %v2816 = vsel %vm2784, 1, 0
      %v2817 = vsel %vm2785, 1, 0
      %v2818 = vsel %vm2786, 1, 0
      %v2819 = vsel %vm2787, 1, 0
      %v2820 = vsel %vm2788, 1, 0
      %v2821 = vsel %vm2789, 1, 0
      %v2822 = vsel %vm2790, 1, 0
      %v2823 = vsel %vm2791, 1, 0
      %v2824 = vsel %vm2792, 1, 0
      %v2825 = vsel %vm2793, 1, 0
      %v2826 = vsel %vm2794, 1, 0
      %v2827 = vsel %vm2795, 1, 0
      %v2828 = vsel %vm2796, 1, 0
      %v2829 = vsel %vm2797, 1, 0
      %v2830 = vsel %vm2798, 1, 0
      %v2831 = vsel %vm2799, 1, 0
      %v2832 = vsel %vm2800, 1, 0
      %v2833 = vsel %vm2801, 1, 0
      %v2834 = vsel %vm2802, 1, 0
      %v2835 = vsel %vm2803, 1, 0
      %v2836 = vsel %vm2804, 1, 0
      %v2837 = vsel %vm2805, 1, 0
      %v2838 = vsel %vm2806, 1, 0
      %v2839 = vsel %vm2807, 1, 0
      %v2840 = vsel %vm2808, 1, 0
      %v2841 = vsel %vm2809, 1, 0
      %v2842 = vsel %vm2810, 1, 0
      %v2843 = vsel %vm2811, 1, 0
      %v2844 = vsel %vm2812, 1, 0
      %v2845 = vsel %vm2813, 1, 0
      %v2846 = vsel %vm2814, 1, 0
      %vm2847 = vcmp.eq.s32.totalorder %v2815, 1
      %vm2848 = vcmp.eq.s32.totalorder %v2816, 1
      %vm2849 = vcmp.eq.s32.totalorder %v2817, 1
      %vm2850 = vcmp.eq.s32.totalorder %v2818, 1
      %vm2851 = vcmp.eq.s32.totalorder %v2819, 1
      %vm2852 = vcmp.eq.s32.totalorder %v2820, 1
      %vm2853 = vcmp.eq.s32.totalorder %v2821, 1
      %vm2854 = vcmp.eq.s32.totalorder %v2822, 1
      %vm2855 = vcmp.eq.s32.totalorder %v2823, 1
      %vm2856 = vcmp.eq.s32.totalorder %v2824, 1
      %vm2857 = vcmp.eq.s32.totalorder %v2825, 1
      %vm2858 = vcmp.eq.s32.totalorder %v2826, 1
      %vm2859 = vcmp.eq.s32.totalorder %v2827, 1
      %vm2860 = vcmp.eq.s32.totalorder %v2828, 1
      %vm2861 = vcmp.eq.s32.totalorder %v2829, 1
      %vm2862 = vcmp.eq.s32.totalorder %v2830, 1
      %vm2863 = vcmp.eq.s32.totalorder %v2831, 1
      %vm2864 = vcmp.eq.s32.totalorder %v2832, 1
      %vm2865 = vcmp.eq.s32.totalorder %v2833, 1
      %vm2866 = vcmp.eq.s32.totalorder %v2834, 1
      %vm2867 = vcmp.eq.s32.totalorder %v2835, 1
      %vm2868 = vcmp.eq.s32.totalorder %v2836, 1
      %vm2869 = vcmp.eq.s32.totalorder %v2837, 1
      %vm2870 = vcmp.eq.s32.totalorder %v2838, 1
      %vm2871 = vcmp.eq.s32.totalorder %v2839, 1
      %vm2872 = vcmp.eq.s32.totalorder %v2840, 1
      %vm2873 = vcmp.eq.s32.totalorder %v2841, 1
      %vm2874 = vcmp.eq.s32.totalorder %v2842, 1
      %vm2875 = vcmp.eq.s32.totalorder %v2843, 1
      %vm2876 = vcmp.eq.s32.totalorder %v2844, 1
      %vm2877 = vcmp.eq.s32.totalorder %v2845, 1
      %vm2878 = vcmp.eq.s32.totalorder %v2846, 1
      %v2879 = vsel %vm2847, %v212, 0.0
      %v2880 = vsel %vm2848, %v213, 0.0
      %v2881 = vsel %vm2849, %v214, 0.0
      %v2882 = vsel %vm2850, %v215, 0.0
      %v2883 = vsel %vm2851, %v216, 0.0
      %v2884 = vsel %vm2852, %v217, 0.0
      %v2885 = vsel %vm2853, %v218, 0.0
      %v2886 = vsel %vm2854, %v219, 0.0
      %v2887 = vsel %vm2855, %v220, 0.0
      %v2888 = vsel %vm2856, %v221, 0.0
      %v2889 = vsel %vm2857, %v222, 0.0
      %v2890 = vsel %vm2858, %v223, 0.0
      %v2891 = vsel %vm2859, %v224, 0.0
      %v2892 = vsel %vm2860, %v225, 0.0
      %v2893 = vsel %vm2861, %v226, 0.0
      %v2894 = vsel %vm2862, %v227, 0.0
      %v2895 = vsel %vm2863, %v228, 0.0
      %v2896 = vsel %vm2864, %v229, 0.0
      %v2897 = vsel %vm2865, %v230, 0.0
      %v2898 = vsel %vm2866, %v231, 0.0
      %v2899 = vsel %vm2867, %v232, 0.0
      %v2900 = vsel %vm2868, %v233, 0.0
      %v2901 = vsel %vm2869, %v234, 0.0
      %v2902 = vsel %vm2870, %v235, 0.0
      %v2903 = vsel %vm2871, %v236, 0.0
      %v2904 = vsel %vm2872, %v237, 0.0
      %v2905 = vsel %vm2873, %v238, 0.0
      %v2906 = vsel %vm2874, %v239, 0.0
      %v2907 = vsel %vm2875, %v240, 0.0
      %v2908 = vsel %vm2876, %v241, 0.0
      %v2909 = vsel %vm2877, %v242, 0.0
      %v2910 = vsel %vm2878, %v243, 0.0
      %v2911 = vpack.c.bf16 %v2880, %v2879
      %v2912 = vpack.c.bf16 %v2882, %v2881
      %v2913 = vpack.c.bf16 %v2884, %v2883
      %v2914 = vpack.c.bf16 %v2886, %v2885
      %v2915 = vpack.c.bf16 %v2888, %v2887
      %v2916 = vpack.c.bf16 %v2890, %v2889
      %v2917 = vpack.c.bf16 %v2892, %v2891
      %v2918 = vpack.c.bf16 %v2894, %v2893
      %v2919 = vpack.c.bf16 %v2896, %v2895
      %v2920 = vpack.c.bf16 %v2898, %v2897
      %v2921 = vpack.c.bf16 %v2900, %v2899
      %v2922 = vpack.c.bf16 %v2902, %v2901
      %v2923 = vpack.c.bf16 %v2904, %v2903
      %v2924 = vpack.c.bf16 %v2906, %v2905
      %v2925 = vpack.c.bf16 %v2908, %v2907
      %v2926 = vpack.c.bf16 %v2910, %v2909
      %s2927 = scalar_lea.vmem %s1, 16
      %v2928 = vld [vmem:[%s2927] sm:$0xf]
      %v2930 = vsel %vm1183, %v2911, 0
      %v2933 = vsel %vm1183, %v2912, 0
      %v2936 = vsel %vm1183, %v2913, 0
      %v2939 = vsel %vm1183, %v2914, 0
      %v2942 = vsel %vm1183, %v2915, 0
      %v2945 = vsel %vm1183, %v2916, 0
      %v2948 = vsel %vm1183, %v2917, 0
      %v2951 = vsel %vm1183, %v2918, 0
      %v2954 = vsel %vm1183, %v2919, 0
      %v2957 = vsel %vm1183, %v2920, 0
      %v2960 = vsel %vm1183, %v2921, 0
      %v2963 = vsel %vm1183, %v2922, 0
      %v2966 = vsel %vm1183, %v2923, 0
      %v2969 = vsel %vm1183, %v2924, 0
      %v2972 = vsel %vm1183, %v2925, 0
      %v2975 = vsel %vm1183, %v2926, 0
      %v2978 = vsel %vm1232, %v2928, 0
      %2980 = vmatprep.subr.bf16.mxu0 0
      %2981 = vmatpush1.bf16.msra.mxu0 %v2978
      %2982 = vmatprep.subr.bf16.mxu0 0
      %2983 = vmatpush1.bf16.msra.mxu0 0
      %2984 = vmatprep.subr.bf16.mxu0 0
      %2985 = vmatpush1.bf16.msra.mxu0 0
      %2986 = vmatprep.subr.bf16.mxu0 0
      %2987 = vmatpush1.bf16.msra.mxu0 0
      %2988 = vmatprep.subr.bf16.mxu0 0
      %2989 = vmatpush1.bf16.msra.mxu0 0
      %2990 = vmatprep.subr.bf16.mxu0 0
      %2991 = vmatpush1.bf16.msra.mxu0 0
      %2992 = vmatprep.subr.bf16.mxu0 0
      %2993 = vmatpush1.bf16.msra.mxu0 0
      %2994 = vmatprep.subr.bf16.mxu0 0
      %2995 = vmatpush1.bf16.msra.mxu0 0
      %2996 = vmatprep.subr.bf16.mxu0 0
      %2997 = vmatpush1.bf16.msra.mxu0 0
      %2998 = vmatprep.subr.bf16.mxu0 0
      %2999 = vmatpush1.bf16.msra.mxu0 0
      %3000 = vmatprep.subr.bf16.mxu0 0
      %3001 = vmatpush1.bf16.msra.mxu0 0
      %3002 = vmatprep.subr.bf16.mxu0 0
      %3003 = vmatpush1.bf16.msra.mxu0 0
      %3004 = vmatprep.subr.bf16.mxu0 0
      %3005 = vmatpush1.bf16.msra.mxu0 0
      %3006 = vmatprep.subr.bf16.mxu0 0
      %3007 = vmatpush1.bf16.msra.mxu0 0
      %3008 = vmatprep.subr.bf16.mxu0 0
      %3009 = vmatpush1.bf16.msra.mxu0 0
      %3010 = vmatprep.subr.bf16.mxu0 0
      %3011 = vmatpush1.bf16.msra.mxu0 0
      %3012 = vmatprep.mubr.bf16.mxu0 0
      %3013 = vmatmul.mubr.bf16.gmra.mrb[0].mxu0 %v2930
      %v3014 = vpop.f32.mrb[0].mxu0
      %v3015 = vadd.f32 0.0, %v3014
      %v3016 = vpop.f32.mrb[0].mxu0
      %v3017 = vpop.f32.mrb[0].mxu0
      %v3018 = vadd.f32 0.0, %v3017
      %v3019 = vpop.f32.mrb[0].mxu0
      %3020 = vmatprep.mubr.bf16.mxu0 0
      %3021 = vmatmul.mubr.bf16.gmra.mrb[0].mxu0 %v2933
      %v3022 = vpop.f32.mrb[0].mxu0
      %v3023 = vadd.f32 0.0, %v3022
      %v3024 = vpop.f32.mrb[0].mxu0
      %v3025 = vpop.f32.mrb[0].mxu0
      %v3026 = vadd.f32 0.0, %v3025
      %v3027 = vpop.f32.mrb[0].mxu0
      %3028 = vmatprep.mubr.bf16.mxu0 0
      %3029 = vmatmul.mubr.bf16.gmra.mrb[0].mxu0 %v2936
      %v3030 = vpop.f32.mrb[0].mxu0
      %v3031 = vadd.f32 0.0, %v3030
      %v3032 = vpop.f32.mrb[0].mxu0
      %v3033 = vpop.f32.mrb[0].mxu0
      %v3034 = vadd.f32 0.0, %v3033
      %v3035 = vpop.f32.mrb[0].mxu0
      %3036 = vmatprep.mubr.bf16.mxu0 0
      %3037 = vmatmul.mubr.bf16.gmra.mrb[0].mxu0 %v2939
      %v3038 = vpop.f32.mrb[0].mxu0
      %v3039 = vadd.f32 0.0, %v3038
      %v3040 = vpop.f32.mrb[0].mxu0
      %v3041 = vpop.f32.mrb[0].mxu0
      %v3042 = vadd.f32 0.0, %v3041
      %v3043 = vpop.f32.mrb[0].mxu0
      %3044 = vmatprep.mubr.bf16.mxu0 0
      %3045 = vmatmul.mubr.bf16.gmra.mrb[0].mxu0 %v2942
      %v3046 = vpop.f32.mrb[0].mxu0
      %v3047 = vadd.f32 0.0, %v3046
      %v3048 = vpop.f32.mrb[0].mxu0
      %v3049 = vpop.f32.mrb[0].mxu0
      %v3050 = vadd.f32 0.0, %v3049
      %v3051 = vpop.f32.mrb[0].mxu0
      %3052 = vmatprep.mubr.bf16.mxu0 0
      %3053 = vmatmul.mubr.bf16.gmra.mrb[0].mxu0 %v2945
      %v3054 = vpop.f32.mrb[0].mxu0
      %v3055 = vadd.f32 0.0, %v3054
      %v3056 = vpop.f32.mrb[0].mxu0
      %v3057 = vpop.f32.mrb[0].mxu0
      %v3058 = vadd.f32 0.0, %v3057
      %v3059 = vpop.f32.mrb[0].mxu0
      %3060 = vmatprep.mubr.bf16.mxu0 0
      %3061 = vmatmul.mubr.bf16.gmra.mrb[0].mxu0 %v2948
      %v3062 = vpop.f32.mrb[0].mxu0
      %v3063 = vadd.f32 0.0, %v3062
      %v3064 = vpop.f32.mrb[0].mxu0
      %v3065 = vpop.f32.mrb[0].mxu0
      %v3066 = vadd.f32 0.0, %v3065
      %v3067 = vpop.f32.mrb[0].mxu0
      %3068 = vmatprep.mubr.bf16.mxu0 0
      %3069 = vmatmul.mubr.bf16.gmra.mrb[0].mxu0 %v2951
      %v3070 = vpop.f32.mrb[0].mxu0
      %v3071 = vadd.f32 0.0, %v3070
      %v3072 = vpop.f32.mrb[0].mxu0
      %v3073 = vpop.f32.mrb[0].mxu0
      %v3074 = vadd.f32 0.0, %v3073
      %v3075 = vpop.f32.mrb[0].mxu0
      %3076 = vmatprep.mubr.bf16.mxu0 0
      %3077 = vmatmul.mubr.bf16.gmra.mrb[0].mxu0 %v2954
      %v3078 = vpop.f32.mrb[0].mxu0
      %v3079 = vadd.f32 0.0, %v3078
      %v3080 = vpop.f32.mrb[0].mxu0
      %v3081 = vpop.f32.mrb[0].mxu0
      %v3082 = vadd.f32 0.0, %v3081
      %v3083 = vpop.f32.mrb[0].mxu0
      %3084 = vmatprep.mubr.bf16.mxu0 0
      %3085 = vmatmul.mubr.bf16.gmra.mrb[0].mxu0 %v2957
      %v3086 = vpop.f32.mrb[0].mxu0
      %v3087 = vadd.f32 0.0, %v3086
      %v3088 = vpop.f32.mrb[0].mxu0
      %v3089 = vpop.f32.mrb[0].mxu0
      %v3090 = vadd.f32 0.0, %v3089
      %v3091 = vpop.f32.mrb[0].mxu0
      %3092 = vmatprep.mubr.bf16.mxu0 0
      %3093 = vmatmul.mubr.bf16.gmra.mrb[0].mxu0 %v2960
      %v3094 = vpop.f32.mrb[0].mxu0
      %v3095 = vadd.f32 0.0, %v3094
      %v3096 = vpop.f32.mrb[0].mxu0
      %v3097 = vpop.f32.mrb[0].mxu0
      %v3098 = vadd.f32 0.0, %v3097
      %v3099 = vpop.f32.mrb[0].mxu0
      %3100 = vmatprep.mubr.bf16.mxu0 0
      %3101 = vmatmul.mubr.bf16.gmra.mrb[0].mxu0 %v2963
      %v3102 = vpop.f32.mrb[0].mxu0
      %v3103 = vadd.f32 0.0, %v3102
      %v3104 = vpop.f32.mrb[0].mxu0
      %v3105 = vpop.f32.mrb[0].mxu0
      %v3106 = vadd.f32 0.0, %v3105
      %v3107 = vpop.f32.mrb[0].mxu0
      %3108 = vmatprep.mubr.bf16.mxu0 0
      %3109 = vmatmul.mubr.bf16.gmra.mrb[0].mxu0 %v2966
      %v3110 = vpop.f32.mrb[0].mxu0
      %v3111 = vadd.f32 0.0, %v3110
      %v3112 = vpop.f32.mrb[0].mxu0
      %v3113 = vpop.f32.mrb[0].mxu0
      %v3114 = vadd.f32 0.0, %v3113
      %v3115 = vpop.f32.mrb[0].mxu0
      %3116 = vmatprep.mubr.bf16.mxu0 0
      %3117 = vmatmul.mubr.bf16.gmra.mrb[0].mxu0 %v2969
      %v3118 = vpop.f32.mrb[0].mxu0
      %v3119 = vadd.f32 0.0, %v3118
      %v3120 = vpop.f32.mrb[0].mxu0
      %v3121 = vpop.f32.mrb[0].mxu0
      %v3122 = vadd.f32 0.0, %v3121
      %v3123 = vpop.f32.mrb[0].mxu0
      %3124 = vmatprep.mubr.bf16.mxu0 0
      %3125 = vmatmul.mubr.bf16.gmra.mrb[0].mxu0 %v2972
      %v3126 = vpop.f32.mrb[0].mxu0
      %v3127 = vadd.f32 0.0, %v3126
      %v3128 = vpop.f32.mrb[0].mxu0
      %v3129 = vpop.f32.mrb[0].mxu0
      %v3130 = vadd.f32 0.0, %v3129
      %v3131 = vpop.f32.mrb[0].mxu0
      %3132 = vmatprep.mubr.bf16.mxu0 0
      %3133 = vmatmul.mubr.bf16.gmra.mrb[0].mxu0 %v2975
      %v3134 = vpop.f32.mrb[0].mxu0
      %v3135 = vadd.f32 0.0, %v3134
      %v3136 = vpop.f32.mrb[0].mxu0
      %v3137 = vpop.f32.mrb[0].mxu0
      %v3138 = vadd.f32 0.0, %v3137
      %v3139 = vpop.f32.mrb[0].mxu0
      %3140 = vdwg.mxu0
      %v3141 = vadd.f32 %v2719, %v3015
      %v3142 = vadd.f32 %v2720, %v3018
      %v3143 = vadd.f32 %v2721, %v3023
      %v3144 = vadd.f32 %v2722, %v3026
      %v3145 = vadd.f32 %v2723, %v3031
      %v3146 = vadd.f32 %v2724, %v3034
      %v3147 = vadd.f32 %v2725, %v3039
      %v3148 = vadd.f32 %v2726, %v3042
      %v3149 = vadd.f32 %v2727, %v3047
      %v3150 = vadd.f32 %v2728, %v3050
      %v3151 = vadd.f32 %v2729, %v3055
      %v3152 = vadd.f32 %v2730, %v3058
      %v3153 = vadd.f32 %v2731, %v3063
      %v3154 = vadd.f32 %v2732, %v3066
      %v3155 = vadd.f32 %v2733, %v3071
      %v3156 = vadd.f32 %v2734, %v3074
      %v3157 = vadd.f32 %v2735, %v3079
      %v3158 = vadd.f32 %v2736, %v3082
      %v3159 = vadd.f32 %v2737, %v3087
      %v3160 = vadd.f32 %v2738, %v3090
      %v3161 = vadd.f32 %v2739, %v3095
      %v3162 = vadd.f32 %v2740, %v3098
      %v3163 = vadd.f32 %v2741, %v3103
      %v3164 = vadd.f32 %v2742, %v3106
      %v3165 = vadd.f32 %v2743, %v3111
      %v3166 = vadd.f32 %v2744, %v3114
      %v3167 = vadd.f32 %v2745, %v3119
      %v3168 = vadd.f32 %v2746, %v3122
      %v3169 = vadd.f32 %v2747, %v3127
      %v3170 = vadd.f32 %v2748, %v3130
      %v3171 = vadd.f32 %v2749, %v3135
      %v3172 = vadd.f32 %v2750, %v3138
      %vm3173 = vmand %vm2290, %vm1641
      %vm3174 = vmand %vm2291, %vm1642
      %vm3175 = vmand %vm2292, %vm1643
      %vm3176 = vmand %vm2293, %vm1644
      %vm3177 = vmand %vm2294, %vm1645
      %vm3178 = vmand %vm2295, %vm1646
      %vm3179 = vmand %vm2296, %vm1647
      %vm3180 = vmand %vm2297, %vm1648
      %vm3181 = vmand %vm2298, %vm1649
      %vm3182 = vmand %vm2299, %vm1650
      %vm3183 = vmand %vm2300, %vm1651
      %vm3184 = vmand %vm2301, %vm1652
      %vm3185 = vmand %vm2302, %vm1653
      %vm3186 = vmand %vm2303, %vm1654
      %vm3187 = vmand %vm2304, %vm1655
      %vm3188 = vmand %vm2305, %vm1656
      %vm3189 = vmand %vm2306, %vm1657
      %vm3190 = vmand %vm2307, %vm1658
      %vm3191 = vmand %vm2308, %vm1659
      %vm3192 = vmand %vm2309, %vm1660
      %vm3193 = vmand %vm2310, %vm1661
      %vm3194 = vmand %vm2311, %vm1662
      %vm3195 = vmand %vm2312, %vm1663
      %vm3196 = vmand %vm2313, %vm1664
      %vm3197 = vmand %vm2314, %vm1665
      %vm3198 = vmand %vm2315, %vm1666
      %vm3199 = vmand %vm2316, %vm1667
      %vm3200 = vmand %vm2317, %vm1668
      %vm3201 = vmand %vm2318, %vm1669
      %vm3202 = vmand %vm2319, %vm1670
      %vm3203 = vmand %vm2320, %vm1671
      %vm3204 = vmand %vm2321, %vm1672
      %vm3205 = vmand %vm3173, %vm1705
      %vm3206 = vmand %vm3174, %vm1706
      %vm3207 = vmand %vm3175, %vm1707
      %vm3208 = vmand %vm3176, %vm1708
      %vm3209 = vmand %vm3177, %vm1709
      %vm3210 = vmand %vm3178, %vm1710
      %vm3211 = vmand %vm3179, %vm1711
      %vm3212 = vmand %vm3180, %vm1712
      %vm3213 = vmand %vm3181, %vm1713
      %vm3214 = vmand %vm3182, %vm1714
      %vm3215 = vmand %vm3183, %vm1715
      %vm3216 = vmand %vm3184, %vm1716
      %vm3217 = vmand %vm3185, %vm1717
      %vm3218 = vmand %vm3186, %vm1718
      %vm3219 = vmand %vm3187, %vm1719
      %vm3220 = vmand %vm3188, %vm1720
      %vm3221 = vmand %vm3189, %vm1721
      %vm3222 = vmand %vm3190, %vm1722
      %vm3223 = vmand %vm3191, %vm1723
      %vm3224 = vmand %vm3192, %vm1724
      %vm3225 = vmand %vm3193, %vm1725
      %vm3226 = vmand %vm3194, %vm1726
      %vm3227 = vmand %vm3195, %vm1727
      %vm3228 = vmand %vm3196, %vm1728
      %vm3229 = vmand %vm3197, %vm1729
      %vm3230 = vmand %vm3198, %vm1730
      %vm3231 = vmand %vm3199, %vm1731
      %vm3232 = vmand %vm3200, %vm1732
      %vm3233 = vmand %vm3201, %vm1733
      %vm3234 = vmand %vm3202, %vm1734
      %vm3235 = vmand %vm3203, %vm1735
      %vm3236 = vmand %vm3204, %vm1736
      %v3237 = vsel %vm3205, 1, 0
      %v3238 = vsel %vm3206, 1, 0
      %v3239 = vsel %vm3207, 1, 0
      %v3240 = vsel %vm3208, 1, 0
      %v3241 = vsel %vm3209, 1, 0
      %v3242 = vsel %vm3210, 1, 0
      %v3243 = vsel %vm3211, 1, 0
      %v3244 = vsel %vm3212, 1, 0
      %v3245 = vsel %vm3213, 1, 0
      %v3246 = vsel %vm3214, 1, 0
      %v3247 = vsel %vm3215, 1, 0
      %v3248 = vsel %vm3216, 1, 0
      %v3249 = vsel %vm3217, 1, 0
      %v3250 = vsel %vm3218, 1, 0
      %v3251 = vsel %vm3219, 1, 0
      %v3252 = vsel %vm3220, 1, 0
      %v3253 = vsel %vm3221, 1, 0
      %v3254 = vsel %vm3222, 1, 0
      %v3255 = vsel %vm3223, 1, 0
      %v3256 = vsel %vm3224, 1, 0
      %v3257 = vsel %vm3225, 1, 0
      %v3258 = vsel %vm3226, 1, 0
      %v3259 = vsel %vm3227, 1, 0
      %v3260 = vsel %vm3228, 1, 0
      %v3261 = vsel %vm3229, 1, 0
      %v3262 = vsel %vm3230, 1, 0
      %v3263 = vsel %vm3231, 1, 0
      %v3264 = vsel %vm3232, 1, 0
      %v3265 = vsel %vm3233, 1, 0
      %v3266 = vsel %vm3234, 1, 0
      %v3267 = vsel %vm3235, 1, 0
      %v3268 = vsel %vm3236, 1, 0
      %vm3269 = vcmp.eq.s32.totalorder %v3237, 1
      %vm3270 = vcmp.eq.s32.totalorder %v3238, 1
      %vm3271 = vcmp.eq.s32.totalorder %v3239, 1
      %vm3272 = vcmp.eq.s32.totalorder %v3240, 1
      %vm3273 = vcmp.eq.s32.totalorder %v3241, 1
      %vm3274 = vcmp.eq.s32.totalorder %v3242, 1
      %vm3275 = vcmp.eq.s32.totalorder %v3243, 1
      %vm3276 = vcmp.eq.s32.totalorder %v3244, 1
      %vm3277 = vcmp.eq.s32.totalorder %v3245, 1
      %vm3278 = vcmp.eq.s32.totalorder %v3246, 1
      %vm3279 = vcmp.eq.s32.totalorder %v3247, 1
      %vm3280 = vcmp.eq.s32.totalorder %v3248, 1
      %vm3281 = vcmp.eq.s32.totalorder %v3249, 1
      %vm3282 = vcmp.eq.s32.totalorder %v3250, 1
      %vm3283 = vcmp.eq.s32.totalorder %v3251, 1
      %vm3284 = vcmp.eq.s32.totalorder %v3252, 1
      %vm3285 = vcmp.eq.s32.totalorder %v3253, 1
      %vm3286 = vcmp.eq.s32.totalorder %v3254, 1
      %vm3287 = vcmp.eq.s32.totalorder %v3255, 1
      %vm3288 = vcmp.eq.s32.totalorder %v3256, 1
      %vm3289 = vcmp.eq.s32.totalorder %v3257, 1
      %vm3290 = vcmp.eq.s32.totalorder %v3258, 1
      %vm3291 = vcmp.eq.s32.totalorder %v3259, 1
      %vm3292 = vcmp.eq.s32.totalorder %v3260, 1
      %vm3293 = vcmp.eq.s32.totalorder %v3261, 1
      %vm3294 = vcmp.eq.s32.totalorder %v3262, 1
      %vm3295 = vcmp.eq.s32.totalorder %v3263, 1
      %vm3296 = vcmp.eq.s32.totalorder %v3264, 1
      %vm3297 = vcmp.eq.s32.totalorder %v3265, 1
      %vm3298 = vcmp.eq.s32.totalorder %v3266, 1
      %vm3299 = vcmp.eq.s32.totalorder %v3267, 1
      %vm3300 = vcmp.eq.s32.totalorder %v3268, 1
      %v3302 = vrot.slane %v243, 1
      %v3303 = vsel %vm1834, %v1898, %v3302
      %v3304 = vrot.slane %v244, 1
      %v3305 = vsel %vm1834, %v3302, %v3304
      %v3308 = vsel %vm3269, %v1841, 0.0
      %v3309 = vsel %vm3270, %v1843, 0.0
      %v3310 = vsel %vm3271, %v1845, 0.0
      %v3311 = vsel %vm3272, %v1847, 0.0
      %v3312 = vsel %vm3273, %v1849, 0.0
      %v3313 = vsel %vm3274, %v1851, 0.0
      %v3314 = vsel %vm3275, %v1853, 0.0
      %v3315 = vsel %vm3276, %v1855, 0.0
      %v3316 = vsel %vm3277, %v1857, 0.0
      %v3317 = vsel %vm3278, %v1859, 0.0
      %v3318 = vsel %vm3279, %v1861, 0.0
      %v3319 = vsel %vm3280, %v1863, 0.0
      %v3320 = vsel %vm3281, %v1865, 0.0
      %v3321 = vsel %vm3282, %v1867, 0.0
      %v3322 = vsel %vm3283, %v1869, 0.0
      %v3323 = vsel %vm3284, %v1871, 0.0
      %v3324 = vsel %vm3285, %v1873, 0.0
      %v3325 = vsel %vm3286, %v1875, 0.0
      %v3326 = vsel %vm3287, %v1877, 0.0
      %v3327 = vsel %vm3288, %v1879, 0.0
      %v3328 = vsel %vm3289, %v1881, 0.0
      %v3329 = vsel %vm3290, %v1883, 0.0
      %v3330 = vsel %vm3291, %v1885, 0.0
      %v3331 = vsel %vm3292, %v1887, 0.0
      %v3332 = vsel %vm3293, %v1889, 0.0
      %v3333 = vsel %vm3294, %v1891, 0.0
      %v3334 = vsel %vm3295, %v1893, 0.0
      %v3335 = vsel %vm3296, %v1895, 0.0
      %v3336 = vsel %vm3297, %v1897, 0.0
      %v3337 = vsel %vm3298, %v1899, 0.0
      %v3338 = vsel %vm3299, %v3303, 0.0
      %v3339 = vsel %vm3300, %v3305, 0.0
      %v3340 = vpack.c.bf16 %v3309, %v3308
      %v3341 = vpack.c.bf16 %v3311, %v3310
      %v3342 = vpack.c.bf16 %v3313, %v3312
      %v3343 = vpack.c.bf16 %v3315, %v3314
      %v3344 = vpack.c.bf16 %v3317, %v3316
      %v3345 = vpack.c.bf16 %v3319, %v3318
      %v3346 = vpack.c.bf16 %v3321, %v3320
      %v3347 = vpack.c.bf16 %v3323, %v3322
      %v3348 = vpack.c.bf16 %v3325, %v3324
      %v3349 = vpack.c.bf16 %v3327, %v3326
      %v3350 = vpack.c.bf16 %v3329, %v3328
      %v3351 = vpack.c.bf16 %v3331, %v3330
      %v3352 = vpack.c.bf16 %v3333, %v3332
      %v3353 = vpack.c.bf16 %v3335, %v3334
      %v3354 = vpack.c.bf16 %v3337, %v3336
      %v3355 = vpack.c.bf16 %v3339, %v3338
      %s3356 = scalar_lea.vmem %s1, 20
      %v3357 = vld [vmem:[%s3356] sm:$0xf]
      %v3359 = vsel %vm1183, %v3340, 0
      %v3362 = vsel %vm1183, %v3341, 0
      %v3365 = vsel %vm1183, %v3342, 0
      %v3368 = vsel %vm1183, %v3343, 0
      %v3371 = vsel %vm1183, %v3344, 0
      %v3374 = vsel %vm1183, %v3345, 0
      %v3377 = vsel %vm1183, %v3346, 0
      %v3380 = vsel %vm1183, %v3347, 0
      %v3383 = vsel %vm1183, %v3348, 0
      %v3386 = vsel %vm1183, %v3349, 0
      %v3389 = vsel %vm1183, %v3350, 0
      %v3392 = vsel %vm1183, %v3351, 0
      %v3395 = vsel %vm1183, %v3352, 0
      %v3398 = vsel %vm1183, %v3353, 0
      %v3401 = vsel %vm1183, %v3354, 0
      %v3404 = vsel %vm1183, %v3355, 0
      %v3407 = vsel %vm1232, %v3357, 0
      %3409 = vmatprep.subr.bf16.mxu0 0
      %3410 = vmatpush1.bf16.msra.mxu0 %v3407
      %3411 = vmatprep.subr.bf16.mxu0 0
      %3412 = vmatpush1.bf16.msra.mxu0 0
      %3413 = vmatprep.subr.bf16.mxu0 0
      %3414 = vmatpush1.bf16.msra.mxu0 0
      %3415 = vmatprep.subr.bf16.mxu0 0
      %3416 = vmatpush1.bf16.msra.mxu0 0
      %3417 = vmatprep.subr.bf16.mxu0 0
      %3418 = vmatpush1.bf16.msra.mxu0 0
      %3419 = vmatprep.subr.bf16.mxu0 0
      %3420 = vmatpush1.bf16.msra.mxu0 0
      %3421 = vmatprep.subr.bf16.mxu0 0
      %3422 = vmatpush1.bf16.msra.mxu0 0
      %3423 = vmatprep.subr.bf16.mxu0 0
      %3424 = vmatpush1.bf16.msra.mxu0 0
      %3425 = vmatprep.subr.bf16.mxu0 0
      %3426 = vmatpush1.bf16.msra.mxu0 0
      %3427 = vmatprep.subr.bf16.mxu0 0
      %3428 = vmatpush1.bf16.msra.mxu0 0
      %3429 = vmatprep.subr.bf16.mxu0 0
      %3430 = vmatpush1.bf16.msra.mxu0 0
      %3431 = vmatprep.subr.bf16.mxu0 0
      %3432 = vmatpush1.bf16.msra.mxu0 0
      %3433 = vmatprep.subr.bf16.mxu0 0
      %3434 = vmatpush1.bf16.msra.mxu0 0
      %3435 = vmatprep.subr.bf16.mxu0 0
      %3436 = vmatpush1.bf16.msra.mxu0 0
      %3437 = vmatprep.subr.bf16.mxu0 0
      %3438 = vmatpush1.bf16.msra.mxu0 0
      %3439 = vmatprep.subr.bf16.mxu0 0
      %3440 = vmatpush1.bf16.msra.mxu0 0
      %3441 = vmatprep.mubr.bf16.mxu0 0
      %3442 = vmatmul.mubr.bf16.gmra.mrb[0].mxu0 %v3359
      %v3443 = vpop.f32.mrb[0].mxu0
      %v3444 = vadd.f32 0.0, %v3443
      %v3445 = vpop.f32.mrb[0].mxu0
      %v3446 = vpop.f32.mrb[0].mxu0
      %v3447 = vadd.f32 0.0, %v3446
      %v3448 = vpop.f32.mrb[0].mxu0
      %3449 = vmatprep.mubr.bf16.mxu0 0
      %3450 = vmatmul.mubr.bf16.gmra.mrb[0].mxu0 %v3362
      %v3451 = vpop.f32.mrb[0].mxu0
      %v3452 = vadd.f32 0.0, %v3451
      %v3453 = vpop.f32.mrb[0].mxu0
      %v3454 = vpop.f32.mrb[0].mxu0
      %v3455 = vadd.f32 0.0, %v3454
      %v3456 = vpop.f32.mrb[0].mxu0
      %3457 = vmatprep.mubr.bf16.mxu0 0
      %3458 = vmatmul.mubr.bf16.gmra.mrb[0].mxu0 %v3365
      %v3459 = vpop.f32.mrb[0].mxu0
      %v3460 = vadd.f32 0.0, %v3459
      %v3461 = vpop.f32.mrb[0].mxu0
      %v3462 = vpop.f32.mrb[0].mxu0
      %v3463 = vadd.f32 0.0, %v3462
      %v3464 = vpop.f32.mrb[0].mxu0
      %3465 = vmatprep.mubr.bf16.mxu0 0
      %3466 = vmatmul.mubr.bf16.gmra.mrb[0].mxu0 %v3368
      %v3467 = vpop.f32.mrb[0].mxu0
      %v3468 = vadd.f32 0.0, %v3467
      %v3469 = vpop.f32.mrb[0].mxu0
      %v3470 = vpop.f32.mrb[0].mxu0
      %v3471 = vadd.f32 0.0, %v3470
      %v3472 = vpop.f32.mrb[0].mxu0
      %3473 = vmatprep.mubr.bf16.mxu0 0
      %3474 = vmatmul.mubr.bf16.gmra.mrb[0].mxu0 %v3371
      %v3475 = vpop.f32.mrb[0].mxu0
      %v3476 = vadd.f32 0.0, %v3475
      %v3477 = vpop.f32.mrb[0].mxu0
      %v3478 = vpop.f32.mrb[0].mxu0
      %v3479 = vadd.f32 0.0, %v3478
      %v3480 = vpop.f32.mrb[0].mxu0
      %3481 = vmatprep.mubr.bf16.mxu0 0
      %3482 = vmatmul.mubr.bf16.gmra.mrb[0].mxu0 %v3374
      %v3483 = vpop.f32.mrb[0].mxu0
      %v3484 = vadd.f32 0.0, %v3483
      %v3485 = vpop.f32.mrb[0].mxu0
      %v3486 = vpop.f32.mrb[0].mxu0
      %v3487 = vadd.f32 0.0, %v3486
      %v3488 = vpop.f32.mrb[0].mxu0
      %3489 = vmatprep.mubr.bf16.mxu0 0
      %3490 = vmatmul.mubr.bf16.gmra.mrb[0].mxu0 %v3377
      %v3491 = vpop.f32.mrb[0].mxu0
      %v3492 = vadd.f32 0.0, %v3491
      %v3493 = vpop.f32.mrb[0].mxu0
      %v3494 = vpop.f32.mrb[0].mxu0
      %v3495 = vadd.f32 0.0, %v3494
      %v3496 = vpop.f32.mrb[0].mxu0
      %3497 = vmatprep.mubr.bf16.mxu0 0
      %3498 = vmatmul.mubr.bf16.gmra.mrb[0].mxu0 %v3380
      %v3499 = vpop.f32.mrb[0].mxu0
      %v3500 = vadd.f32 0.0, %v3499
      %v3501 = vpop.f32.mrb[0].mxu0
      %v3502 = vpop.f32.mrb[0].mxu0
      %v3503 = vadd.f32 0.0, %v3502
      %v3504 = vpop.f32.mrb[0].mxu0
      %3505 = vmatprep.mubr.bf16.mxu0 0
      %3506 = vmatmul.mubr.bf16.gmra.mrb[0].mxu0 %v3383
      %v3507 = vpop.f32.mrb[0].mxu0
      %v3508 = vadd.f32 0.0, %v3507
      %v3509 = vpop.f32.mrb[0].mxu0
      %v3510 = vpop.f32.mrb[0].mxu0
      %v3511 = vadd.f32 0.0, %v3510
      %v3512 = vpop.f32.mrb[0].mxu0
      %3513 = vmatprep.mubr.bf16.mxu0 0
      %3514 = vmatmul.mubr.bf16.gmra.mrb[0].mxu0 %v3386
      %v3515 = vpop.f32.mrb[0].mxu0
      %v3516 = vadd.f32 0.0, %v3515
      %v3517 = vpop.f32.mrb[0].mxu0
      %v3518 = vpop.f32.mrb[0].mxu0
      %v3519 = vadd.f32 0.0, %v3518
      %v3520 = vpop.f32.mrb[0].mxu0
      %3521 = vmatprep.mubr.bf16.mxu0 0
      %3522 = vmatmul.mubr.bf16.gmra.mrb[0].mxu0 %v3389
      %v3523 = vpop.f32.mrb[0].mxu0
      %v3524 = vadd.f32 0.0, %v3523
      %v3525 = vpop.f32.mrb[0].mxu0
      %v3526 = vpop.f32.mrb[0].mxu0
      %v3527 = vadd.f32 0.0, %v3526
      %v3528 = vpop.f32.mrb[0].mxu0
      %3529 = vmatprep.mubr.bf16.mxu0 0
      %3530 = vmatmul.mubr.bf16.gmra.mrb[0].mxu0 %v3392
      %v3531 = vpop.f32.mrb[0].mxu0
      %v3532 = vadd.f32 0.0, %v3531
      %v3533 = vpop.f32.mrb[0].mxu0
      %v3534 = vpop.f32.mrb[0].mxu0
      %v3535 = vadd.f32 0.0, %v3534
      %v3536 = vpop.f32.mrb[0].mxu0
      %3537 = vmatprep.mubr.bf16.mxu0 0
      %3538 = vmatmul.mubr.bf16.gmra.mrb[0].mxu0 %v3395
      %v3539 = vpop.f32.mrb[0].mxu0
      %v3540 = vadd.f32 0.0, %v3539
      %v3541 = vpop.f32.mrb[0].mxu0
      %v3542 = vpop.f32.mrb[0].mxu0
      %v3543 = vadd.f32 0.0, %v3542
      %v3544 = vpop.f32.mrb[0].mxu0
      %3545 = vmatprep.mubr.bf16.mxu0 0
      %3546 = vmatmul.mubr.bf16.gmra.mrb[0].mxu0 %v3398
      %v3547 = vpop.f32.mrb[0].mxu0
      %v3548 = vadd.f32 0.0, %v3547
      %v3549 = vpop.f32.mrb[0].mxu0
      %v3550 = vpop.f32.mrb[0].mxu0
      %v3551 = vadd.f32 0.0, %v3550
      %v3552 = vpop.f32.mrb[0].mxu0
      %3553 = vmatprep.mubr.bf16.mxu0 0
      %3554 = vmatmul.mubr.bf16.gmra.mrb[0].mxu0 %v3401
      %v3555 = vpop.f32.mrb[0].mxu0
      %v3556 = vadd.f32 0.0, %v3555
      %v3557 = vpop.f32.mrb[0].mxu0
      %v3558 = vpop.f32.mrb[0].mxu0
      %v3559 = vadd.f32 0.0, %v3558
      %v3560 = vpop.f32.mrb[0].mxu0
      %3561 = vmatprep.mubr.bf16.mxu0 0
      %3562 = vmatmul.mubr.bf16.gmra.mrb[0].mxu0 %v3404
      %v3563 = vpop.f32.mrb[0].mxu0
      %v3564 = vadd.f32 0.0, %v3563
      %v3565 = vpop.f32.mrb[0].mxu0
      %v3566 = vpop.f32.mrb[0].mxu0
      %v3567 = vadd.f32 0.0, %v3566
      %v3568 = vpop.f32.mrb[0].mxu0
      %3569 = vdwg.mxu0
      %v3570 = vadd.f32 %v3141, %v3444
      %v3571 = vadd.f32 %v3142, %v3447
      %v3572 = vadd.f32 %v3143, %v3452
      %v3573 = vadd.f32 %v3144, %v3455
      %v3574 = vadd.f32 %v3145, %v3460
      %v3575 = vadd.f32 %v3146, %v3463
      %v3576 = vadd.f32 %v3147, %v3468
      %v3577 = vadd.f32 %v3148, %v3471
      %v3578 = vadd.f32 %v3149, %v3476
      %v3579 = vadd.f32 %v3150, %v3479
      %v3580 = vadd.f32 %v3151, %v3484
      %v3581 = vadd.f32 %v3152, %v3487
      %v3582 = vadd.f32 %v3153, %v3492
      %v3583 = vadd.f32 %v3154, %v3495
      %v3584 = vadd.f32 %v3155, %v3500
      %v3585 = vadd.f32 %v3156, %v3503
      %v3586 = vadd.f32 %v3157, %v3508
      %v3587 = vadd.f32 %v3158, %v3511
      %v3588 = vadd.f32 %v3159, %v3516
      %v3589 = vadd.f32 %v3160, %v3519
      %v3590 = vadd.f32 %v3161, %v3524
      %v3591 = vadd.f32 %v3162, %v3527
      %v3592 = vadd.f32 %v3163, %v3532
      %v3593 = vadd.f32 %v3164, %v3535
      %v3594 = vadd.f32 %v3165, %v3540
      %v3595 = vadd.f32 %v3166, %v3543
      %v3596 = vadd.f32 %v3167, %v3548
      %v3597 = vadd.f32 %v3168, %v3551
      %v3598 = vadd.f32 %v3169, %v3556
      %v3599 = vadd.f32 %v3170, %v3559
      %v3600 = vadd.f32 %v3171, %v3564
      %v3601 = vadd.f32 %v3172, %v3567
      %v3602 = vadd.s32 %v377, 1
      %v3603 = vadd.s32 %v378, 1
      %v3604 = vadd.s32 %v379, 1
      %v3605 = vadd.s32 %v380, 1
      %v3606 = vadd.s32 %v381, 1
      %v3607 = vadd.s32 %v382, 1
      %v3608 = vadd.s32 %v383, 1
      %v3609 = vadd.s32 %v384, 1
      %v3610 = vadd.s32 %v385, 1
      %v3611 = vadd.s32 %v386, 1
      %v3612 = vadd.s32 %v387, 1
      %v3613 = vadd.s32 %v388, 1
      %v3614 = vadd.s32 %v389, 1
      %v3615 = vadd.s32 %v390, 1
      %v3616 = vadd.s32 %v391, 1
      %v3617 = vadd.s32 %v392, 1
      %v3618 = vadd.s32 %v393, 1
      %v3619 = vadd.s32 %v394, 1
      %v3620 = vadd.s32 %v395, 1
      %v3621 = vadd.s32 %v396, 1
      %v3622 = vadd.s32 %v397, 1
      %v3623 = vadd.s32 %v398, 1
      %v3624 = vadd.s32 %v399, 1
      %v3625 = vadd.s32 %v400, 1
      %v3626 = vadd.s32 %v401, 1
      %v3627 = vadd.s32 %v402, 1
      %v3628 = vadd.s32 %v403, 1
      %v3629 = vadd.s32 %v404, 1
      %v3630 = vadd.s32 %v405, 1
      %v3631 = vadd.s32 %v406, 1
      %v3632 = vadd.s32 %v407, 1
      %v3633 = vadd.s32 %v408, 1
      %vm3634 = vcmp.ge.s32.totalorder %v3602, 0
      %vm3635 = vcmp.ge.s32.totalorder %v3603, 0
      %vm3636 = vcmp.ge.s32.totalorder %v3604, 0
      %vm3637 = vcmp.ge.s32.totalorder %v3605, 0
      %vm3638 = vcmp.ge.s32.totalorder %v3606, 0
      %vm3639 = vcmp.ge.s32.totalorder %v3607, 0
      %vm3640 = vcmp.ge.s32.totalorder %v3608, 0
      %vm3641 = vcmp.ge.s32.totalorder %v3609, 0
      %vm3642 = vcmp.ge.s32.totalorder %v3610, 0
      %vm3643 = vcmp.ge.s32.totalorder %v3611, 0
      %vm3644 = vcmp.ge.s32.totalorder %v3612, 0
      %vm3645 = vcmp.ge.s32.totalorder %v3613, 0
      %vm3646 = vcmp.ge.s32.totalorder %v3614, 0
      %vm3647 = vcmp.ge.s32.totalorder %v3615, 0
      %vm3648 = vcmp.ge.s32.totalorder %v3616, 0
      %vm3649 = vcmp.ge.s32.totalorder %v3617, 0
      %vm3650 = vcmp.ge.s32.totalorder %v3618, 0
      %vm3651 = vcmp.ge.s32.totalorder %v3619, 0
      %vm3652 = vcmp.ge.s32.totalorder %v3620, 0
      %vm3653 = vcmp.ge.s32.totalorder %v3621, 0
      %vm3654 = vcmp.ge.s32.totalorder %v3622, 0
      %vm3655 = vcmp.ge.s32.totalorder %v3623, 0
      %vm3656 = vcmp.ge.s32.totalorder %v3624, 0
      %vm3657 = vcmp.ge.s32.totalorder %v3625, 0
      %vm3658 = vcmp.ge.s32.totalorder %v3626, 0
      %vm3659 = vcmp.ge.s32.totalorder %v3627, 0
      %vm3660 = vcmp.ge.s32.totalorder %v3628, 0
      %vm3661 = vcmp.ge.s32.totalorder %v3629, 0
      %vm3662 = vcmp.ge.s32.totalorder %v3630, 0
      %vm3663 = vcmp.ge.s32.totalorder %v3631, 0
      %vm3664 = vcmp.ge.s32.totalorder %v3632, 0
      %vm3665 = vcmp.ge.s32.totalorder %v3633, 0
      %vm3666 = vcmp.lt.s32.totalorder %v3602, 16
      %vm3667 = vcmp.lt.s32.totalorder %v3603, 16
      %vm3668 = vcmp.lt.s32.totalorder %v3604, 16
      %vm3669 = vcmp.lt.s32.totalorder %v3605, 16
      %vm3670 = vcmp.lt.s32.totalorder %v3606, 16
      %vm3671 = vcmp.lt.s32.totalorder %v3607, 16
      %vm3672 = vcmp.lt.s32.totalorder %v3608, 16
      %vm3673 = vcmp.lt.s32.totalorder %v3609, 16
      %vm3674 = vcmp.lt.s32.totalorder %v3610, 16
      %vm3675 = vcmp.lt.s32.totalorder %v3611, 16
      %vm3676 = vcmp.lt.s32.totalorder %v3612, 16
      %vm3677 = vcmp.lt.s32.totalorder %v3613, 16
      %vm3678 = vcmp.lt.s32.totalorder %v3614, 16
      %vm3679 = vcmp.lt.s32.totalorder %v3615, 16
      %vm3680 = vcmp.lt.s32.totalorder %v3616, 16
      %vm3681 = vcmp.lt.s32.totalorder %v3617, 16
      %vm3682 = vcmp.lt.s32.totalorder %v3618, 16
      %vm3683 = vcmp.lt.s32.totalorder %v3619, 16
      %vm3684 = vcmp.lt.s32.totalorder %v3620, 16
      %vm3685 = vcmp.lt.s32.totalorder %v3621, 16
      %vm3686 = vcmp.lt.s32.totalorder %v3622, 16
      %vm3687 = vcmp.lt.s32.totalorder %v3623, 16
      %vm3688 = vcmp.lt.s32.totalorder %v3624, 16
      %vm3689 = vcmp.lt.s32.totalorder %v3625, 16
      %vm3690 = vcmp.lt.s32.totalorder %v3626, 16
      %vm3691 = vcmp.lt.s32.totalorder %v3627, 16
      %vm3692 = vcmp.lt.s32.totalorder %v3628, 16
      %vm3693 = vcmp.lt.s32.totalorder %v3629, 16
      %vm3694 = vcmp.lt.s32.totalorder %v3630, 16
      %vm3695 = vcmp.lt.s32.totalorder %v3631, 16
      %vm3696 = vcmp.lt.s32.totalorder %v3632, 16
      %vm3697 = vcmp.lt.s32.totalorder %v3633, 16
      %vm3698 = vmand %vm3634, %vm3666
      %vm3699 = vmand %vm3635, %vm3667
      %vm3700 = vmand %vm3636, %vm3668
      %vm3701 = vmand %vm3637, %vm3669
      %vm3702 = vmand %vm3638, %vm3670
      %vm3703 = vmand %vm3639, %vm3671
      %vm3704 = vmand %vm3640, %vm3672
      %vm3705 = vmand %vm3641, %vm3673
      %vm3706 = vmand %vm3642, %vm3674
      %vm3707 = vmand %vm3643, %vm3675
      %vm3708 = vmand %vm3644, %vm3676
      %vm3709 = vmand %vm3645, %vm3677
      %vm3710 = vmand %vm3646, %vm3678
      %vm3711 = vmand %vm3647, %vm3679
      %vm3712 = vmand %vm3648, %vm3680
      %vm3713 = vmand %vm3649, %vm3681
      %vm3714 = vmand %vm3650, %vm3682
      %vm3715 = vmand %vm3651, %vm3683
      %vm3716 = vmand %vm3652, %vm3684
      %vm3717 = vmand %vm3653, %vm3685
      %vm3718 = vmand %vm3654, %vm3686
      %vm3719 = vmand %vm3655, %vm3687
      %vm3720 = vmand %vm3656, %vm3688
      %vm3721 = vmand %vm3657, %vm3689
      %vm3722 = vmand %vm3658, %vm3690
      %vm3723 = vmand %vm3659, %vm3691
      %vm3724 = vmand %vm3660, %vm3692
      %vm3725 = vmand %vm3661, %vm3693
      %vm3726 = vmand %vm3662, %vm3694
      %vm3727 = vmand %vm3663, %vm3695
      %vm3728 = vmand %vm3664, %vm3696
      %vm3729 = vmand %vm3665, %vm3697
      %vm3730 = vmand %vm3698, %vm569
      %vm3731 = vmand %vm3699, %vm570
      %vm3732 = vmand %vm3700, %vm571
      %vm3733 = vmand %vm3701, %vm572
      %vm3734 = vmand %vm3702, %vm573
      %vm3735 = vmand %vm3703, %vm574
      %vm3736 = vmand %vm3704, %vm575
      %vm3737 = vmand %vm3705, %vm576
      %vm3738 = vmand %vm3706, %vm577
      %vm3739 = vmand %vm3707, %vm578
      %vm3740 = vmand %vm3708, %vm579
      %vm3741 = vmand %vm3709, %vm580
      %vm3742 = vmand %vm3710, %vm581
      %vm3743 = vmand %vm3711, %vm582
      %vm3744 = vmand %vm3712, %vm583
      %vm3745 = vmand %vm3713, %vm584
      %vm3746 = vmand %vm3714, %vm585
      %vm3747 = vmand %vm3715, %vm586
      %vm3748 = vmand %vm3716, %vm587
      %vm3749 = vmand %vm3717, %vm588
      %vm3750 = vmand %vm3718, %vm589
      %vm3751 = vmand %vm3719, %vm590
      %vm3752 = vmand %vm3720, %vm591
      %vm3753 = vmand %vm3721, %vm592
      %vm3754 = vmand %vm3722, %vm593
      %vm3755 = vmand %vm3723, %vm594
      %vm3756 = vmand %vm3724, %vm595
      %vm3757 = vmand %vm3725, %vm596
      %vm3758 = vmand %vm3726, %vm597
      %vm3759 = vmand %vm3727, %vm598
      %vm3760 = vmand %vm3728, %vm599
      %vm3761 = vmand %vm3729, %vm600
      %vm3762 = vmand %vm3730, %vm633
      %vm3763 = vmand %vm3731, %vm634
      %vm3764 = vmand %vm3732, %vm635
      %vm3765 = vmand %vm3733, %vm636
      %vm3766 = vmand %vm3734, %vm637
      %vm3767 = vmand %vm3735, %vm638
      %vm3768 = vmand %vm3736, %vm639
      %vm3769 = vmand %vm3737, %vm640
      %vm3770 = vmand %vm3738, %vm641
      %vm3771 = vmand %vm3739, %vm642
      %vm3772 = vmand %vm3740, %vm643
      %vm3773 = vmand %vm3741, %vm644
      %vm3774 = vmand %vm3742, %vm645
      %vm3775 = vmand %vm3743, %vm646
      %vm3776 = vmand %vm3744, %vm647
      %vm3777 = vmand %vm3745, %vm648
      %vm3778 = vmand %vm3746, %vm649
      %vm3779 = vmand %vm3747, %vm650
      %vm3780 = vmand %vm3748, %vm651
      %vm3781 = vmand %vm3749, %vm652
      %vm3782 = vmand %vm3750, %vm653
      %vm3783 = vmand %vm3751, %vm654
      %vm3784 = vmand %vm3752, %vm655
      %vm3785 = vmand %vm3753, %vm656
      %vm3786 = vmand %vm3754, %vm657
      %vm3787 = vmand %vm3755, %vm658
      %vm3788 = vmand %vm3756, %vm659
      %vm3789 = vmand %vm3757, %vm660
      %vm3790 = vmand %vm3758, %vm661
      %vm3791 = vmand %vm3759, %vm662
      %vm3792 = vmand %vm3760, %vm663
      %vm3793 = vmand %vm3761, %vm664
      %v3794 = vsel %vm3762, 1, 0
      %v3795 = vsel %vm3763, 1, 0
      %v3796 = vsel %vm3764, 1, 0
      %v3797 = vsel %vm3765, 1, 0
      %v3798 = vsel %vm3766, 1, 0
      %v3799 = vsel %vm3767, 1, 0
      %v3800 = vsel %vm3768, 1, 0
      %v3801 = vsel %vm3769, 1, 0
      %v3802 = vsel %vm3770, 1, 0
      %v3803 = vsel %vm3771, 1, 0
      %v3804 = vsel %vm3772, 1, 0
      %v3805 = vsel %vm3773, 1, 0
      %v3806 = vsel %vm3774, 1, 0
      %v3807 = vsel %vm3775, 1, 0
      %v3808 = vsel %vm3776, 1, 0
      %v3809 = vsel %vm3777, 1, 0
      %v3810 = vsel %vm3778, 1, 0
      %v3811 = vsel %vm3779, 1, 0
      %v3812 = vsel %vm3780, 1, 0
      %v3813 = vsel %vm3781, 1, 0
      %v3814 = vsel %vm3782, 1, 0
      %v3815 = vsel %vm3783, 1, 0
      %v3816 = vsel %vm3784, 1, 0
      %v3817 = vsel %vm3785, 1, 0
      %v3818 = vsel %vm3786, 1, 0
      %v3819 = vsel %vm3787, 1, 0
      %v3820 = vsel %vm3788, 1, 0
      %v3821 = vsel %vm3789, 1, 0
      %v3822 = vsel %vm3790, 1, 0
      %v3823 = vsel %vm3791, 1, 0
      %v3824 = vsel %vm3792, 1, 0
      %v3825 = vsel %vm3793, 1, 0
      %vm3826 = vcmp.eq.s32.totalorder %v3794, 1
      %vm3827 = vcmp.eq.s32.totalorder %v3795, 1
      %vm3828 = vcmp.eq.s32.totalorder %v3796, 1
      %vm3829 = vcmp.eq.s32.totalorder %v3797, 1
      %vm3830 = vcmp.eq.s32.totalorder %v3798, 1
      %vm3831 = vcmp.eq.s32.totalorder %v3799, 1
      %vm3832 = vcmp.eq.s32.totalorder %v3800, 1
      %vm3833 = vcmp.eq.s32.totalorder %v3801, 1
      %vm3834 = vcmp.eq.s32.totalorder %v3802, 1
      %vm3835 = vcmp.eq.s32.totalorder %v3803, 1
      %vm3836 = vcmp.eq.s32.totalorder %v3804, 1
      %vm3837 = vcmp.eq.s32.totalorder %v3805, 1
      %vm3838 = vcmp.eq.s32.totalorder %v3806, 1
      %vm3839 = vcmp.eq.s32.totalorder %v3807, 1
      %vm3840 = vcmp.eq.s32.totalorder %v3808, 1
      %vm3841 = vcmp.eq.s32.totalorder %v3809, 1
      %vm3842 = vcmp.eq.s32.totalorder %v3810, 1
      %vm3843 = vcmp.eq.s32.totalorder %v3811, 1
      %vm3844 = vcmp.eq.s32.totalorder %v3812, 1
      %vm3845 = vcmp.eq.s32.totalorder %v3813, 1
      %vm3846 = vcmp.eq.s32.totalorder %v3814, 1
      %vm3847 = vcmp.eq.s32.totalorder %v3815, 1
      %vm3848 = vcmp.eq.s32.totalorder %v3816, 1
      %vm3849 = vcmp.eq.s32.totalorder %v3817, 1
      %vm3850 = vcmp.eq.s32.totalorder %v3818, 1
      %vm3851 = vcmp.eq.s32.totalorder %v3819, 1
      %vm3852 = vcmp.eq.s32.totalorder %v3820, 1
      %vm3853 = vcmp.eq.s32.totalorder %v3821, 1
      %vm3854 = vcmp.eq.s32.totalorder %v3822, 1
      %vm3855 = vcmp.eq.s32.totalorder %v3823, 1
      %vm3856 = vcmp.eq.s32.totalorder %v3824, 1
      %vm3857 = vcmp.eq.s32.totalorder %v3825, 1
      %v3859 = vrot.slane %v244, 7
      %v3860 = vsel %vm794, %v2453, %v3859
      %v3861 = vrot.slane %v245, 7
      %v3862 = vsel %vm794, %v3859, %v3861
      %v3865 = vsel %vm3826, %v805, 0.0
      %v3866 = vsel %vm3827, %v807, 0.0
      %v3867 = vsel %vm3828, %v809, 0.0
      %v3868 = vsel %vm3829, %v811, 0.0
      %v3869 = vsel %vm3830, %v813, 0.0
      %v3870 = vsel %vm3831, %v815, 0.0
      %v3871 = vsel %vm3832, %v817, 0.0
      %v3872 = vsel %vm3833, %v819, 0.0
      %v3873 = vsel %vm3834, %v821, 0.0
      %v3874 = vsel %vm3835, %v823, 0.0
      %v3875 = vsel %vm3836, %v825, 0.0
      %v3876 = vsel %vm3837, %v827, 0.0
      %v3877 = vsel %vm3838, %v829, 0.0
      %v3878 = vsel %vm3839, %v831, 0.0
      %v3879 = vsel %vm3840, %v833, 0.0
      %v3880 = vsel %vm3841, %v835, 0.0
      %v3881 = vsel %vm3842, %v837, 0.0
      %v3882 = vsel %vm3843, %v839, 0.0
      %v3883 = vsel %vm3844, %v841, 0.0
      %v3884 = vsel %vm3845, %v843, 0.0
      %v3885 = vsel %vm3846, %v845, 0.0
      %v3886 = vsel %vm3847, %v847, 0.0
      %v3887 = vsel %vm3848, %v849, 0.0
      %v3888 = vsel %vm3849, %v851, 0.0
      %v3889 = vsel %vm3850, %v853, 0.0
      %v3890 = vsel %vm3851, %v855, 0.0
      %v3891 = vsel %vm3852, %v857, 0.0
      %v3892 = vsel %vm3853, %v859, 0.0
      %v3893 = vsel %vm3854, %v2452, 0.0
      %v3894 = vsel %vm3855, %v2454, 0.0
      %v3895 = vsel %vm3856, %v3860, 0.0
      %v3896 = vsel %vm3857, %v3862, 0.0
      %v3897 = vpack.c.bf16 %v3866, %v3865
      %v3898 = vpack.c.bf16 %v3868, %v3867
      %v3899 = vpack.c.bf16 %v3870, %v3869
      %v3900 = vpack.c.bf16 %v3872, %v3871
      %v3901 = vpack.c.bf16 %v3874, %v3873
      %v3902 = vpack.c.bf16 %v3876, %v3875
      %v3903 = vpack.c.bf16 %v3878, %v3877
      %v3904 = vpack.c.bf16 %v3880, %v3879
      %v3905 = vpack.c.bf16 %v3882, %v3881
      %v3906 = vpack.c.bf16 %v3884, %v3883
      %v3907 = vpack.c.bf16 %v3886, %v3885
      %v3908 = vpack.c.bf16 %v3888, %v3887
      %v3909 = vpack.c.bf16 %v3890, %v3889
      %v3910 = vpack.c.bf16 %v3892, %v3891
      %v3911 = vpack.c.bf16 %v3894, %v3893
      %v3912 = vpack.c.bf16 %v3896, %v3895
      %s3913 = scalar_lea.vmem %s1, 24
      %v3914 = vld [vmem:[%s3913] sm:$0xf]
      %v3916 = vsel %vm1183, %v3897, 0
      %v3919 = vsel %vm1183, %v3898, 0
      %v3922 = vsel %vm1183, %v3899, 0
      %v3925 = vsel %vm1183, %v3900, 0
      %v3928 = vsel %vm1183, %v3901, 0
      %v3931 = vsel %vm1183, %v3902, 0
      %v3934 = vsel %vm1183, %v3903, 0
      %v3937 = vsel %vm1183, %v3904, 0
      %v3940 = vsel %vm1183, %v3905, 0
      %v3943 = vsel %vm1183, %v3906, 0
      %v3946 = vsel %vm1183, %v3907, 0
      %v3949 = vsel %vm1183, %v3908, 0
      %v3952 = vsel %vm1183, %v3909, 0
      %v3955 = vsel %vm1183, %v3910, 0
      %v3958 = vsel %vm1183, %v3911, 0
      %v3961 = vsel %vm1183, %v3912, 0
      %v3964 = vsel %vm1232, %v3914, 0
      %3966 = vmatprep.subr.bf16.mxu0 0
      %3967 = vmatpush1.bf16.msra.mxu0 %v3964
      %3968 = vmatprep.subr.bf16.mxu0 0
      %3969 = vmatpush1.bf16.msra.mxu0 0
      %3970 = vmatprep.subr.bf16.mxu0 0
      %3971 = vmatpush1.bf16.msra.mxu0 0
      %3972 = vmatprep.subr.bf16.mxu0 0
      %3973 = vmatpush1.bf16.msra.mxu0 0
      %3974 = vmatprep.subr.bf16.mxu0 0
      %3975 = vmatpush1.bf16.msra.mxu0 0
      %3976 = vmatprep.subr.bf16.mxu0 0
      %3977 = vmatpush1.bf16.msra.mxu0 0
      %3978 = vmatprep.subr.bf16.mxu0 0
      %3979 = vmatpush1.bf16.msra.mxu0 0
      %3980 = vmatprep.subr.bf16.mxu0 0
      %3981 = vmatpush1.bf16.msra.mxu0 0
      %3982 = vmatprep.subr.bf16.mxu0 0
      %3983 = vmatpush1.bf16.msra.mxu0 0
      %3984 = vmatprep.subr.bf16.mxu0 0
      %3985 = vmatpush1.bf16.msra.mxu0 0
      %3986 = vmatprep.subr.bf16.mxu0 0
      %3987 = vmatpush1.bf16.msra.mxu0 0
      %3988 = vmatprep.subr.bf16.mxu0 0
      %3989 = vmatpush1.bf16.msra.mxu0 0
      %3990 = vmatprep.subr.bf16.mxu0 0
      %3991 = vmatpush1.bf16.msra.mxu0 0
      %3992 = vmatprep.subr.bf16.mxu0 0
      %3993 = vmatpush1.bf16.msra.mxu0 0
      %3994 = vmatprep.subr.bf16.mxu0 0
      %3995 = vmatpush1.bf16.msra.mxu0 0
      %3996 = vmatprep.subr.bf16.mxu0 0
      %3997 = vmatpush1.bf16.msra.mxu0 0
      %3998 = vmatprep.mubr.bf16.mxu0 0
      %3999 = vmatmul.mubr.bf16.gmra.mrb[0].mxu0 %v3916
      %v4000 = vpop.f32.mrb[0].mxu0
      %v4001 = vadd.f32 0.0, %v4000
      %v4002 = vpop.f32.mrb[0].mxu0
      %v4003 = vpop.f32.mrb[0].mxu0
      %v4004 = vadd.f32 0.0, %v4003
      %v4005 = vpop.f32.mrb[0].mxu0
      %4006 = vmatprep.mubr.bf16.mxu0 0
      %4007 = vmatmul.mubr.bf16.gmra.mrb[0].mxu0 %v3919
      %v4008 = vpop.f32.mrb[0].mxu0
      %v4009 = vadd.f32 0.0, %v4008
      %v4010 = vpop.f32.mrb[0].mxu0
      %v4011 = vpop.f32.mrb[0].mxu0
      %v4012 = vadd.f32 0.0, %v4011
      %v4013 = vpop.f32.mrb[0].mxu0
      %4014 = vmatprep.mubr.bf16.mxu0 0
      %4015 = vmatmul.mubr.bf16.gmra.mrb[0].mxu0 %v3922
      %v4016 = vpop.f32.mrb[0].mxu0
      %v4017 = vadd.f32 0.0, %v4016
      %v4018 = vpop.f32.mrb[0].mxu0
      %v4019 = vpop.f32.mrb[0].mxu0
      %v4020 = vadd.f32 0.0, %v4019
      %v4021 = vpop.f32.mrb[0].mxu0
      %4022 = vmatprep.mubr.bf16.mxu0 0
      %4023 = vmatmul.mubr.bf16.gmra.mrb[0].mxu0 %v3925
      %v4024 = vpop.f32.mrb[0].mxu0
      %v4025 = vadd.f32 0.0, %v4024
      %v4026 = vpop.f32.mrb[0].mxu0
      %v4027 = vpop.f32.mrb[0].mxu0
      %v4028 = vadd.f32 0.0, %v4027
      %v4029 = vpop.f32.mrb[0].mxu0
      %4030 = vmatprep.mubr.bf16.mxu0 0
      %4031 = vmatmul.mubr.bf16.gmra.mrb[0].mxu0 %v3928
      %v4032 = vpop.f32.mrb[0].mxu0
      %v4033 = vadd.f32 0.0, %v4032
      %v4034 = vpop.f32.mrb[0].mxu0
      %v4035 = vpop.f32.mrb[0].mxu0
      %v4036 = vadd.f32 0.0, %v4035
      %v4037 = vpop.f32.mrb[0].mxu0
      %4038 = vmatprep.mubr.bf16.mxu0 0
      %4039 = vmatmul.mubr.bf16.gmra.mrb[0].mxu0 %v3931
      %v4040 = vpop.f32.mrb[0].mxu0
      %v4041 = vadd.f32 0.0, %v4040
      %v4042 = vpop.f32.mrb[0].mxu0
      %v4043 = vpop.f32.mrb[0].mxu0
      %v4044 = vadd.f32 0.0, %v4043
      %v4045 = vpop.f32.mrb[0].mxu0
      %4046 = vmatprep.mubr.bf16.mxu0 0
      %4047 = vmatmul.mubr.bf16.gmra.mrb[0].mxu0 %v3934
      %v4048 = vpop.f32.mrb[0].mxu0
      %v4049 = vadd.f32 0.0, %v4048
      %v4050 = vpop.f32.mrb[0].mxu0
      %v4051 = vpop.f32.mrb[0].mxu0
      %v4052 = vadd.f32 0.0, %v4051
      %v4053 = vpop.f32.mrb[0].mxu0
      %4054 = vmatprep.mubr.bf16.mxu0 0
      %4055 = vmatmul.mubr.bf16.gmra.mrb[0].mxu0 %v3937
      %v4056 = vpop.f32.mrb[0].mxu0
      %v4057 = vadd.f32 0.0, %v4056
      %v4058 = vpop.f32.mrb[0].mxu0
      %v4059 = vpop.f32.mrb[0].mxu0
      %v4060 = vadd.f32 0.0, %v4059
      %v4061 = vpop.f32.mrb[0].mxu0
      %4062 = vmatprep.mubr.bf16.mxu0 0
      %4063 = vmatmul.mubr.bf16.gmra.mrb[0].mxu0 %v3940
      %v4064 = vpop.f32.mrb[0].mxu0
      %v4065 = vadd.f32 0.0, %v4064
      %v4066 = vpop.f32.mrb[0].mxu0
      %v4067 = vpop.f32.mrb[0].mxu0
      %v4068 = vadd.f32 0.0, %v4067
      %v4069 = vpop.f32.mrb[0].mxu0
      %4070 = vmatprep.mubr.bf16.mxu0 0
      %4071 = vmatmul.mubr.bf16.gmra.mrb[0].mxu0 %v3943
      %v4072 = vpop.f32.mrb[0].mxu0
      %v4073 = vadd.f32 0.0, %v4072
      %v4074 = vpop.f32.mrb[0].mxu0
      %v4075 = vpop.f32.mrb[0].mxu0
      %v4076 = vadd.f32 0.0, %v4075
      %v4077 = vpop.f32.mrb[0].mxu0
      %4078 = vmatprep.mubr.bf16.mxu0 0
      %4079 = vmatmul.mubr.bf16.gmra.mrb[0].mxu0 %v3946
      %v4080 = vpop.f32.mrb[0].mxu0
      %v4081 = vadd.f32 0.0, %v4080
      %v4082 = vpop.f32.mrb[0].mxu0
      %v4083 = vpop.f32.mrb[0].mxu0
      %v4084 = vadd.f32 0.0, %v4083
      %v4085 = vpop.f32.mrb[0].mxu0
      %4086 = vmatprep.mubr.bf16.mxu0 0
      %4087 = vmatmul.mubr.bf16.gmra.mrb[0].mxu0 %v3949
      %v4088 = vpop.f32.mrb[0].mxu0
      %v4089 = vadd.f32 0.0, %v4088
      %v4090 = vpop.f32.mrb[0].mxu0
      %v4091 = vpop.f32.mrb[0].mxu0
      %v4092 = vadd.f32 0.0, %v4091
      %v4093 = vpop.f32.mrb[0].mxu0
      %4094 = vmatprep.mubr.bf16.mxu0 0
      %4095 = vmatmul.mubr.bf16.gmra.mrb[0].mxu0 %v3952
      %v4096 = vpop.f32.mrb[0].mxu0
      %v4097 = vadd.f32 0.0, %v4096
      %v4098 = vpop.f32.mrb[0].mxu0
      %v4099 = vpop.f32.mrb[0].mxu0
      %v4100 = vadd.f32 0.0, %v4099
      %v4101 = vpop.f32.mrb[0].mxu0
      %4102 = vmatprep.mubr.bf16.mxu0 0
      %4103 = vmatmul.mubr.bf16.gmra.mrb[0].mxu0 %v3955
      %v4104 = vpop.f32.mrb[0].mxu0
      %v4105 = vadd.f32 0.0, %v4104
      %v4106 = vpop.f32.mrb[0].mxu0
      %v4107 = vpop.f32.mrb[0].mxu0
      %v4108 = vadd.f32 0.0, %v4107
      %v4109 = vpop.f32.mrb[0].mxu0
      %4110 = vmatprep.mubr.bf16.mxu0 0
      %4111 = vmatmul.mubr.bf16.gmra.mrb[0].mxu0 %v3958
      %v4112 = vpop.f32.mrb[0].mxu0
      %v4113 = vadd.f32 0.0, %v4112
      %v4114 = vpop.f32.mrb[0].mxu0
      %v4115 = vpop.f32.mrb[0].mxu0
      %v4116 = vadd.f32 0.0, %v4115
      %v4117 = vpop.f32.mrb[0].mxu0
      %4118 = vmatprep.mubr.bf16.mxu0 0
      %4119 = vmatmul.mubr.bf16.gmra.mrb[0].mxu0 %v3961
      %v4120 = vpop.f32.mrb[0].mxu0
      %v4121 = vadd.f32 0.0, %v4120
      %v4122 = vpop.f32.mrb[0].mxu0
      %v4123 = vpop.f32.mrb[0].mxu0
      %v4124 = vadd.f32 0.0, %v4123
      %v4125 = vpop.f32.mrb[0].mxu0
      %4126 = vdwg.mxu0
      %v4127 = vadd.f32 %v3570, %v4001
      %v4128 = vadd.f32 %v3571, %v4004
      %v4129 = vadd.f32 %v3572, %v4009
      %v4130 = vadd.f32 %v3573, %v4012
      %v4131 = vadd.f32 %v3574, %v4017
      %v4132 = vadd.f32 %v3575, %v4020
      %v4133 = vadd.f32 %v3576, %v4025
      %v4134 = vadd.f32 %v3577, %v4028
      %v4135 = vadd.f32 %v3578, %v4033
      %v4136 = vadd.f32 %v3579, %v4036
      %v4137 = vadd.f32 %v3580, %v4041
      %v4138 = vadd.f32 %v3581, %v4044
      %v4139 = vadd.f32 %v3582, %v4049
      %v4140 = vadd.f32 %v3583, %v4052
      %v4141 = vadd.f32 %v3584, %v4057
      %v4142 = vadd.f32 %v3585, %v4060
      %v4143 = vadd.f32 %v3586, %v4065
      %v4144 = vadd.f32 %v3587, %v4068
      %v4145 = vadd.f32 %v3588, %v4073
      %v4146 = vadd.f32 %v3589, %v4076
      %v4147 = vadd.f32 %v3590, %v4081
      %v4148 = vadd.f32 %v3591, %v4084
      %v4149 = vadd.f32 %v3592, %v4089
      %v4150 = vadd.f32 %v3593, %v4092
      %v4151 = vadd.f32 %v3594, %v4097
      %v4152 = vadd.f32 %v3595, %v4100
      %v4153 = vadd.f32 %v3596, %v4105
      %v4154 = vadd.f32 %v3597, %v4108
      %v4155 = vadd.f32 %v3598, %v4113
      %v4156 = vadd.f32 %v3599, %v4116
      %v4157 = vadd.f32 %v3600, %v4121
      %v4158 = vadd.f32 %v3601, %v4124
      %vm4159 = vmand %vm3698, %vm941
      %vm4160 = vmand %vm3699, %vm942
      %vm4161 = vmand %vm3700, %vm943
      %vm4162 = vmand %vm3701, %vm944
      %vm4163 = vmand %vm3702, %vm945
      %vm4164 = vmand %vm3703, %vm946
      %vm4165 = vmand %vm3704, %vm947
      %vm4166 = vmand %vm3705, %vm948
      %vm4167 = vmand %vm3706, %vm949
      %vm4168 = vmand %vm3707, %vm950
      %vm4169 = vmand %vm3708, %vm951
      %vm4170 = vmand %vm3709, %vm952
      %vm4171 = vmand %vm3710, %vm953
      %vm4172 = vmand %vm3711, %vm954
      %vm4173 = vmand %vm3712, %vm955
      %vm4174 = vmand %vm3713, %vm956
      %vm4175 = vmand %vm3714, %vm957
      %vm4176 = vmand %vm3715, %vm958
      %vm4177 = vmand %vm3716, %vm959
      %vm4178 = vmand %vm3717, %vm960
      %vm4179 = vmand %vm3718, %vm961
      %vm4180 = vmand %vm3719, %vm962
      %vm4181 = vmand %vm3720, %vm963
      %vm4182 = vmand %vm3721, %vm964
      %vm4183 = vmand %vm3722, %vm965
      %vm4184 = vmand %vm3723, %vm966
      %vm4185 = vmand %vm3724, %vm967
      %vm4186 = vmand %vm3725, %vm968
      %vm4187 = vmand %vm3726, %vm969
      %vm4188 = vmand %vm3727, %vm970
      %vm4189 = vmand %vm3728, %vm971
      %vm4190 = vmand %vm3729, %vm972
      %vm4191 = vmand %vm4159, %vm1005
      %vm4192 = vmand %vm4160, %vm1006
      %vm4193 = vmand %vm4161, %vm1007
      %vm4194 = vmand %vm4162, %vm1008
      %vm4195 = vmand %vm4163, %vm1009
      %vm4196 = vmand %vm4164, %vm1010
      %vm4197 = vmand %vm4165, %vm1011
      %vm4198 = vmand %vm4166, %vm1012
      %vm4199 = vmand %vm4167, %vm1013
      %vm4200 = vmand %vm4168, %vm1014
      %vm4201 = vmand %vm4169, %vm1015
      %vm4202 = vmand %vm4170, %vm1016
      %vm4203 = vmand %vm4171, %vm1017
      %vm4204 = vmand %vm4172, %vm1018
      %vm4205 = vmand %vm4173, %vm1019
      %vm4206 = vmand %vm4174, %vm1020
      %vm4207 = vmand %vm4175, %vm1021
      %vm4208 = vmand %vm4176, %vm1022
      %vm4209 = vmand %vm4177, %vm1023
      %vm4210 = vmand %vm4178, %vm1024
      %vm4211 = vmand %vm4179, %vm1025
      %vm4212 = vmand %vm4180, %vm1026
      %vm4213 = vmand %vm4181, %vm1027
      %vm4214 = vmand %vm4182, %vm1028
      %vm4215 = vmand %vm4183, %vm1029
      %vm4216 = vmand %vm4184, %vm1030
      %vm4217 = vmand %vm4185, %vm1031
      %vm4218 = vmand %vm4186, %vm1032
      %vm4219 = vmand %vm4187, %vm1033
      %vm4220 = vmand %vm4188, %vm1034
      %vm4221 = vmand %vm4189, %vm1035
      %vm4222 = vmand %vm4190, %vm1036
      %v4223 = vsel %vm4191, 1, 0
      %v4224 = vsel %vm4192, 1, 0
      %v4225 = vsel %vm4193, 1, 0
      %v4226 = vsel %vm4194, 1, 0
      %v4227 = vsel %vm4195, 1, 0
      %v4228 = vsel %vm4196, 1, 0
      %v4229 = vsel %vm4197, 1, 0
      %v4230 = vsel %vm4198, 1, 0
      %v4231 = vsel %vm4199, 1, 0
      %v4232 = vsel %vm4200, 1, 0
      %v4233 = vsel %vm4201, 1, 0
      %v4234 = vsel %vm4202, 1, 0
      %v4235 = vsel %vm4203, 1, 0
      %v4236 = vsel %vm4204, 1, 0
      %v4237 = vsel %vm4205, 1, 0
      %v4238 = vsel %vm4206, 1, 0
      %v4239 = vsel %vm4207, 1, 0
      %v4240 = vsel %vm4208, 1, 0
      %v4241 = vsel %vm4209, 1, 0
      %v4242 = vsel %vm4210, 1, 0
      %v4243 = vsel %vm4211, 1, 0
      %v4244 = vsel %vm4212, 1, 0
      %v4245 = vsel %vm4213, 1, 0
      %v4246 = vsel %vm4214, 1, 0
      %v4247 = vsel %vm4215, 1, 0
      %v4248 = vsel %vm4216, 1, 0
      %v4249 = vsel %vm4217, 1, 0
      %v4250 = vsel %vm4218, 1, 0
      %v4251 = vsel %vm4219, 1, 0
      %v4252 = vsel %vm4220, 1, 0
      %v4253 = vsel %vm4221, 1, 0
      %v4254 = vsel %vm4222, 1, 0
      %vm4255 = vcmp.eq.s32.totalorder %v4223, 1
      %vm4256 = vcmp.eq.s32.totalorder %v4224, 1
      %vm4257 = vcmp.eq.s32.totalorder %v4225, 1
      %vm4258 = vcmp.eq.s32.totalorder %v4226, 1
      %vm4259 = vcmp.eq.s32.totalorder %v4227, 1
      %vm4260 = vcmp.eq.s32.totalorder %v4228, 1
      %vm4261 = vcmp.eq.s32.totalorder %v4229, 1
      %vm4262 = vcmp.eq.s32.totalorder %v4230, 1
      %vm4263 = vcmp.eq.s32.totalorder %v4231, 1
      %vm4264 = vcmp.eq.s32.totalorder %v4232, 1
      %vm4265 = vcmp.eq.s32.totalorder %v4233, 1
      %vm4266 = vcmp.eq.s32.totalorder %v4234, 1
      %vm4267 = vcmp.eq.s32.totalorder %v4235, 1
      %vm4268 = vcmp.eq.s32.totalorder %v4236, 1
      %vm4269 = vcmp.eq.s32.totalorder %v4237, 1
      %vm4270 = vcmp.eq.s32.totalorder %v4238, 1
      %vm4271 = vcmp.eq.s32.totalorder %v4239, 1
      %vm4272 = vcmp.eq.s32.totalorder %v4240, 1
      %vm4273 = vcmp.eq.s32.totalorder %v4241, 1
      %vm4274 = vcmp.eq.s32.totalorder %v4242, 1
      %vm4275 = vcmp.eq.s32.totalorder %v4243, 1
      %vm4276 = vcmp.eq.s32.totalorder %v4244, 1
      %vm4277 = vcmp.eq.s32.totalorder %v4245, 1
      %vm4278 = vcmp.eq.s32.totalorder %v4246, 1
      %vm4279 = vcmp.eq.s32.totalorder %v4247, 1
      %vm4280 = vcmp.eq.s32.totalorder %v4248, 1
      %vm4281 = vcmp.eq.s32.totalorder %v4249, 1
      %vm4282 = vcmp.eq.s32.totalorder %v4250, 1
      %vm4283 = vcmp.eq.s32.totalorder %v4251, 1
      %vm4284 = vcmp.eq.s32.totalorder %v4252, 1
      %vm4285 = vcmp.eq.s32.totalorder %v4253, 1
      %vm4286 = vcmp.eq.s32.totalorder %v4254, 1
      %v4287 = vsel %vm4255, %v214, 0.0
      %v4288 = vsel %vm4256, %v215, 0.0
      %v4289 = vsel %vm4257, %v216, 0.0
      %v4290 = vsel %vm4258, %v217, 0.0
      %v4291 = vsel %vm4259, %v218, 0.0
      %v4292 = vsel %vm4260, %v219, 0.0
      %v4293 = vsel %vm4261, %v220, 0.0
      %v4294 = vsel %vm4262, %v221, 0.0
      %v4295 = vsel %vm4263, %v222, 0.0
      %v4296 = vsel %vm4264, %v223, 0.0
      %v4297 = vsel %vm4265, %v224, 0.0
      %v4298 = vsel %vm4266, %v225, 0.0
      %v4299 = vsel %vm4267, %v226, 0.0
      %v4300 = vsel %vm4268, %v227, 0.0
      %v4301 = vsel %vm4269, %v228, 0.0
      %v4302 = vsel %vm4270, %v229, 0.0
      %v4303 = vsel %vm4271, %v230, 0.0
      %v4304 = vsel %vm4272, %v231, 0.0
      %v4305 = vsel %vm4273, %v232, 0.0
      %v4306 = vsel %vm4274, %v233, 0.0
      %v4307 = vsel %vm4275, %v234, 0.0
      %v4308 = vsel %vm4276, %v235, 0.0
      %v4309 = vsel %vm4277, %v236, 0.0
      %v4310 = vsel %vm4278, %v237, 0.0
      %v4311 = vsel %vm4279, %v238, 0.0
      %v4312 = vsel %vm4280, %v239, 0.0
      %v4313 = vsel %vm4281, %v240, 0.0
      %v4314 = vsel %vm4282, %v241, 0.0
      %v4315 = vsel %vm4283, %v242, 0.0
      %v4316 = vsel %vm4284, %v243, 0.0
      %v4317 = vsel %vm4285, %v244, 0.0
      %v4318 = vsel %vm4286, %v245, 0.0
      %v4319 = vpack.c.bf16 %v4288, %v4287
      %v4320 = vpack.c.bf16 %v4290, %v4289
      %v4321 = vpack.c.bf16 %v4292, %v4291
      %v4322 = vpack.c.bf16 %v4294, %v4293
      %v4323 = vpack.c.bf16 %v4296, %v4295
      %v4324 = vpack.c.bf16 %v4298, %v4297
      %v4325 = vpack.c.bf16 %v4300, %v4299
      %v4326 = vpack.c.bf16 %v4302, %v4301
      %v4327 = vpack.c.bf16 %v4304, %v4303
      %v4328 = vpack.c.bf16 %v4306, %v4305
      %v4329 = vpack.c.bf16 %v4308, %v4307
      %v4330 = vpack.c.bf16 %v4310, %v4309
      %v4331 = vpack.c.bf16 %v4312, %v4311
      %v4332 = vpack.c.bf16 %v4314, %v4313
      %v4333 = vpack.c.bf16 %v4316, %v4315
      %v4334 = vpack.c.bf16 %v4318, %v4317
      %s4335 = scalar_lea.vmem %s1, 28
      %v4336 = vld [vmem:[%s4335] sm:$0xf]
      %v4338 = vsel %vm1183, %v4319, 0
      %v4341 = vsel %vm1183, %v4320, 0
      %v4344 = vsel %vm1183, %v4321, 0
      %v4347 = vsel %vm1183, %v4322, 0
      %v4350 = vsel %vm1183, %v4323, 0
      %v4353 = vsel %vm1183, %v4324, 0
      %v4356 = vsel %vm1183, %v4325, 0
      %v4359 = vsel %vm1183, %v4326, 0
      %v4362 = vsel %vm1183, %v4327, 0
      %v4365 = vsel %vm1183, %v4328, 0
      %v4368 = vsel %vm1183, %v4329, 0
      %v4371 = vsel %vm1183, %v4330, 0
      %v4374 = vsel %vm1183, %v4331, 0
      %v4377 = vsel %vm1183, %v4332, 0
      %v4380 = vsel %vm1183, %v4333, 0
      %v4383 = vsel %vm1183, %v4334, 0
      %v4386 = vsel %vm1232, %v4336, 0
      %4388 = vmatprep.subr.bf16.mxu0 0
      %4389 = vmatpush1.bf16.msra.mxu0 %v4386
      %4390 = vmatprep.subr.bf16.mxu0 0
      %4391 = vmatpush1.bf16.msra.mxu0 0
      %4392 = vmatprep.subr.bf16.mxu0 0
      %4393 = vmatpush1.bf16.msra.mxu0 0
      %4394 = vmatprep.subr.bf16.mxu0 0
      %4395 = vmatpush1.bf16.msra.mxu0 0
      %4396 = vmatprep.subr.bf16.mxu0 0
      %4397 = vmatpush1.bf16.msra.mxu0 0
      %4398 = vmatprep.subr.bf16.mxu0 0
      %4399 = vmatpush1.bf16.msra.mxu0 0
      %4400 = vmatprep.subr.bf16.mxu0 0
      %4401 = vmatpush1.bf16.msra.mxu0 0
      %4402 = vmatprep.subr.bf16.mxu0 0
      %4403 = vmatpush1.bf16.msra.mxu0 0
      %4404 = vmatprep.subr.bf16.mxu0 0
      %4405 = vmatpush1.bf16.msra.mxu0 0
      %4406 = vmatprep.subr.bf16.mxu0 0
      %4407 = vmatpush1.bf16.msra.mxu0 0
      %4408 = vmatprep.subr.bf16.mxu0 0
      %4409 = vmatpush1.bf16.msra.mxu0 0
      %4410 = vmatprep.subr.bf16.mxu0 0
      %4411 = vmatpush1.bf16.msra.mxu0 0
      %4412 = vmatprep.subr.bf16.mxu0 0
      %4413 = vmatpush1.bf16.msra.mxu0 0
      %4414 = vmatprep.subr.bf16.mxu0 0
      %4415 = vmatpush1.bf16.msra.mxu0 0
      %4416 = vmatprep.subr.bf16.mxu0 0
      %4417 = vmatpush1.bf16.msra.mxu0 0
      %4418 = vmatprep.subr.bf16.mxu0 0
      %4419 = vmatpush1.bf16.msra.mxu0 0
      %4420 = vmatprep.mubr.bf16.mxu0 0
      %4421 = vmatmul.mubr.bf16.gmra.mrb[0].mxu0 %v4338
      %v4422 = vpop.f32.mrb[0].mxu0
      %v4423 = vadd.f32 0.0, %v4422
      %v4424 = vpop.f32.mrb[0].mxu0
      %v4425 = vpop.f32.mrb[0].mxu0
      %v4426 = vadd.f32 0.0, %v4425
      %v4427 = vpop.f32.mrb[0].mxu0
      %4428 = vmatprep.mubr.bf16.mxu0 0
      %4429 = vmatmul.mubr.bf16.gmra.mrb[0].mxu0 %v4341
      %v4430 = vpop.f32.mrb[0].mxu0
      %v4431 = vadd.f32 0.0, %v4430
      %v4432 = vpop.f32.mrb[0].mxu0
      %v4433 = vpop.f32.mrb[0].mxu0
      %v4434 = vadd.f32 0.0, %v4433
      %v4435 = vpop.f32.mrb[0].mxu0
      %4436 = vmatprep.mubr.bf16.mxu0 0
      %4437 = vmatmul.mubr.bf16.gmra.mrb[0].mxu0 %v4344
      %v4438 = vpop.f32.mrb[0].mxu0
      %v4439 = vadd.f32 0.0, %v4438
      %v4440 = vpop.f32.mrb[0].mxu0
      %v4441 = vpop.f32.mrb[0].mxu0
      %v4442 = vadd.f32 0.0, %v4441
      %v4443 = vpop.f32.mrb[0].mxu0
      %4444 = vmatprep.mubr.bf16.mxu0 0
      %4445 = vmatmul.mubr.bf16.gmra.mrb[0].mxu0 %v4347
      %v4446 = vpop.f32.mrb[0].mxu0
      %v4447 = vadd.f32 0.0, %v4446
      %v4448 = vpop.f32.mrb[0].mxu0
      %v4449 = vpop.f32.mrb[0].mxu0
      %v4450 = vadd.f32 0.0, %v4449
      %v4451 = vpop.f32.mrb[0].mxu0
      %4452 = vmatprep.mubr.bf16.mxu0 0
      %4453 = vmatmul.mubr.bf16.gmra.mrb[0].mxu0 %v4350
      %v4454 = vpop.f32.mrb[0].mxu0
      %v4455 = vadd.f32 0.0, %v4454
      %v4456 = vpop.f32.mrb[0].mxu0
      %v4457 = vpop.f32.mrb[0].mxu0
      %v4458 = vadd.f32 0.0, %v4457
      %v4459 = vpop.f32.mrb[0].mxu0
      %4460 = vmatprep.mubr.bf16.mxu0 0
      %4461 = vmatmul.mubr.bf16.gmra.mrb[0].mxu0 %v4353
      %v4462 = vpop.f32.mrb[0].mxu0
      %v4463 = vadd.f32 0.0, %v4462
      %v4464 = vpop.f32.mrb[0].mxu0
      %v4465 = vpop.f32.mrb[0].mxu0
      %v4466 = vadd.f32 0.0, %v4465
      %v4467 = vpop.f32.mrb[0].mxu0
      %4468 = vmatprep.mubr.bf16.mxu0 0
      %4469 = vmatmul.mubr.bf16.gmra.mrb[0].mxu0 %v4356
      %v4470 = vpop.f32.mrb[0].mxu0
      %v4471 = vadd.f32 0.0, %v4470
      %v4472 = vpop.f32.mrb[0].mxu0
      %v4473 = vpop.f32.mrb[0].mxu0
      %v4474 = vadd.f32 0.0, %v4473
      %v4475 = vpop.f32.mrb[0].mxu0
      %4476 = vmatprep.mubr.bf16.mxu0 0
      %4477 = vmatmul.mubr.bf16.gmra.mrb[0].mxu0 %v4359
      %v4478 = vpop.f32.mrb[0].mxu0
      %v4479 = vadd.f32 0.0, %v4478
      %v4480 = vpop.f32.mrb[0].mxu0
      %v4481 = vpop.f32.mrb[0].mxu0
      %v4482 = vadd.f32 0.0, %v4481
      %v4483 = vpop.f32.mrb[0].mxu0
      %4484 = vmatprep.mubr.bf16.mxu0 0
      %4485 = vmatmul.mubr.bf16.gmra.mrb[0].mxu0 %v4362
      %v4486 = vpop.f32.mrb[0].mxu0
      %v4487 = vadd.f32 0.0, %v4486
      %v4488 = vpop.f32.mrb[0].mxu0
      %v4489 = vpop.f32.mrb[0].mxu0
      %v4490 = vadd.f32 0.0, %v4489
      %v4491 = vpop.f32.mrb[0].mxu0
      %4492 = vmatprep.mubr.bf16.mxu0 0
      %4493 = vmatmul.mubr.bf16.gmra.mrb[0].mxu0 %v4365
      %v4494 = vpop.f32.mrb[0].mxu0
      %v4495 = vadd.f32 0.0, %v4494
      %v4496 = vpop.f32.mrb[0].mxu0
      %v4497 = vpop.f32.mrb[0].mxu0
      %v4498 = vadd.f32 0.0, %v4497
      %v4499 = vpop.f32.mrb[0].mxu0
      %4500 = vmatprep.mubr.bf16.mxu0 0
      %4501 = vmatmul.mubr.bf16.gmra.mrb[0].mxu0 %v4368
      %v4502 = vpop.f32.mrb[0].mxu0
      %v4503 = vadd.f32 0.0, %v4502
      %v4504 = vpop.f32.mrb[0].mxu0
      %v4505 = vpop.f32.mrb[0].mxu0
      %v4506 = vadd.f32 0.0, %v4505
      %v4507 = vpop.f32.mrb[0].mxu0
      %4508 = vmatprep.mubr.bf16.mxu0 0
      %4509 = vmatmul.mubr.bf16.gmra.mrb[0].mxu0 %v4371
      %v4510 = vpop.f32.mrb[0].mxu0
      %v4511 = vadd.f32 0.0, %v4510
      %v4512 = vpop.f32.mrb[0].mxu0
      %v4513 = vpop.f32.mrb[0].mxu0
      %v4514 = vadd.f32 0.0, %v4513
      %v4515 = vpop.f32.mrb[0].mxu0
      %4516 = vmatprep.mubr.bf16.mxu0 0
      %4517 = vmatmul.mubr.bf16.gmra.mrb[0].mxu0 %v4374
      %v4518 = vpop.f32.mrb[0].mxu0
      %v4519 = vadd.f32 0.0, %v4518
      %v4520 = vpop.f32.mrb[0].mxu0
      %v4521 = vpop.f32.mrb[0].mxu0
      %v4522 = vadd.f32 0.0, %v4521
      %v4523 = vpop.f32.mrb[0].mxu0
      %4524 = vmatprep.mubr.bf16.mxu0 0
      %4525 = vmatmul.mubr.bf16.gmra.mrb[0].mxu0 %v4377
      %v4526 = vpop.f32.mrb[0].mxu0
      %v4527 = vadd.f32 0.0, %v4526
      %v4528 = vpop.f32.mrb[0].mxu0
      %v4529 = vpop.f32.mrb[0].mxu0
      %v4530 = vadd.f32 0.0, %v4529
      %v4531 = vpop.f32.mrb[0].mxu0
      %4532 = vmatprep.mubr.bf16.mxu0 0
      %4533 = vmatmul.mubr.bf16.gmra.mrb[0].mxu0 %v4380
      %v4534 = vpop.f32.mrb[0].mxu0
      %v4535 = vadd.f32 0.0, %v4534
      %v4536 = vpop.f32.mrb[0].mxu0
      %v4537 = vpop.f32.mrb[0].mxu0
      %v4538 = vadd.f32 0.0, %v4537
      %v4539 = vpop.f32.mrb[0].mxu0
      %4540 = vmatprep.mubr.bf16.mxu0 0
      %4541 = vmatmul.mubr.bf16.gmra.mrb[0].mxu0 %v4383
      %v4542 = vpop.f32.mrb[0].mxu0
      %v4543 = vadd.f32 0.0, %v4542
      %v4544 = vpop.f32.mrb[0].mxu0
      %v4545 = vpop.f32.mrb[0].mxu0
      %v4546 = vadd.f32 0.0, %v4545
      %v4547 = vpop.f32.mrb[0].mxu0
      %4548 = vdwg.mxu0
      %v4549 = vadd.f32 %v4127, %v4423
      %v4550 = vadd.f32 %v4128, %v4426
      %v4551 = vadd.f32 %v4129, %v4431
      %v4552 = vadd.f32 %v4130, %v4434
      %v4553 = vadd.f32 %v4131, %v4439
      %v4554 = vadd.f32 %v4132, %v4442
      %v4555 = vadd.f32 %v4133, %v4447
      %v4556 = vadd.f32 %v4134, %v4450
      %v4557 = vadd.f32 %v4135, %v4455
      %v4558 = vadd.f32 %v4136, %v4458
      %v4559 = vadd.f32 %v4137, %v4463
      %v4560 = vadd.f32 %v4138, %v4466
      %v4561 = vadd.f32 %v4139, %v4471
      %v4562 = vadd.f32 %v4140, %v4474
      %v4563 = vadd.f32 %v4141, %v4479
      %v4564 = vadd.f32 %v4142, %v4482
      %v4565 = vadd.f32 %v4143, %v4487
      %v4566 = vadd.f32 %v4144, %v4490
      %v4567 = vadd.f32 %v4145, %v4495
      %v4568 = vadd.f32 %v4146, %v4498
      %v4569 = vadd.f32 %v4147, %v4503
      %v4570 = vadd.f32 %v4148, %v4506
      %v4571 = vadd.f32 %v4149, %v4511
      %v4572 = vadd.f32 %v4150, %v4514
      %v4573 = vadd.f32 %v4151, %v4519
      %v4574 = vadd.f32 %v4152, %v4522
      %v4575 = vadd.f32 %v4153, %v4527
      %v4576 = vadd.f32 %v4154, %v4530
      %v4577 = vadd.f32 %v4155, %v4535
      %v4578 = vadd.f32 %v4156, %v4538
      %v4579 = vadd.f32 %v4157, %v4543
      %v4580 = vadd.f32 %v4158, %v4546
      %vm4581 = vmand %vm3698, %vm1641
      %vm4582 = vmand %vm3699, %vm1642
      %vm4583 = vmand %vm3700, %vm1643
      %vm4584 = vmand %vm3701, %vm1644
      %vm4585 = vmand %vm3702, %vm1645
      %vm4586 = vmand %vm3703, %vm1646
      %vm4587 = vmand %vm3704, %vm1647
      %vm4588 = vmand %vm3705, %vm1648
      %vm4589 = vmand %vm3706, %vm1649
      %vm4590 = vmand %vm3707, %vm1650
      %vm4591 = vmand %vm3708, %vm1651
      %vm4592 = vmand %vm3709, %vm1652
      %vm4593 = vmand %vm3710, %vm1653
      %vm4594 = vmand %vm3711, %vm1654
      %vm4595 = vmand %vm3712, %vm1655
      %vm4596 = vmand %vm3713, %vm1656
      %vm4597 = vmand %vm3714, %vm1657
      %vm4598 = vmand %vm3715, %vm1658
      %vm4599 = vmand %vm3716, %vm1659
      %vm4600 = vmand %vm3717, %vm1660
      %vm4601 = vmand %vm3718, %vm1661
      %vm4602 = vmand %vm3719, %vm1662
      %vm4603 = vmand %vm3720, %vm1663
      %vm4604 = vmand %vm3721, %vm1664
      %vm4605 = vmand %vm3722, %vm1665
      %vm4606 = vmand %vm3723, %vm1666
      %vm4607 = vmand %vm3724, %vm1667
      %vm4608 = vmand %vm3725, %vm1668
      %vm4609 = vmand %vm3726, %vm1669
      %vm4610 = vmand %vm3727, %vm1670
      %vm4611 = vmand %vm3728, %vm1671
      %vm4612 = vmand %vm3729, %vm1672
      %vm4613 = vmand %vm4581, %vm1705
      %vm4614 = vmand %vm4582, %vm1706
      %vm4615 = vmand %vm4583, %vm1707
      %vm4616 = vmand %vm4584, %vm1708
      %vm4617 = vmand %vm4585, %vm1709
      %vm4618 = vmand %vm4586, %vm1710
      %vm4619 = vmand %vm4587, %vm1711
      %vm4620 = vmand %vm4588, %vm1712
      %vm4621 = vmand %vm4589, %vm1713
      %vm4622 = vmand %vm4590, %vm1714
      %vm4623 = vmand %vm4591, %vm1715
      %vm4624 = vmand %vm4592, %vm1716
      %vm4625 = vmand %vm4593, %vm1717
      %vm4626 = vmand %vm4594, %vm1718
      %vm4627 = vmand %vm4595, %vm1719
      %vm4628 = vmand %vm4596, %vm1720
      %vm4629 = vmand %vm4597, %vm1721
      %vm4630 = vmand %vm4598, %vm1722
      %vm4631 = vmand %vm4599, %vm1723
      %vm4632 = vmand %vm4600, %vm1724
      %vm4633 = vmand %vm4601, %vm1725
      %vm4634 = vmand %vm4602, %vm1726
      %vm4635 = vmand %vm4603, %vm1727
      %vm4636 = vmand %vm4604, %vm1728
      %vm4637 = vmand %vm4605, %vm1729
      %vm4638 = vmand %vm4606, %vm1730
      %vm4639 = vmand %vm4607, %vm1731
      %vm4640 = vmand %vm4608, %vm1732
      %vm4641 = vmand %vm4609, %vm1733
      %vm4642 = vmand %vm4610, %vm1734
      %vm4643 = vmand %vm4611, %vm1735
      %vm4644 = vmand %vm4612, %vm1736
      %v4645 = vsel %vm4613, 1, 0
      %v4646 = vsel %vm4614, 1, 0
      %v4647 = vsel %vm4615, 1, 0
      %v4648 = vsel %vm4616, 1, 0
      %v4649 = vsel %vm4617, 1, 0
      %v4650 = vsel %vm4618, 1, 0
      %v4651 = vsel %vm4619, 1, 0
      %v4652 = vsel %vm4620, 1, 0
      %v4653 = vsel %vm4621, 1, 0
      %v4654 = vsel %vm4622, 1, 0
      %v4655 = vsel %vm4623, 1, 0
      %v4656 = vsel %vm4624, 1, 0
      %v4657 = vsel %vm4625, 1, 0
      %v4658 = vsel %vm4626, 1, 0
      %v4659 = vsel %vm4627, 1, 0
      %v4660 = vsel %vm4628, 1, 0
      %v4661 = vsel %vm4629, 1, 0
      %v4662 = vsel %vm4630, 1, 0
      %v4663 = vsel %vm4631, 1, 0
      %v4664 = vsel %vm4632, 1, 0
      %v4665 = vsel %vm4633, 1, 0
      %v4666 = vsel %vm4634, 1, 0
      %v4667 = vsel %vm4635, 1, 0
      %v4668 = vsel %vm4636, 1, 0
      %v4669 = vsel %vm4637, 1, 0
      %v4670 = vsel %vm4638, 1, 0
      %v4671 = vsel %vm4639, 1, 0
      %v4672 = vsel %vm4640, 1, 0
      %v4673 = vsel %vm4641, 1, 0
      %v4674 = vsel %vm4642, 1, 0
      %v4675 = vsel %vm4643, 1, 0
      %v4676 = vsel %vm4644, 1, 0
      %vm4677 = vcmp.eq.s32.totalorder %v4645, 1
      %vm4678 = vcmp.eq.s32.totalorder %v4646, 1
      %vm4679 = vcmp.eq.s32.totalorder %v4647, 1
      %vm4680 = vcmp.eq.s32.totalorder %v4648, 1
      %vm4681 = vcmp.eq.s32.totalorder %v4649, 1
      %vm4682 = vcmp.eq.s32.totalorder %v4650, 1
      %vm4683 = vcmp.eq.s32.totalorder %v4651, 1
      %vm4684 = vcmp.eq.s32.totalorder %v4652, 1
      %vm4685 = vcmp.eq.s32.totalorder %v4653, 1
      %vm4686 = vcmp.eq.s32.totalorder %v4654, 1
      %vm4687 = vcmp.eq.s32.totalorder %v4655, 1
      %vm4688 = vcmp.eq.s32.totalorder %v4656, 1
      %vm4689 = vcmp.eq.s32.totalorder %v4657, 1
      %vm4690 = vcmp.eq.s32.totalorder %v4658, 1
      %vm4691 = vcmp.eq.s32.totalorder %v4659, 1
      %vm4692 = vcmp.eq.s32.totalorder %v4660, 1
      %vm4693 = vcmp.eq.s32.totalorder %v4661, 1
      %vm4694 = vcmp.eq.s32.totalorder %v4662, 1
      %vm4695 = vcmp.eq.s32.totalorder %v4663, 1
      %vm4696 = vcmp.eq.s32.totalorder %v4664, 1
      %vm4697 = vcmp.eq.s32.totalorder %v4665, 1
      %vm4698 = vcmp.eq.s32.totalorder %v4666, 1
      %vm4699 = vcmp.eq.s32.totalorder %v4667, 1
      %vm4700 = vcmp.eq.s32.totalorder %v4668, 1
      %vm4701 = vcmp.eq.s32.totalorder %v4669, 1
      %vm4702 = vcmp.eq.s32.totalorder %v4670, 1
      %vm4703 = vcmp.eq.s32.totalorder %v4671, 1
      %vm4704 = vcmp.eq.s32.totalorder %v4672, 1
      %vm4705 = vcmp.eq.s32.totalorder %v4673, 1
      %vm4706 = vcmp.eq.s32.totalorder %v4674, 1
      %vm4707 = vcmp.eq.s32.totalorder %v4675, 1
      %vm4708 = vcmp.eq.s32.totalorder %v4676, 1
      %v4710 = vrot.slane %v245, 1
      %v4711 = vsel %vm1834, %v3304, %v4710
      %v4712 = vrot.slane %v246, 1
      %v4713 = vsel %vm1834, %v4710, %v4712
      %v4716 = vsel %vm4677, %v1845, 0.0
      %v4717 = vsel %vm4678, %v1847, 0.0
      %v4718 = vsel %vm4679, %v1849, 0.0
      %v4719 = vsel %vm4680, %v1851, 0.0
      %v4720 = vsel %vm4681, %v1853, 0.0
      %v4721 = vsel %vm4682, %v1855, 0.0
      %v4722 = vsel %vm4683, %v1857, 0.0
      %v4723 = vsel %vm4684, %v1859, 0.0
      %v4724 = vsel %vm4685, %v1861, 0.0
      %v4725 = vsel %vm4686, %v1863, 0.0
      %v4726 = vsel %vm4687, %v1865, 0.0
      %v4727 = vsel %vm4688, %v1867, 0.0
      %v4728 = vsel %vm4689, %v1869, 0.0
      %v4729 = vsel %vm4690, %v1871, 0.0
      %v4730 = vsel %vm4691, %v1873, 0.0
      %v4731 = vsel %vm4692, %v1875, 0.0
      %v4732 = vsel %vm4693, %v1877, 0.0
      %v4733 = vsel %vm4694, %v1879, 0.0
      %v4734 = vsel %vm4695, %v1881, 0.0
      %v4735 = vsel %vm4696, %v1883, 0.0
      %v4736 = vsel %vm4697, %v1885, 0.0
      %v4737 = vsel %vm4698, %v1887, 0.0
      %v4738 = vsel %vm4699, %v1889, 0.0
      %v4739 = vsel %vm4700, %v1891, 0.0
      %v4740 = vsel %vm4701, %v1893, 0.0
      %v4741 = vsel %vm4702, %v1895, 0.0
      %v4742 = vsel %vm4703, %v1897, 0.0
      %v4743 = vsel %vm4704, %v1899, 0.0
      %v4744 = vsel %vm4705, %v3303, 0.0
      %v4745 = vsel %vm4706, %v3305, 0.0
      %v4746 = vsel %vm4707, %v4711, 0.0
      %v4747 = vsel %vm4708, %v4713, 0.0
      %v4748 = vpack.c.bf16 %v4717, %v4716
      %v4749 = vpack.c.bf16 %v4719, %v4718
      %v4750 = vpack.c.bf16 %v4721, %v4720
      %v4751 = vpack.c.bf16 %v4723, %v4722
      %v4752 = vpack.c.bf16 %v4725, %v4724
      %v4753 = vpack.c.bf16 %v4727, %v4726
      %v4754 = vpack.c.bf16 %v4729, %v4728
      %v4755 = vpack.c.bf16 %v4731, %v4730
      %v4756 = vpack.c.bf16 %v4733, %v4732
      %v4757 = vpack.c.bf16 %v4735, %v4734
      %v4758 = vpack.c.bf16 %v4737, %v4736
      %v4759 = vpack.c.bf16 %v4739, %v4738
      %v4760 = vpack.c.bf16 %v4741, %v4740
      %v4761 = vpack.c.bf16 %v4743, %v4742
      %v4762 = vpack.c.bf16 %v4745, %v4744
      %v4763 = vpack.c.bf16 %v4747, %v4746
      %s4764 = scalar_lea.vmem %s1, 32
      %v4765 = vld [vmem:[%s4764] sm:$0xf]
      %v4767 = vsel %vm1183, %v4748, 0
      %v4770 = vsel %vm1183, %v4749, 0
      %v4773 = vsel %vm1183, %v4750, 0
      %v4776 = vsel %vm1183, %v4751, 0
      %v4779 = vsel %vm1183, %v4752, 0
      %v4782 = vsel %vm1183, %v4753, 0
      %v4785 = vsel %vm1183, %v4754, 0
      %v4788 = vsel %vm1183, %v4755, 0
      %v4791 = vsel %vm1183, %v4756, 0
      %v4794 = vsel %vm1183, %v4757, 0
      %v4797 = vsel %vm1183, %v4758, 0
      %v4800 = vsel %vm1183, %v4759, 0
      %v4803 = vsel %vm1183, %v4760, 0
      %v4806 = vsel %vm1183, %v4761, 0
      %v4809 = vsel %vm1183, %v4762, 0
      %v4812 = vsel %vm1183, %v4763, 0
      %v4815 = vsel %vm1232, %v4765, 0
      %4817 = vmatprep.subr.bf16.mxu0 0
      %4818 = vmatpush1.bf16.msra.mxu0 %v4815
      %4819 = vmatprep.subr.bf16.mxu0 0
      %4820 = vmatpush1.bf16.msra.mxu0 0
      %4821 = vmatprep.subr.bf16.mxu0 0
      %4822 = vmatpush1.bf16.msra.mxu0 0
      %4823 = vmatprep.subr.bf16.mxu0 0
      %4824 = vmatpush1.bf16.msra.mxu0 0
      %4825 = vmatprep.subr.bf16.mxu0 0
      %4826 = vmatpush1.bf16.msra.mxu0 0
      %4827 = vmatprep.subr.bf16.mxu0 0
      %4828 = vmatpush1.bf16.msra.mxu0 0
      %4829 = vmatprep.subr.bf16.mxu0 0
      %4830 = vmatpush1.bf16.msra.mxu0 0
      %4831 = vmatprep.subr.bf16.mxu0 0
      %4832 = vmatpush1.bf16.msra.mxu0 0
      %4833 = vmatprep.subr.bf16.mxu0 0
      %4834 = vmatpush1.bf16.msra.mxu0 0
      %4835 = vmatprep.subr.bf16.mxu0 0
      %4836 = vmatpush1.bf16.msra.mxu0 0
      %4837 = vmatprep.subr.bf16.mxu0 0
      %4838 = vmatpush1.bf16.msra.mxu0 0
      %4839 = vmatprep.subr.bf16.mxu0 0
      %4840 = vmatpush1.bf16.msra.mxu0 0
      %4841 = vmatprep.subr.bf16.mxu0 0
      %4842 = vmatpush1.bf16.msra.mxu0 0
      %4843 = vmatprep.subr.bf16.mxu0 0
      %4844 = vmatpush1.bf16.msra.mxu0 0
      %4845 = vmatprep.subr.bf16.mxu0 0
      %4846 = vmatpush1.bf16.msra.mxu0 0
      %4847 = vmatprep.subr.bf16.mxu0 0
      %4848 = vmatpush1.bf16.msra.mxu0 0
      %4849 = vmatprep.mubr.bf16.mxu0 0
      %4850 = vmatmul.mubr.bf16.gmra.mrb[0].mxu0 %v4767
      %v4851 = vpop.f32.mrb[0].mxu0
      %v4852 = vadd.f32 0.0, %v4851
      %v4853 = vpop.f32.mrb[0].mxu0
      %v4854 = vpop.f32.mrb[0].mxu0
      %v4855 = vadd.f32 0.0, %v4854
      %v4856 = vpop.f32.mrb[0].mxu0
      %4857 = vmatprep.mubr.bf16.mxu0 0
      %4858 = vmatmul.mubr.bf16.gmra.mrb[0].mxu0 %v4770
      %v4859 = vpop.f32.mrb[0].mxu0
      %v4860 = vadd.f32 0.0, %v4859
      %v4861 = vpop.f32.mrb[0].mxu0
      %v4862 = vpop.f32.mrb[0].mxu0
      %v4863 = vadd.f32 0.0, %v4862
      %v4864 = vpop.f32.mrb[0].mxu0
      %4865 = vmatprep.mubr.bf16.mxu0 0
      %4866 = vmatmul.mubr.bf16.gmra.mrb[0].mxu0 %v4773
      %v4867 = vpop.f32.mrb[0].mxu0
      %v4868 = vadd.f32 0.0, %v4867
      %v4869 = vpop.f32.mrb[0].mxu0
      %v4870 = vpop.f32.mrb[0].mxu0
      %v4871 = vadd.f32 0.0, %v4870
      %v4872 = vpop.f32.mrb[0].mxu0
      %4873 = vmatprep.mubr.bf16.mxu0 0
      %4874 = vmatmul.mubr.bf16.gmra.mrb[0].mxu0 %v4776
      %v4875 = vpop.f32.mrb[0].mxu0
      %v4876 = vadd.f32 0.0, %v4875
      %v4877 = vpop.f32.mrb[0].mxu0
      %v4878 = vpop.f32.mrb[0].mxu0
      %v4879 = vadd.f32 0.0, %v4878
      %v4880 = vpop.f32.mrb[0].mxu0
      %4881 = vmatprep.mubr.bf16.mxu0 0
      %4882 = vmatmul.mubr.bf16.gmra.mrb[0].mxu0 %v4779
      %v4883 = vpop.f32.mrb[0].mxu0
      %v4884 = vadd.f32 0.0, %v4883
      %v4885 = vpop.f32.mrb[0].mxu0
      %v4886 = vpop.f32.mrb[0].mxu0
      %v4887 = vadd.f32 0.0, %v4886
      %v4888 = vpop.f32.mrb[0].mxu0
      %4889 = vmatprep.mubr.bf16.mxu0 0
      %4890 = vmatmul.mubr.bf16.gmra.mrb[0].mxu0 %v4782
      %v4891 = vpop.f32.mrb[0].mxu0
      %v4892 = vadd.f32 0.0, %v4891
      %v4893 = vpop.f32.mrb[0].mxu0
      %v4894 = vpop.f32.mrb[0].mxu0
      %v4895 = vadd.f32 0.0, %v4894
      %v4896 = vpop.f32.mrb[0].mxu0
      %4897 = vmatprep.mubr.bf16.mxu0 0
      %4898 = vmatmul.mubr.bf16.gmra.mrb[0].mxu0 %v4785
      %v4899 = vpop.f32.mrb[0].mxu0
      %v4900 = vadd.f32 0.0, %v4899
      %v4901 = vpop.f32.mrb[0].mxu0
      %v4902 = vpop.f32.mrb[0].mxu0
      %v4903 = vadd.f32 0.0, %v4902
      %v4904 = vpop.f32.mrb[0].mxu0
      %4905 = vmatprep.mubr.bf16.mxu0 0
      %4906 = vmatmul.mubr.bf16.gmra.mrb[0].mxu0 %v4788
      %v4907 = vpop.f32.mrb[0].mxu0
      %v4908 = vadd.f32 0.0, %v4907
      %v4909 = vpop.f32.mrb[0].mxu0
      %v4910 = vpop.f32.mrb[0].mxu0
      %v4911 = vadd.f32 0.0, %v4910
      %v4912 = vpop.f32.mrb[0].mxu0
      %4913 = vmatprep.mubr.bf16.mxu0 0
      %4914 = vmatmul.mubr.bf16.gmra.mrb[0].mxu0 %v4791
      %v4915 = vpop.f32.mrb[0].mxu0
      %v4916 = vadd.f32 0.0, %v4915
      %v4917 = vpop.f32.mrb[0].mxu0
      %v4918 = vpop.f32.mrb[0].mxu0
      %v4919 = vadd.f32 0.0, %v4918
      %v4920 = vpop.f32.mrb[0].mxu0
      %4921 = vmatprep.mubr.bf16.mxu0 0
      %4922 = vmatmul.mubr.bf16.gmra.mrb[0].mxu0 %v4794
      %v4923 = vpop.f32.mrb[0].mxu0
      %v4924 = vadd.f32 0.0, %v4923
      %v4925 = vpop.f32.mrb[0].mxu0
      %v4926 = vpop.f32.mrb[0].mxu0
      %v4927 = vadd.f32 0.0, %v4926
      %v4928 = vpop.f32.mrb[0].mxu0
      %4929 = vmatprep.mubr.bf16.mxu0 0
      %4930 = vmatmul.mubr.bf16.gmra.mrb[0].mxu0 %v4797
      %v4931 = vpop.f32.mrb[0].mxu0
      %v4932 = vadd.f32 0.0, %v4931
      %v4933 = vpop.f32.mrb[0].mxu0
      %v4934 = vpop.f32.mrb[0].mxu0
      %v4935 = vadd.f32 0.0, %v4934
      %v4936 = vpop.f32.mrb[0].mxu0
      %4937 = vmatprep.mubr.bf16.mxu0 0
      %4938 = vmatmul.mubr.bf16.gmra.mrb[0].mxu0 %v4800
      %v4939 = vpop.f32.mrb[0].mxu0
      %v4940 = vadd.f32 0.0, %v4939
      %v4941 = vpop.f32.mrb[0].mxu0
      %v4942 = vpop.f32.mrb[0].mxu0
      %v4943 = vadd.f32 0.0, %v4942
      %v4944 = vpop.f32.mrb[0].mxu0
      %4945 = vmatprep.mubr.bf16.mxu0 0
      %4946 = vmatmul.mubr.bf16.gmra.mrb[0].mxu0 %v4803
      %v4947 = vpop.f32.mrb[0].mxu0
      %v4948 = vadd.f32 0.0, %v4947
      %v4949 = vpop.f32.mrb[0].mxu0
      %v4950 = vpop.f32.mrb[0].mxu0
      %v4951 = vadd.f32 0.0, %v4950
      %v4952 = vpop.f32.mrb[0].mxu0
      %4953 = vmatprep.mubr.bf16.mxu0 0
      %4954 = vmatmul.mubr.bf16.gmra.mrb[0].mxu0 %v4806
      %v4955 = vpop.f32.mrb[0].mxu0
      %v4956 = vadd.f32 0.0, %v4955
      %v4957 = vpop.f32.mrb[0].mxu0
      %v4958 = vpop.f32.mrb[0].mxu0
      %v4959 = vadd.f32 0.0, %v4958
      %v4960 = vpop.f32.mrb[0].mxu0
      %4961 = vmatprep.mubr.bf16.mxu0 0
      %4962 = vmatmul.mubr.bf16.gmra.mrb[0].mxu0 %v4809
      %v4963 = vpop.f32.mrb[0].mxu0
      %v4964 = vadd.f32 0.0, %v4963
      %v4965 = vpop.f32.mrb[0].mxu0
      %v4966 = vpop.f32.mrb[0].mxu0
      %v4967 = vadd.f32 0.0, %v4966
      %v4968 = vpop.f32.mrb[0].mxu0
      %4969 = vmatprep.mubr.bf16.mxu0 0
      %4970 = vmatmul.mubr.bf16.gmra.mrb[0].mxu0 %v4812
      %v4971 = vpop.f32.mrb[0].mxu0
      %v4972 = vadd.f32 0.0, %v4971
      %v4973 = vpop.f32.mrb[0].mxu0
      %v4974 = vpop.f32.mrb[0].mxu0
      %v4975 = vadd.f32 0.0, %v4974
      %v4976 = vpop.f32.mrb[0].mxu0
      %4977 = vdwg.mxu0
      %v4978 = vadd.f32 %v4549, %v4852
      %v4979 = vadd.f32 %v4550, %v4855
      %v4980 = vadd.f32 %v4551, %v4860
      %v4981 = vadd.f32 %v4552, %v4863
      %v4982 = vadd.f32 %v4553, %v4868
      %v4983 = vadd.f32 %v4554, %v4871
      %v4984 = vadd.f32 %v4555, %v4876
      %v4985 = vadd.f32 %v4556, %v4879
      %v4986 = vadd.f32 %v4557, %v4884
      %v4987 = vadd.f32 %v4558, %v4887
      %v4988 = vadd.f32 %v4559, %v4892
      %v4989 = vadd.f32 %v4560, %v4895
      %v4990 = vadd.f32 %v4561, %v4900
      %v4991 = vadd.f32 %v4562, %v4903
      %v4992 = vadd.f32 %v4563, %v4908
      %v4993 = vadd.f32 %v4564, %v4911
      %v4994 = vadd.f32 %v4565, %v4916
      %v4995 = vadd.f32 %v4566, %v4919
      %v4996 = vadd.f32 %v4567, %v4924
      %v4997 = vadd.f32 %v4568, %v4927
      %v4998 = vadd.f32 %v4569, %v4932
      %v4999 = vadd.f32 %v4570, %v4935
      %v5000 = vadd.f32 %v4571, %v4940
      %v5001 = vadd.f32 %v4572, %v4943
      %v5002 = vadd.f32 %v4573, %v4948
      %v5003 = vadd.f32 %v4574, %v4951
      %v5004 = vadd.f32 %v4575, %v4956
      %v5005 = vadd.f32 %v4576, %v4959
      %v5006 = vadd.f32 %v4577, %v4964
      %v5007 = vadd.f32 %v4578, %v4967
      %v5008 = vadd.f32 %v4579, %v4972
      %v5009 = vadd.f32 %v4580, %v4975
      %v5010 = vld [vmem:[%s2] sm:$0x1]
      %v5012 = vlaneseq
      %v5013 = vshrl.u32 %v5012, 7
      %v5014 = vsub.s32 0, %v5013
      %v5015 = vrot.slane %v5010, %v5014
      %v5017 = vadd.f32 %v4978, %v5015
      %v5018 = vadd.f32 %v4979, %v5015
      %v5019 = vadd.f32 %v4980, %v5015
      %v5020 = vadd.f32 %v4981, %v5015
      %v5021 = vadd.f32 %v4982, %v5015
      %v5022 = vadd.f32 %v4983, %v5015
      %v5023 = vadd.f32 %v4984, %v5015
      %v5024 = vadd.f32 %v4985, %v5015
      %v5025 = vadd.f32 %v4986, %v5015
      %v5026 = vadd.f32 %v4987, %v5015
      %v5027 = vadd.f32 %v4988, %v5015
      %v5028 = vadd.f32 %v4989, %v5015
      %v5029 = vadd.f32 %v4990, %v5015
      %v5030 = vadd.f32 %v4991, %v5015
      %v5031 = vadd.f32 %v4992, %v5015
      %v5032 = vadd.f32 %v4993, %v5015
      %v5033 = vadd.f32 %v4994, %v5015
      %v5034 = vadd.f32 %v4995, %v5015
      %v5035 = vadd.f32 %v4996, %v5015
      %v5036 = vadd.f32 %v4997, %v5015
      %v5037 = vadd.f32 %v4998, %v5015
      %v5038 = vadd.f32 %v4999, %v5015
      %v5039 = vadd.f32 %v5000, %v5015
      %v5040 = vadd.f32 %v5001, %v5015
      %v5041 = vadd.f32 %v5002, %v5015
      %v5042 = vadd.f32 %v5003, %v5015
      %v5043 = vadd.f32 %v5004, %v5015
      %v5044 = vadd.f32 %v5005, %v5015
      %v5045 = vadd.f32 %v5006, %v5015
      %v5046 = vadd.f32 %v5007, %v5015
      %v5047 = vadd.f32 %v5008, %v5015
      %v5048 = vadd.f32 %v5009, %v5015
      %v5049 = vmax.f32 %v5017, 0.0
      %v5050 = vmax.f32 %v5018, 0.0
      %v5051 = vmax.f32 %v5019, 0.0
      %v5052 = vmax.f32 %v5020, 0.0
      %v5053 = vmax.f32 %v5021, 0.0
      %v5054 = vmax.f32 %v5022, 0.0
      %v5055 = vmax.f32 %v5023, 0.0
      %v5056 = vmax.f32 %v5024, 0.0
      %v5057 = vmax.f32 %v5025, 0.0
      %v5058 = vmax.f32 %v5026, 0.0
      %v5059 = vmax.f32 %v5027, 0.0
      %v5060 = vmax.f32 %v5028, 0.0
      %v5061 = vmax.f32 %v5029, 0.0
      %v5062 = vmax.f32 %v5030, 0.0
      %v5063 = vmax.f32 %v5031, 0.0
      %v5064 = vmax.f32 %v5032, 0.0
      %v5065 = vmax.f32 %v5033, 0.0
      %v5066 = vmax.f32 %v5034, 0.0
      %v5067 = vmax.f32 %v5035, 0.0
      %v5068 = vmax.f32 %v5036, 0.0
      %v5069 = vmax.f32 %v5037, 0.0
      %v5070 = vmax.f32 %v5038, 0.0
      %v5071 = vmax.f32 %v5039, 0.0
      %v5072 = vmax.f32 %v5040, 0.0
      %v5073 = vmax.f32 %v5041, 0.0
      %v5074 = vmax.f32 %v5042, 0.0
      %v5075 = vmax.f32 %v5043, 0.0
      %v5076 = vmax.f32 %v5044, 0.0
      %v5077 = vmax.f32 %v5045, 0.0
      %v5078 = vmax.f32 %v5046, 0.0
      %v5079 = vmax.f32 %v5047, 0.0
      %v5080 = vmax.f32 %v5048, 0.0
      %v5081 = vpack.c.bf16 %v5050, %v5049
      %v5082 = vpack.c.bf16 %v5052, %v5051
      %v5083 = vpack.c.bf16 %v5054, %v5053
      %v5084 = vpack.c.bf16 %v5056, %v5055
      %v5085 = vpack.c.bf16 %v5058, %v5057
      %v5086 = vpack.c.bf16 %v5060, %v5059
      %v5087 = vpack.c.bf16 %v5062, %v5061
      %v5088 = vpack.c.bf16 %v5064, %v5063
      %v5089 = vpack.c.bf16 %v5066, %v5065
      %v5090 = vpack.c.bf16 %v5068, %v5067
      %v5091 = vpack.c.bf16 %v5070, %v5069
      %v5092 = vpack.c.bf16 %v5072, %v5071
      %v5093 = vpack.c.bf16 %v5074, %v5073
      %v5094 = vpack.c.bf16 %v5076, %v5075
      %v5095 = vpack.c.bf16 %v5078, %v5077
      %v5096 = vpack.c.bf16 %v5080, %v5079
      %v5097 = vld [vmem:[%s3] sm:$0xf]
      %v5098 = vld [vmem:[%s3 + $0x4] sm:$0xf]
      %v5099 = vld [vmem:[%s3 + $0x8] sm:$0xf]
      %v5100 = vld [vmem:[%s3 + $0xc] sm:$0xf]
      %v5101 = vld [vmem:[%s4] sm:$0x1]
      %v5103 = vlaneseq
      %v5104 = vshrl.u32 %v5103, 7
      %v5105 = vsub.s32 0, %v5104
      %v5106 = vrot.slane %v5101, %v5105
      %v5112 = vunpack.c.l.b16 %v5097
      %v5113 = vunpack.c.l.b16 %v5098
      %v5114 = vunpack.c.l.b16 %v5099
      %v5115 = vunpack.c.l.b16 %v5100
      %v5116 = vpack.c.b16 %v5113, %v5112
      %v5117 = vpack.c.b16 %v5115, %v5114
      %vm5120 = vcmask 261120
      %v5122 = vsel %vm5120, %v5081, 0
      %v5125 = vsel %vm5120, %v5082, 0
      %v5128 = vsel %vm5120, %v5083, 0
      %v5131 = vsel %vm5120, %v5084, 0
      %v5134 = vsel %vm5120, %v5085, 0
      %v5137 = vsel %vm5120, %v5086, 0
      %v5140 = vsel %vm5120, %v5087, 0
      %v5143 = vsel %vm5120, %v5088, 0
      %v5146 = vsel %vm5120, %v5089, 0
      %v5149 = vsel %vm5120, %v5090, 0
      %v5152 = vsel %vm5120, %v5091, 0
      %v5155 = vsel %vm5120, %v5092, 0
      %v5158 = vsel %vm5120, %v5093, 0
      %v5161 = vsel %vm5120, %v5094, 0
      %v5164 = vsel %vm5120, %v5095, 0
      %v5167 = vsel %vm5120, %v5096, 0
      %5169 = vmatprep.subr.bf16.mxu0 0
      %5170 = vmatpush1.bf16.msra.mxu0 %v5116
      %5171 = vmatprep.subr.bf16.mxu0 0
      %5172 = vmatpush1.bf16.msra.mxu0 %v5117
      %5173 = vmatprep.subr.bf16.mxu0 0
      %5174 = vmatpush1.bf16.msra.mxu0 0
      %5175 = vmatprep.subr.bf16.mxu0 0
      %5176 = vmatpush1.bf16.msra.mxu0 0
      %5177 = vmatprep.subr.bf16.mxu0 0
      %5178 = vmatpush1.bf16.msra.mxu0 0
      %5179 = vmatprep.subr.bf16.mxu0 0
      %5180 = vmatpush1.bf16.msra.mxu0 0
      %5181 = vmatprep.subr.bf16.mxu0 0
      %5182 = vmatpush1.bf16.msra.mxu0 0
      %5183 = vmatprep.subr.bf16.mxu0 0
      %5184 = vmatpush1.bf16.msra.mxu0 0
      %5185 = vmatprep.subr.bf16.mxu0 0
      %5186 = vmatpush1.bf16.msra.mxu0 0
      %5187 = vmatprep.subr.bf16.mxu0 0
      %5188 = vmatpush1.bf16.msra.mxu0 0
      %5189 = vmatprep.subr.bf16.mxu0 0
      %5190 = vmatpush1.bf16.msra.mxu0 0
      %5191 = vmatprep.subr.bf16.mxu0 0
      %5192 = vmatpush1.bf16.msra.mxu0 0
      %5193 = vmatprep.subr.bf16.mxu0 0
      %5194 = vmatpush1.bf16.msra.mxu0 0
      %5195 = vmatprep.subr.bf16.mxu0 0
      %5196 = vmatpush1.bf16.msra.mxu0 0
      %5197 = vmatprep.subr.bf16.mxu0 0
      %5198 = vmatpush1.bf16.msra.mxu0 0
      %5199 = vmatprep.subr.bf16.mxu0 0
      %5200 = vmatpush1.bf16.msra.mxu0 0
      %5201 = vmatprep.mubr.bf16.mxu0 0
      %5202 = vmatmul.mubr.bf16.gmra.mrb[0].mxu0 %v5122
      %v5203 = vpop.f32.mrb[0].mxu0
      %v5204 = vadd.f32 %v5106, %v5203
      %v5205 = vpop.f32.mrb[0].mxu0
      %v5206 = vpop.f32.mrb[0].mxu0
      %v5207 = vadd.f32 %v5106, %v5206
      %v5208 = vpop.f32.mrb[0].mxu0
      %5209 = vmatprep.mubr.bf16.mxu0 0
      %5210 = vmatmul.mubr.bf16.gmra.mrb[0].mxu0 %v5125
      %v5211 = vpop.f32.mrb[0].mxu0
      %v5212 = vadd.f32 %v5106, %v5211
      %v5213 = vpop.f32.mrb[0].mxu0
      %v5214 = vpop.f32.mrb[0].mxu0
      %v5215 = vadd.f32 %v5106, %v5214
      %v5216 = vpop.f32.mrb[0].mxu0
      %5217 = vmatprep.mubr.bf16.mxu0 0
      %5218 = vmatmul.mubr.bf16.gmra.mrb[0].mxu0 %v5128
      %v5219 = vpop.f32.mrb[0].mxu0
      %v5220 = vadd.f32 %v5106, %v5219
      %v5221 = vpop.f32.mrb[0].mxu0
      %v5222 = vpop.f32.mrb[0].mxu0
      %v5223 = vadd.f32 %v5106, %v5222
      %v5224 = vpop.f32.mrb[0].mxu0
      %5225 = vmatprep.mubr.bf16.mxu0 0
      %5226 = vmatmul.mubr.bf16.gmra.mrb[0].mxu0 %v5131
      %v5227 = vpop.f32.mrb[0].mxu0
      %v5228 = vadd.f32 %v5106, %v5227
      %v5229 = vpop.f32.mrb[0].mxu0
      %v5230 = vpop.f32.mrb[0].mxu0
      %v5231 = vadd.f32 %v5106, %v5230
      %v5232 = vpop.f32.mrb[0].mxu0
      %5233 = vmatprep.mubr.bf16.mxu0 0
      %5234 = vmatmul.mubr.bf16.gmra.mrb[0].mxu0 %v5134
      %v5235 = vpop.f32.mrb[0].mxu0
      %v5236 = vadd.f32 %v5106, %v5235
      %v5237 = vpop.f32.mrb[0].mxu0
      %v5238 = vpop.f32.mrb[0].mxu0
      %v5239 = vadd.f32 %v5106, %v5238
      %v5240 = vpop.f32.mrb[0].mxu0
      %5241 = vmatprep.mubr.bf16.mxu0 0
      %5242 = vmatmul.mubr.bf16.gmra.mrb[0].mxu0 %v5137
      %v5243 = vpop.f32.mrb[0].mxu0
      %v5244 = vadd.f32 %v5106, %v5243
      %v5245 = vpop.f32.mrb[0].mxu0
      %v5246 = vpop.f32.mrb[0].mxu0
      %v5247 = vadd.f32 %v5106, %v5246
      %v5248 = vpop.f32.mrb[0].mxu0
      %5249 = vmatprep.mubr.bf16.mxu0 0
      %5250 = vmatmul.mubr.bf16.gmra.mrb[0].mxu0 %v5140
      %v5251 = vpop.f32.mrb[0].mxu0
      %v5252 = vadd.f32 %v5106, %v5251
      %v5253 = vpop.f32.mrb[0].mxu0
      %v5254 = vpop.f32.mrb[0].mxu0
      %v5255 = vadd.f32 %v5106, %v5254
      %v5256 = vpop.f32.mrb[0].mxu0
      %5257 = vmatprep.mubr.bf16.mxu0 0
      %5258 = vmatmul.mubr.bf16.gmra.mrb[0].mxu0 %v5143
      %v5259 = vpop.f32.mrb[0].mxu0
      %v5260 = vadd.f32 %v5106, %v5259
      %v5261 = vpop.f32.mrb[0].mxu0
      %v5262 = vpop.f32.mrb[0].mxu0
      %v5263 = vadd.f32 %v5106, %v5262
      %v5264 = vpop.f32.mrb[0].mxu0
      %5265 = vmatprep.mubr.bf16.mxu0 0
      %5266 = vmatmul.mubr.bf16.gmra.mrb[0].mxu0 %v5146
      %v5267 = vpop.f32.mrb[0].mxu0
      %v5268 = vadd.f32 %v5106, %v5267
      %v5269 = vpop.f32.mrb[0].mxu0
      %v5270 = vpop.f32.mrb[0].mxu0
      %v5271 = vadd.f32 %v5106, %v5270
      %v5272 = vpop.f32.mrb[0].mxu0
      %5273 = vmatprep.mubr.bf16.mxu0 0
      %5274 = vmatmul.mubr.bf16.gmra.mrb[0].mxu0 %v5149
      %v5275 = vpop.f32.mrb[0].mxu0
      %v5276 = vadd.f32 %v5106, %v5275
      %v5277 = vpop.f32.mrb[0].mxu0
      %v5278 = vpop.f32.mrb[0].mxu0
      %v5279 = vadd.f32 %v5106, %v5278
      %v5280 = vpop.f32.mrb[0].mxu0
      %5281 = vmatprep.mubr.bf16.mxu0 0
      %5282 = vmatmul.mubr.bf16.gmra.mrb[0].mxu0 %v5152
      %v5283 = vpop.f32.mrb[0].mxu0
      %v5284 = vadd.f32 %v5106, %v5283
      %v5285 = vpop.f32.mrb[0].mxu0
      %v5286 = vpop.f32.mrb[0].mxu0
      %v5287 = vadd.f32 %v5106, %v5286
      %v5288 = vpop.f32.mrb[0].mxu0
      %5289 = vmatprep.mubr.bf16.mxu0 0
      %5290 = vmatmul.mubr.bf16.gmra.mrb[0].mxu0 %v5155
      %v5291 = vpop.f32.mrb[0].mxu0
      %v5292 = vadd.f32 %v5106, %v5291
      %v5293 = vpop.f32.mrb[0].mxu0
      %v5294 = vpop.f32.mrb[0].mxu0
      %v5295 = vadd.f32 %v5106, %v5294
      %v5296 = vpop.f32.mrb[0].mxu0
      %5297 = vmatprep.mubr.bf16.mxu0 0
      %5298 = vmatmul.mubr.bf16.gmra.mrb[0].mxu0 %v5158
      %v5299 = vpop.f32.mrb[0].mxu0
      %v5300 = vadd.f32 %v5106, %v5299
      %v5301 = vpop.f32.mrb[0].mxu0
      %v5302 = vpop.f32.mrb[0].mxu0
      %v5303 = vadd.f32 %v5106, %v5302
      %v5304 = vpop.f32.mrb[0].mxu0
      %5305 = vmatprep.mubr.bf16.mxu0 0
      %5306 = vmatmul.mubr.bf16.gmra.mrb[0].mxu0 %v5161
      %v5307 = vpop.f32.mrb[0].mxu0
      %v5308 = vadd.f32 %v5106, %v5307
      %v5309 = vpop.f32.mrb[0].mxu0
      %v5310 = vpop.f32.mrb[0].mxu0
      %v5311 = vadd.f32 %v5106, %v5310
      %v5312 = vpop.f32.mrb[0].mxu0
      %5313 = vmatprep.mubr.bf16.mxu0 0
      %5314 = vmatmul.mubr.bf16.gmra.mrb[0].mxu0 %v5164
      %v5315 = vpop.f32.mrb[0].mxu0
      %v5316 = vadd.f32 %v5106, %v5315
      %v5317 = vpop.f32.mrb[0].mxu0
      %v5318 = vpop.f32.mrb[0].mxu0
      %v5319 = vadd.f32 %v5106, %v5318
      %v5320 = vpop.f32.mrb[0].mxu0
      %5321 = vmatprep.mubr.bf16.mxu0 0
      %5322 = vmatmul.mubr.bf16.gmra.mrb[0].mxu0 %v5167
      %v5323 = vpop.f32.mrb[0].mxu0
      %v5324 = vadd.f32 %v5106, %v5323
      %v5325 = vpop.f32.mrb[0].mxu0
      %v5326 = vpop.f32.mrb[0].mxu0
      %v5327 = vadd.f32 %v5106, %v5326
      %v5328 = vpop.f32.mrb[0].mxu0
      %5329 = vdwg.mxu0
      %5330 = vst [vmem:[%s204] sm:$0xff] %v5204
      %5331 = vst [vmem:[%s204 + $0x8] sm:$0xff] %v5207
      %5332 = vst [vmem:[%s204 + $0x10] sm:$0xff] %v5212
      %5333 = vst [vmem:[%s204 + $0x18] sm:$0xff] %v5215
      %5334 = vst [vmem:[%s204 + $0x20] sm:$0xff] %v5220
      %5335 = vst [vmem:[%s204 + $0x28] sm:$0xff] %v5223
      %5336 = vst [vmem:[%s204 + $0x30] sm:$0xff] %v5228
      %5337 = vst [vmem:[%s204 + $0x38] sm:$0xff] %v5231
      %5338 = vst [vmem:[%s204 + $0x40] sm:$0xff] %v5236
      %5339 = vst [vmem:[%s204 + $0x48] sm:$0xff] %v5239
      %5340 = vst [vmem:[%s204 + $0x50] sm:$0xff] %v5244
      %5341 = vst [vmem:[%s204 + $0x58] sm:$0xff] %v5247
      %5342 = vst [vmem:[%s204 + $0x60] sm:$0xff] %v5252
      %5343 = vst [vmem:[%s204 + $0x68] sm:$0xff] %v5255
      %5344 = vst [vmem:[%s204 + $0x70] sm:$0xff] %v5260
      %5345 = vst [vmem:[%s204 + $0x78] sm:$0xff] %v5263
      %5346 = vst [vmem:[%s204 + $0x80] sm:$0xff] %v5268
      %5347 = vst [vmem:[%s204 + $0x88] sm:$0xff] %v5271
      %5348 = vst [vmem:[%s204 + $0x90] sm:$0xff] %v5276
      %5349 = vst [vmem:[%s204 + $0x98] sm:$0xff] %v5279
      %5350 = vst [vmem:[%s204 + $0xa0] sm:$0xff] %v5284
      %5351 = vst [vmem:[%s204 + $0xa8] sm:$0xff] %v5287
      %5352 = vst [vmem:[%s204 + $0xb0] sm:$0xff] %v5292
      %5353 = vst [vmem:[%s204 + $0xb8] sm:$0xff] %v5295
      %5354 = vst [vmem:[%s204 + $0xc0] sm:$0xff] %v5300
      %5355 = vst [vmem:[%s204 + $0xc8] sm:$0xff] %v5303
      %5356 = vst [vmem:[%s204 + $0xd0] sm:$0xff] %v5308
      %5357 = vst [vmem:[%s204 + $0xd8] sm:$0xff] %v5311
      %5358 = vst [vmem:[%s204 + $0xe0] sm:$0xff] %v5316
      %5359 = vst [vmem:[%s204 + $0xe8] sm:$0xff] %v5319
      %5360 = vst [vmem:[%s204 + $0xf0] sm:$0xff] %v5324
      %5361 = vst [vmem:[%s204 + $0xf8] sm:$0xff] %v5327
      %s5362 = smul.u32 32, %s16
      %p5363 = scmp.lt.s32.totalorder %s5362, 63
      %s5364 = scalar_select %p5363, %s5362, 63
      %s5365 = smul.addr %s5364, 8
      %s5366 = scalar_lea.vmem %s5, %s5365
      // Predicated region
      $region41: #{a_call__.1} parent=39 // pred_check
        %p5367 = pneg %p139
      $region42: #{a_call__.1} parent=39 // pred_check_branch
        %5369 = sbr.rel (%p5367) target = $region44
      $region43: #{a_call__.1} parent=39 // pred_region
        %s5370 = smul.u32 32, %s16
      $region44: #{a_call__.1} parent=39 // pred_fallthru
        _
    $region40: #{a_call__.1} parent=5 // pred_fallthru
      _
    %p5371 = scmp.le.s32.totalorder 2, %s11
    // Predicated region
    $region45: #{a_call__.1} parent=5 // pred_check
      %p5372 = pneg %p5371
    $region46: #{a_call__.1} parent=5 // pred_check_branch
      %5374 = sbr.rel (%p5372) target = $region48
    $region47: #{a_call__.1} parent=5 // pred_region
      %s5375 = ssub.s32 %s11, 2
      // Predicated region
      $region49: #{a_call__.1} parent=47 // pred_check
        %p5376 = pneg %p145
      $region50: #{a_call__.1} parent=47 // pred_check_branch
        %5378 = sbr.rel (%p5376) target = $region52
      $region51: #{a_call__.1} parent=47 // pred_region
        %s5379 = smul.u32 32, %s17
        %p5380 = scmp.lt.s32.totalorder %s5379, 63
        %s5381 = scalar_select %p5380, %s5379, 63
        %s5382 = smul.addr %s5381, 8
        %s5383 = scalar_lea.vmem %s5, %s5382
      $region52: #{a_call__.1} parent=47 // pred_fallthru
        _
    $region48: #{a_call__.1} parent=5 // pred_fallthru
      _
  $region6: #{a_call__.1} parent=0 // loop_footer
    %s15 = sadd.s32 1, %s11
  $region7: #{a_call__.1} parent=0 // loop_footer_branch
    %10 = sbr.rel target = $region3
  $region8: #{a_call__.1} parent=0 // loop_exit
    _

</llo_original>
